<compile_context>
chip_gen: v5e
topology: v5e:2x2
jax: 0.10.0
libtpu: 0.0.40
codegen_flags: <defaults>
</compile_context>

<pallas_src>
import jax
import jax.numpy as jnp
from jax import lax
from jax.experimental import pallas as pl
from jax.experimental.pallas import tpu as pltpu

# ConvTranspose2d(32, 16, kernel_size=3, stride=2, padding=(1, 0), dilation=(2, 1))
CI, CO, K = 32, 16, 3
SH, SW = 2, 2          # stride
PH, PW = 1, 0          # padding
DH, DW = 2, 1          # dilation


def _out_size(n, s, p, d, k):
    return (n - 1) * s - 2 * p + d * (k - 1) + 1


def _make_kernel(WP, Q, F):
    shift_w = (K - 1) * DH * WP + Q      # working width after the kw lane shift

    def kernel(xf_ref, w_ref, b_ref, o_ref, xb_ref, xs_ref):
        # xf_ref: (1, CI, F)      bf16  zero-upsampled + padded input, flat rows of stride WP
        # w_ref : (CO, K*K*CI)    bf16  tap-major equivalent-conv weights, pre-scaled by 1/11
        # b_ref : (CO, 1)         f32   bias with "+1" folded in, scaled by 1/11
        # o_ref : (1, CO, Q)      f32   lane-dense wide output (rows of stride WP)
        # xb_ref: (CI, F)         bf16  scratch: tanh()'d activations
        # xs_ref: (K*K*CI, Q)     bf16  scratch: 9 stacked tap views (contraction operand)

        # tanh exactly ONCE on the un-replicated buffer (tanh(0)=0 keeps pad zeros zero).
        xb_ref[...] = jnp.tanh(xf_ref[0].astype(jnp.float32)).astype(jnp.bfloat16)

        # Stack the 9 tap views along the contraction (sublane) axis.  kh offsets are
        # multiples of 128 lanes (DH*WP == 128) -> pure vreg selection; the misaligned
        # kw lane shift (0/1/2 lanes) is done once per kw and shared across the 3 kh taps.
        for kw in range(K):
            xs = xb_ref[:, kw * DW: kw * DW + shift_w]          # (CI, 2*128 + Q)
            for kh in range(K):
                t = kh * K + kw
                xs_ref[t * CI:(t + 1) * CI, :] = xs[:, kh * DH * WP: kh * DH * WP + Q]

        # ONE MXU matmul (16, 288) x (288, Q), f32 accumulation.
        y = jnp.dot(w_ref[...], xs_ref[...], preferred_element_type=jnp.float32)
        y = y + b_ref[...]                                      # == (conv + bias + 1) / 11
        # clamp(y*11, -3, 2)/11 == clamp(y, -3/11, 2/11): the /11 is folded into w/b.
        v = jnp.minimum(jnp.maximum(y, -3.0 / 11.0), 2.0 / 11.0)
        o_ref[0] = jax.nn.sigmoid(v)

    return kernel


def model_forward(x_nchw, w_pt, b_pt):
    N, C, H, W = x_nchw.shape
    assert C == CI
    HO = _out_size(H, SH, PH, DH, K)
    WO = _out_size(W, SW, PW, DW, K)

    # ConvTranspose2d == regular conv (flipped weights) on the zero-upsampled input.
    eph, epw = DH * (K - 1) - PH, DW * (K - 1) - PW             # edge padding
    Hp = (H - 1) * SH + 1 + 2 * eph                             # true padded rows
    Wp = (W - 1) * SW + 1 + 2 * epw                             # true padded row width
    assert HO == Hp - DH * (K - 1) and WO == Wp - DW * (K - 1)

    # Row stride WP: DH*WP must be a multiple of 128 so kh tap offsets are vreg-aligned.
    step = max(1, 128 // DH)
    WP = -(-Wp // step) * step
    assert (DH * WP) % 128 == 0 and WP >= Wp

    # Output lane width Q: multiple of 128 -> unmasked stores; wrapper slices to (HO, WO).
    HQ = HO
    while (HQ * WP) % 128:
        HQ += 1
    Q = HQ * WP

    # Input flat width F: every tap slice must stay in-bounds (VMEM reads are unchecked).
    max_off = (K - 1) * DH * WP + (K - 1) * DW
    FR = max(Hp, -(-(max_off + Q) // WP))
    while (FR * WP) % 128:
        FR += 1
    F = FR * WP
    assert max_off + Q <= F, "tap slices would read out of bounds"

    # bf16 cast + zero-upsample (interior pad) + edge pad + lane/row padding in ONE lax.pad,
    # channel-first; allow_input_fusion lets XLA fuse this producer into the pallas_call
    # operand so the padded buffer avoids a separate HBM round trip.
    xf = lax.pad(x_nchw.astype(jnp.bfloat16), jnp.zeros((), jnp.bfloat16),
                 [(0, 0, 0), (0, 0, 0),
                  (eph, eph + (FR - Hp), SH - 1),
                  (epw, epw + (WP - Wp), SW - 1)]).reshape(N, CI, F)

    # Equivalent-conv weights: spatial flip, tap-major (CO, kh, kw, CI), 1/11 folded in.
    w_taps = jnp.transpose(jnp.flip(w_pt, axis=(2, 3)), (2, 3, 1, 0))        # (K, K, CO, CI)
    w_flat = (jnp.transpose(w_taps, (2, 0, 1, 3)).reshape(CO, K * K * CI)
              / 11.0).astype(jnp.bfloat16)
    b2 = ((b_pt.astype(jnp.float32) + 1.0) / 11.0).reshape(CO, 1)            # "+1" folded in

    kernel = _make_kernel(WP, Q, F)
    out_wide = pl.pallas_call(
        kernel,
        out_shape=jax.ShapeDtypeStruct((N, CO, Q), jnp.float32),
        grid_spec=pltpu.PrefetchScalarGridSpec(
            num_scalar_prefetch=0,
            grid=(N,),
            in_specs=[
                pl.BlockSpec((1, CI, F), lambda n: (n, 0, 0)),
                pl.BlockSpec((CO, K * K * CI), lambda n: (0, 0)),
                pl.BlockSpec((CO, 1), lambda n: (0, 0)),
            ],
            out_specs=pl.BlockSpec((1, CO, Q), lambda n: (n, 0, 0)),
            scratch_shapes=[
                pltpu.VMEM((CI, F), jnp.bfloat16),          # tanh'd activations
                pltpu.VMEM((K * K * CI, Q), jnp.bfloat16),  # stacked contraction operand
            ],
        ),
        compiler_params=pltpu.CompilerParams(
            dimension_semantics=("parallel",),       # 2 TCs on v7x; cheap 2-step loop on v5e/v6e
            allow_input_fusion=[True, False, False],
        ),
    )(xf, w_flat, b2)

    # Wide rows have stride WP; first WO cols of the first HO rows are the NCHW output.
    return out_wide.reshape(N, CO, HQ, WP)[:, :, :HO, :WO]


def reference_forward(x_nchw, w_pt, b_pt):
    # Pure-JAX reference (transposed conv via lhs-dilated conv) for validation.
    xt = jnp.transpose(jnp.tanh(x_nchw), (0, 2, 3, 1))
    w_hwio = jnp.transpose(jnp.flip(w_pt, axis=(2, 3)), (2, 3, 0, 1))
    eph, epw = DH * (K - 1) - PH, DW * (K - 1) - PW
    y = jax.lax.conv_general_dilated(
        xt, w_hwio, window_strides=(1, 1),
        padding=[(eph, eph), (epw, epw)],
        lhs_dilation=(SH, SW), rhs_dilation=(DH, DW),
        dimension_numbers=("NHWC", "HWIO", "NHWC"),
        precision=jax.lax.Precision.HIGHEST)
    y = y + b_pt
    v = jnp.minimum(jnp.maximum(y + 1.0, -3.0), 2.0) / 11.0
    return jnp.transpose(jax.nn.sigmoid(v), (0, 3, 1, 2))


if __name__ == "__main__":
    key = jax.random.PRNGKey(0)
    kx, kw, kb = jax.random.split(key, 3)
    x = jax.random.normal(kx, (2, CI, 16, 16), dtype=jnp.float32)  # small NCHW input
    # TODO(synk): the fuzzed module assigns shape-mismatched weight/bias ((1,3)/(1,1)) that
    # would break ConvTranspose2d(32,16,3) at runtime; we instead use deterministic
    # correctly-shaped parameters (PyTorch layout: weight (CI, CO, kH, kW), bias (CO,)).
    w = 0.1 * jax.random.normal(kw, (CI, CO, K, K), dtype=jnp.float32)
    b = 0.1 * jax.random.normal(kb, (CO,), dtype=jnp.float32)

    out = jax.block_until_ready(jax.jit(model_forward)(x, w, b))

    ref = reference_forward(x, w, b)
    assert out.shape == ref.shape == (2, CO, 33, 33), (out.shape, ref.shape)
    err = float(jnp.max(jnp.abs(out - ref)))
    assert err < 5e-3, err   # bf16 inputs/weights on the MXU vs f32 HIGHEST reference
    print("KERNEL_OK")
</pallas_src>

<mosaic_0001>
module attributes {stable_mosaic.version = 11 : i64} {
  func.func @kernel(%arg0: i32, %arg1: memref<1x32x2560xbf16, #tpu.memory_space<vmem>>, %arg2: memref<16x288xbf16, #tpu.memory_space<vmem>>, %arg3: memref<16x1xf32, #tpu.memory_space<vmem>>, %arg4: memref<1x16x2176xf32, #tpu.memory_space<vmem>>, %arg5: memref<32x2560xbf16, #tpu.memory_space<vmem>>, %arg6: memref<288x2176xbf16, #tpu.memory_space<vmem>>) attributes {dimension_semantics = [#tpu.dimension_semantics<parallel>], iteration_bounds = array<i64: 2>, scalar_prefetch = 0 : i64, scratch_operands = 2 : i64, tpu.core_type = #tpu.core_type<tc>, window_params = [{transform_indices = @transform_0, window_bounds = array<i64: 1, 32, 2560>}, {pipeline_mode = #tpu.pipeline_mode<synchronous>, transform_indices = @transform_1, window_bounds = array<i64: 16, 288>}, {pipeline_mode = #tpu.pipeline_mode<synchronous>, transform_indices = @transform_2, window_bounds = array<i64: 16, 1>}, {transform_indices = @transform_3, window_bounds = array<i64: 1, 16, 2176>}]} {
    %c0 = arith.constant 0 : index
    %c0_0 = arith.constant 0 : index
    %c0_1 = arith.constant 0 : index
    %0 = vector.load %arg1[%c0, %c0_0, %c0_1] : memref<1x32x2560xbf16, #tpu.memory_space<vmem>>, vector<1x32x2560xbf16>
    %1 = vector.shape_cast %0 : vector<1x32x2560xbf16> to vector<32x2560xbf16>
    %2 = arith.extf %1 : vector<32x2560xbf16> to vector<32x2560xf32>
    %3 = math.tanh %2 : vector<32x2560xf32>
    %4 = arith.truncf %3 : vector<32x2560xf32> to vector<32x2560xbf16>
    %c0_2 = arith.constant 0 : index
    %c0_3 = arith.constant 0 : index
    %5 = vector.load %arg5[%c0_2, %c0_3] : memref<32x2560xbf16, #tpu.memory_space<vmem>>, vector<32x2560xbf16>
    tpu.vector_store %arg5[%c0_2, %c0_3], %4 {strides = array<i32>} : memref<32x2560xbf16, #tpu.memory_space<vmem>>, vector<32x2560xbf16>,
    %c0_4 = arith.constant 0 : index
    %c0_5 = arith.constant 0 : index
    %6 = vector.load %arg5[%c0_4, %c0_5] : memref<32x2560xbf16, #tpu.memory_space<vmem>>, vector<32x2432xbf16>
    %7 = vector.extract_strided_slice %6 {offsets = [0, 0], sizes = [32, 2176], strides = [1, 1]} : vector<32x2432xbf16> to vector<32x2176xbf16>
    %c0_6 = arith.constant 0 : index
    %c0_7 = arith.constant 0 : index
    %8 = vector.load %arg6[%c0_6, %c0_7] : memref<288x2176xbf16, #tpu.memory_space<vmem>>, vector<32x2176xbf16>
    tpu.vector_store %arg6[%c0_6, %c0_7], %7 {strides = array<i32>} : memref<288x2176xbf16, #tpu.memory_space<vmem>>, vector<32x2176xbf16>,
    %9 = vector.extract_strided_slice %6 {offsets = [0, 128], sizes = [32, 2176], strides = [1, 1]} : vector<32x2432xbf16> to vector<32x2176xbf16>
    %c96 = arith.constant 96 : index
    %c0_8 = arith.constant 0 : index
    %10 = vector.load %arg6[%c96, %c0_8] : memref<288x2176xbf16, #tpu.memory_space<vmem>>, vector<32x2176xbf16>
    tpu.vector_store %arg6[%c96, %c0_8], %9 {strides = array<i32>} : memref<288x2176xbf16, #tpu.memory_space<vmem>>, vector<32x2176xbf16>,
    %11 = vector.extract_strided_slice %6 {offsets = [0, 256], sizes = [32, 2176], strides = [1, 1]} : vector<32x2432xbf16> to vector<32x2176xbf16>
    %c192 = arith.constant 192 : index
    %c0_9 = arith.constant 0 : index
    %12 = vector.load %arg6[%c192, %c0_9] : memref<288x2176xbf16, #tpu.memory_space<vmem>>, vector<32x2176xbf16>
    tpu.vector_store %arg6[%c192, %c0_9], %11 {strides = array<i32>} : memref<288x2176xbf16, #tpu.memory_space<vmem>>, vector<32x2176xbf16>,
    %c0_10 = arith.constant 0 : index
    %c1 = arith.constant 1 : index
    %13 = vector.load %arg5[%c0_10, %c1] : memref<32x2560xbf16, #tpu.memory_space<vmem>>, vector<32x2432xbf16>
    %14 = vector.extract_strided_slice %13 {offsets = [0, 0], sizes = [32, 2176], strides = [1, 1]} : vector<32x2432xbf16> to vector<32x2176xbf16>
    %c32 = arith.constant 32 : index
    %c0_11 = arith.constant 0 : index
    %15 = vector.load %arg6[%c32, %c0_11] : memref<288x2176xbf16, #tpu.memory_space<vmem>>, vector<32x2176xbf16>
    tpu.vector_store %arg6[%c32, %c0_11], %14 {strides = array<i32>} : memref<288x2176xbf16, #tpu.memory_space<vmem>>, vector<32x2176xbf16>,
    %16 = vector.extract_strided_slice %13 {offsets = [0, 128], sizes = [32, 2176], strides = [1, 1]} : vector<32x2432xbf16> to vector<32x2176xbf16>
    %c128 = arith.constant 128 : index
    %c0_12 = arith.constant 0 : index
    %17 = vector.load %arg6[%c128, %c0_12] : memref<288x2176xbf16, #tpu.memory_space<vmem>>, vector<32x2176xbf16>
    tpu.vector_store %arg6[%c128, %c0_12], %16 {strides = array<i32>} : memref<288x2176xbf16, #tpu.memory_space<vmem>>, vector<32x2176xbf16>,
    %18 = vector.extract_strided_slice %13 {offsets = [0, 256], sizes = [32, 2176], strides = [1, 1]} : vector<32x2432xbf16> to vector<32x2176xbf16>
    %c224 = arith.constant 224 : index
    %c0_13 = arith.constant 0 : index
    %19 = vector.load %arg6[%c224, %c0_13] : memref<288x2176xbf16, #tpu.memory_space<vmem>>, vector<32x2176xbf16>
    tpu.vector_store %arg6[%c224, %c0_13], %18 {strides = array<i32>} : memref<288x2176xbf16, #tpu.memory_space<vmem>>, vector<32x2176xbf16>,
    %c0_14 = arith.constant 0 : index
    %c2 = arith.constant 2 : index
    %20 = vector.load %arg5[%c0_14, %c2] : memref<32x2560xbf16, #tpu.memory_space<vmem>>, vector<32x2432xbf16>
    %21 = vector.extract_strided_slice %20 {offsets = [0, 0], sizes = [32, 2176], strides = [1, 1]} : vector<32x2432xbf16> to vector<32x2176xbf16>
    %c64 = arith.constant 64 : index
    %c0_15 = arith.constant 0 : index
    %22 = vector.load %arg6[%c64, %c0_15] : memref<288x2176xbf16, #tpu.memory_space<vmem>>, vector<32x2176xbf16>
    tpu.vector_store %arg6[%c64, %c0_15], %21 {strides = array<i32>} : memref<288x2176xbf16, #tpu.memory_space<vmem>>, vector<32x2176xbf16>,
    %23 = vector.extract_strided_slice %20 {offsets = [0, 128], sizes = [32, 2176], strides = [1, 1]} : vector<32x2432xbf16> to vector<32x2176xbf16>
    %c160 = arith.constant 160 : index
    %c0_16 = arith.constant 0 : index
    %24 = vector.load %arg6[%c160, %c0_16] : memref<288x2176xbf16, #tpu.memory_space<vmem>>, vector<32x2176xbf16>
    tpu.vector_store %arg6[%c160, %c0_16], %23 {strides = array<i32>} : memref<288x2176xbf16, #tpu.memory_space<vmem>>, vector<32x2176xbf16>,
    %25 = vector.extract_strided_slice %20 {offsets = [0, 256], sizes = [32, 2176], strides = [1, 1]} : vector<32x2432xbf16> to vector<32x2176xbf16>
    %c256 = arith.constant 256 : index
    %c0_17 = arith.constant 0 : index
    %26 = vector.load %arg6[%c256, %c0_17] : memref<288x2176xbf16, #tpu.memory_space<vmem>>, vector<32x2176xbf16>
    tpu.vector_store %arg6[%c256, %c0_17], %25 {strides = array<i32>} : memref<288x2176xbf16, #tpu.memory_space<vmem>>, vector<32x2176xbf16>,
    %c0_18 = arith.constant 0 : index
    %c0_19 = arith.constant 0 : index
    %27 = vector.load %arg2[%c0_18, %c0_19] : memref<16x288xbf16, #tpu.memory_space<vmem>>, vector<16x288xbf16>
    %c0_20 = arith.constant 0 : index
    %c0_21 = arith.constant 0 : index
    %28 = vector.load %arg6[%c0_20, %c0_21] : memref<288x2176xbf16, #tpu.memory_space<vmem>>, vector<288x2176xbf16>
    %cst = arith.constant dense<0.000000e+00> : vector<16x2176xf32>
    %29 = tpu.matmul %27, %28, %cst {dimension_numbers = #tpu.dot_dimension_numbers<[1], [0], [0], [1], [0, 0, 1, 1], [], []>} : vector<16x288xbf16>, vector<288x2176xbf16>, vector<16x2176xf32> -> vector<16x2176xf32>
    %c0_22 = arith.constant 0 : index
    %c0_23 = arith.constant 0 : index
    %30 = vector.load %arg3[%c0_22, %c0_23] : memref<16x1xf32, #tpu.memory_space<vmem>>, vector<16x1xf32>
    %31 = vector.broadcast %30 : vector<16x1xf32> to vector<16x2176xf32>
    %32 = arith.addf %29, %31 : vector<16x2176xf32>
    %cst_24 = arith.constant -0.272727281 : f32
    %33 = vector.broadcast %cst_24 : f32 to vector<16x2176xf32>
    %34 = arith.maximumf %32, %33 : vector<16x2176xf32>
    %cst_25 = arith.constant 0.181818187 : f32
    %35 = vector.broadcast %cst_25 : f32 to vector<16x2176xf32>
    %36 = arith.minimumf %34, %35 : vector<16x2176xf32>
    %37 = arith.negf %36 : vector<16x2176xf32>
    %38 = math.exp %37 : vector<16x2176xf32>
    %cst_26 = arith.constant 1.000000e+00 : f32
    %39 = vector.broadcast %cst_26 : f32 to vector<16x2176xf32>
    %40 = arith.addf %39, %38 : vector<16x2176xf32>
    %41 = arith.divf %39, %40 : vector<16x2176xf32>
    %c0_27 = arith.constant 0 : index
    %c0_28 = arith.constant 0 : index
    %c0_29 = arith.constant 0 : index
    %42 = vector.load %arg4[%c0_27, %c0_28, %c0_29] : memref<1x16x2176xf32, #tpu.memory_space<vmem>>, vector<1x16x2176xf32>
    %43 = vector.shape_cast %42 : vector<1x16x2176xf32> to vector<16x2176xf32>
    %44 = vector.shape_cast %41 : vector<16x2176xf32> to vector<1x16x2176xf32>
    tpu.vector_store %arg4[%c0_27, %c0_28, %c0_29], %44 {strides = array<i32>} : memref<1x16x2176xf32, #tpu.memory_space<vmem>>, vector<1x16x2176xf32>,
    return
  }
  func.func @transform_0(%arg0: i32) -> (i32, i32, i32) {
    %c0_i32 = arith.constant 0 : i32
    %c0_i32_0 = arith.constant 0 : i32
    %c0_i32_1 = arith.constant 0 : i32
    return %arg0, %c0_i32, %c0_i32_0 : i32, i32, i32
  }
  func.func @transform_1(%arg0: i32) -> (i32, i32) {
    %c0_i32 = arith.constant 0 : i32
    %c0_i32_0 = arith.constant 0 : i32
    %c0_i32_1 = arith.constant 0 : i32
    return %c0_i32, %c0_i32_0 : i32, i32
  }
  func.func @transform_2(%arg0: i32) -> (i32, i32) {
    %c0_i32 = arith.constant 0 : i32
    %c0_i32_0 = arith.constant 0 : i32
    %c0_i32_1 = arith.constant 0 : i32
    return %c0_i32, %c0_i32_0 : i32, i32
  }
  func.func @transform_3(%arg0: i32) -> (i32, i32, i32) {
    %c0_i32 = arith.constant 0 : i32
    %c0_i32_0 = arith.constant 0 : i32
    %c0_i32_1 = arith.constant 0 : i32
    return %arg0, %c0_i32, %c0_i32_0 : i32, i32, i32
  }
}

</mosaic_0001>

<llo_original>
// kernel: model_forward.1
$region0: #{model_forward.1}
  #allocation0 [shape = 'u32[]', space=smem, size = 0x4, offset = 0x4, fixed_abs, tag = 'smem constant byte address 0x4 - core index']
  #allocation1 [shape = 'u32[72,128]{1,0:T(1,128)}', space=vmem, size = 0x9000, scoped, tag = 'internal scratch']
  #allocation2 [shape = 'bf16[32,2560]{1,0:T(8,128)(2,1)}', space=vmem, size = 0x28000, scoped, tag = 'scratch operand']
  #allocation3 [shape = 'bf16[288,2176]{1,0:T(8,128)(2,1)}', space=vmem, size = 0x132000, scoped, tag = 'scratch operand']
  %s0 = inlined_call_operand.vmem [shape: bf16[2,32,2560], index: 0, kind: input, shape index: {}]
  %s1 = inlined_call_operand.vmem [shape: bf16[16,288], index: 1, kind: input, shape index: {}]
  %s2 = inlined_call_operand.vmem [shape: f32[16,1], index: 2, kind: input, shape index: {}]
  %s3 = inlined_call_operand.vmem [shape: f32[2,16,2176], index: 3, kind: output, shape index: {}]
  %s4 = sld [smem:[#allocation0]]
  $region45: #{model_forward.1} parent=0
    _
  %s6 = ssub.s32 1, %s4
  %s7 = scalar_select 0, %s6, %s4
  loop: start=0, step=1, limit=4
  $region2: #{model_forward.1} parent=0 // loop_pre_header
    _
  $region3: #{model_forward.1} parent=0 // loop_header
    %s9 = sphi 0, %s13
    %p10 = scmp.ge.s32.totalorder %s9, 4
    %s19 = sphi 0, %s21
    %s22 = sphi 0, %s19
    %s23 = sphi 0, %s22
    %s39 = sphi 0, %s23
    %s43 = sphi 0, %s43
    %s45 = sphi 0, %s43
    %s46 = sphi 0, %s45
    %s60 = sphi 0, %s46
    %s64 = sphi 0, %s64
    %s66 = sphi 0, %s64
    %s67 = sphi 0, %s66
    %s81 = sphi 0, %s67
    %s87 = sphi 0, %s89
    %s90 = sphi 0, %s87
    %s91 = sphi 0, %s90
    %s107 = sphi 0, %s91
  $region4: #{model_forward.1} parent=0 // loop_header_branch
    %12 = sbr.rel (%p10) target = $region8
  $region5: #{model_forward.1} parent=0 // loop_body
    %s14 = ssub.s32 %s9, 1
    %s15 = ssub.s32 %s9, 2
    %s16 = sadd.s32 %s9, 1
    %s17 = ssub.s32 %s9, %s16
    %p18 = scmp.eq.s32.totalorder %s17, 0
    %s20 = sadd.s32 %s19, 1
    %s21 = scalar_select %p18, %s19, %s20
    %p24 = pneg %p18
    %p25 = scmp.eq.s32.totalorder %s9, 1
    %p26 = por %p24, %p25
    %p27 = scmp.ne.s32.totalorder %s19, %s22
    %p28 = scmp.eq.s32.totalorder %s9, 0
    %p29 = por %p27, %p28
    %p30 = scmp.ne.s32.totalorder %s19, %s22
    %p31 = scmp.eq.s32.totalorder %s14, 1
    %p32 = por %p30, %p31
    %p33 = scmp.ne.s32.totalorder %s22, %s23
    %p34 = scmp.eq.s32.totalorder %s14, 0
    %p35 = por %p33, %p34
    %p36 = scmp.ne.s32.totalorder %s22, %s23
    %p37 = scmp.eq.s32.totalorder %s15, 1
    %p38 = por %p36, %p37
    %p40 = scmp.ne.s32.totalorder %s23, %s39
    %p41 = scmp.eq.s32.totalorder %s15, 0
    %p42 = por %p40, %p41
    %s44 = sadd.s32 %s43, 1
    %p47 = scmp.eq.s32.totalorder %s9, 1
    %p48 = scmp.ne.s32.totalorder %s43, %s45
    %p49 = scmp.eq.s32.totalorder %s9, 0
    %p50 = por %p48, %p49
    %p51 = scmp.ne.s32.totalorder %s43, %s45
    %p52 = scmp.eq.s32.totalorder %s14, 1
    %p53 = por %p51, %p52
    %p54 = scmp.ne.s32.totalorder %s45, %s46
    %p55 = scmp.eq.s32.totalorder %s14, 0
    %p56 = por %p54, %p55
    %p57 = scmp.ne.s32.totalorder %s45, %s46
    %p58 = scmp.eq.s32.totalorder %s15, 1
    %p59 = por %p57, %p58
    %p61 = scmp.ne.s32.totalorder %s46, %s60
    %p62 = scmp.eq.s32.totalorder %s15, 0
    %p63 = por %p61, %p62
    %s65 = sadd.s32 %s64, 1
    %p68 = scmp.eq.s32.totalorder %s9, 1
    %p69 = scmp.ne.s32.totalorder %s64, %s66
    %p70 = scmp.eq.s32.totalorder %s9, 0
    %p71 = por %p69, %p70
    %p72 = scmp.ne.s32.totalorder %s64, %s66
    %p73 = scmp.eq.s32.totalorder %s14, 1
    %p74 = por %p72, %p73
    %p75 = scmp.ne.s32.totalorder %s66, %s67
    %p76 = scmp.eq.s32.totalorder %s14, 0
    %p77 = por %p75, %p76
    %p78 = scmp.ne.s32.totalorder %s66, %s67
    %p79 = scmp.eq.s32.totalorder %s15, 1
    %p80 = por %p78, %p79
    %p82 = scmp.ne.s32.totalorder %s67, %s81
    %p83 = scmp.eq.s32.totalorder %s15, 0
    %p84 = por %p82, %p83
    %s85 = ssub.s32 %s9, %s16
    %p86 = scmp.eq.s32.totalorder %s85, 0
    %s88 = sadd.s32 %s87, 1
    %s89 = scalar_select %p86, %s87, %s88
    %p92 = pneg %p86
    %p93 = scmp.eq.s32.totalorder %s9, 1
    %p94 = por %p92, %p93
    %p95 = scmp.ne.s32.totalorder %s87, %s90
    %p96 = scmp.eq.s32.totalorder %s9, 0
    %p97 = por %p95, %p96
    %p98 = scmp.ne.s32.totalorder %s87, %s90
    %p99 = scmp.eq.s32.totalorder %s14, 1
    %p100 = por %p98, %p99
    %p101 = scmp.ne.s32.totalorder %s90, %s91
    %p102 = scmp.eq.s32.totalorder %s14, 0
    %p103 = por %p101, %p102
    %p104 = scmp.ne.s32.totalorder %s90, %s91
    %p105 = scmp.eq.s32.totalorder %s15, 1
    %p106 = por %p104, %p105
    %p108 = scmp.ne.s32.totalorder %s91, %s107
    %p109 = scmp.eq.s32.totalorder %s15, 0
    %p110 = por %p108, %p109
    %p111 = scmp.le.s32.totalorder 1, %s9
    %p112 = scmp.lt.s32.totalorder %s9, 3
    %p113 = pnand %p111, %p112
    %p114 = pneg %p113
    // Predicated region
    $region9: #{model_forward.1} parent=5 // pred_check
      _
    $region10: #{model_forward.1} parent=5 // pred_check_branch
      %116 = sbr.rel (%p113) target = $region12
    $region11: #{model_forward.1} parent=5 // pred_region
      %s117 = ssub.s32 %s9, 1
      // Predicated region
      $region13: #{model_forward.1} parent=11 // pred_check
        %p118 = pneg %p56
      $region14: #{model_forward.1} parent=11 // pred_check_branch
        %120 = sbr.rel (%p118) target = $region16
      $region15: #{model_forward.1} parent=11 // pred_region
        _
      $region16: #{model_forward.1} parent=11 // pred_fallthru
        _
      // Predicated region
      $region17: #{model_forward.1} parent=11 // pred_check
        %p121 = pneg %p77
      $region18: #{model_forward.1} parent=11 // pred_check_branch
        %123 = sbr.rel (%p121) target = $region20
      $region19: #{model_forward.1} parent=11 // pred_region
        _
      $region20: #{model_forward.1} parent=11 // pred_fallthru
        _
    $region12: #{model_forward.1} parent=5 // pred_fallthru
      _
    %p124 = scmp.lt.s32.totalorder %s9, 2
    // Predicated region
    $region21: #{model_forward.1} parent=5 // pred_check
      %p125 = pneg %p124
    $region22: #{model_forward.1} parent=5 // pred_check_branch
      %127 = sbr.rel (%p125) target = $region24
    $region23: #{model_forward.1} parent=5 // pred_region
      // Predicated region
      $region25: #{model_forward.1} parent=23 // pred_check
        %p128 = pneg %p29
      $region26: #{model_forward.1} parent=23 // pred_check_branch
        %130 = sbr.rel (%p128) target = $region28
      $region27: #{model_forward.1} parent=23 // pred_region
        %p131 = scmp.lt.s32.totalorder %s9, 1
        %s132 = scalar_select %p131, %s9, 1
        %s133 = smul.addr %s132, 80
        %s134 = smul.addr %s133, 4
        %s135 = scalar_lea.vmem %s0, %s134
      $region28: #{model_forward.1} parent=23 // pred_fallthru
        _
    $region24: #{model_forward.1} parent=5 // pred_fallthru
      _
    %p136 = scmp.le.s32.totalorder 1, %s9
    %p137 = scmp.lt.s32.totalorder %s9, 3
    %p138 = pnand %p136, %p137
    %p139 = pneg %p138
    // Predicated region
    $region29: #{model_forward.1} parent=5 // pred_check
      _
    $region30: #{model_forward.1} parent=5 // pred_check_branch
      %141 = sbr.rel (%p138) target = $region32
    $region31: #{model_forward.1} parent=5 // pred_region
      %s142 = ssub.s32 %s9, 1
      %p143 = scmp.lt.s32.totalorder %s14, 1
      %s144 = scalar_select %p143, %s14, 1
      %s145 = smul.addr %s144, 80
      %s146 = smul.addr %s145, 4
      %s147 = scalar_lea.vmem %s0, %s146
      %p148 = pneg %p35
      %p149 = pneg %p32
      %p150 = pneg %p56
      %p151 = pneg %p53
      %p152 = pneg %p77
      %p153 = pneg %p74
      %p154 = pneg %p103
      %p155 = pneg %p100
      %p156 = scmp.lt.s32.totalorder %s14, 1
      %s157 = scalar_select %p156, %s14, 1
      %s158 = smul.addr %s157, 34
      %s159 = smul.addr %s158, 8
      %s160 = scalar_lea.vmem %s3, %s159
      %p161 = scmp.lt.s32.totalorder %s14, 1
      %s162 = scalar_select %p161, %s14, 1
      %s163 = smul.addr %s162, 80
      %s164 = smul.addr %s163, 4
      %s165 = scalar_lea.vmem %s0, %s164
      %p166 = scmp.lt.s32.totalorder %s14, 1
      %s167 = scalar_select %p166, %s14, 1
      %s168 = smul.addr %s167, 34
      %s169 = smul.addr %s168, 8
      %s170 = scalar_lea.vmem %s3, %s169
      %v172 = vld [vmem:[%s165] sm:$0xff]
      %v173 = vld [vmem:[%s165 + $0x8] sm:$0xff]
      %v174 = vld [vmem:[%s165 + $0x10] sm:$0xff]
      %v175 = vld [vmem:[%s165 + $0x18] sm:$0xff]
      %v176 = vld [vmem:[%s165 + $0x20] sm:$0xff]
      %v177 = vld [vmem:[%s165 + $0x28] sm:$0xff]
      %v178 = vld [vmem:[%s165 + $0x30] sm:$0xff]
      %v179 = vld [vmem:[%s165 + $0x38] sm:$0xff]
      %v180 = vld [vmem:[%s165 + $0x40] sm:$0xff]
      %v181 = vld [vmem:[%s165 + $0x48] sm:$0xff]
      %v182 = vld [vmem:[%s165 + $0x50] sm:$0xff]
      %v183 = vld [vmem:[%s165 + $0x58] sm:$0xff]
      %v184 = vld [vmem:[%s165 + $0x60] sm:$0xff]
      %v185 = vld [vmem:[%s165 + $0x68] sm:$0xff]
      %v186 = vld [vmem:[%s165 + $0x70] sm:$0xff]
      %v187 = vld [vmem:[%s165 + $0x78] sm:$0xff]
      %v188 = vld [vmem:[%s165 + $0x80] sm:$0xff]
      %v189 = vld [vmem:[%s165 + $0x88] sm:$0xff]
      %v190 = vld [vmem:[%s165 + $0x90] sm:$0xff]
      %v191 = vld [vmem:[%s165 + $0x98] sm:$0xff]
      %v192 = vld [vmem:[%s165 + $0xa0] sm:$0xff]
      %v193 = vld [vmem:[%s165 + $0xa8] sm:$0xff]
      %v194 = vld [vmem:[%s165 + $0xb0] sm:$0xff]
      %v195 = vld [vmem:[%s165 + $0xb8] sm:$0xff]
      %v196 = vld [vmem:[%s165 + $0xc0] sm:$0xff]
      %v197 = vld [vmem:[%s165 + $0xc8] sm:$0xff]
      %v198 = vld [vmem:[%s165 + $0xd0] sm:$0xff]
      %v199 = vld [vmem:[%s165 + $0xd8] sm:$0xff]
      %v200 = vld [vmem:[%s165 + $0xe0] sm:$0xff]
      %v201 = vld [vmem:[%s165 + $0xe8] sm:$0xff]
      %v202 = vld [vmem:[%s165 + $0xf0] sm:$0xff]
      %v203 = vld [vmem:[%s165 + $0xf8] sm:$0xff]
      %v204 = vld [vmem:[%s165 + $0x100] sm:$0xff]
      %v205 = vld [vmem:[%s165 + $0x108] sm:$0xff]
      %v206 = vld [vmem:[%s165 + $0x110] sm:$0xff]
      %v207 = vld [vmem:[%s165 + $0x118] sm:$0xff]
      %v208 = vld [vmem:[%s165 + $0x120] sm:$0xff]
      %v209 = vld [vmem:[%s165 + $0x128] sm:$0xff]
      %v210 = vld [vmem:[%s165 + $0x130] sm:$0xff]
      %v211 = vld [vmem:[%s165 + $0x138] sm:$0xff]
      %v212 = vunpack.c.l.bf16 %v172
      %v213 = vunpack.c.h.bf16 %v172
      %v214 = vunpack.c.l.bf16 %v173
      %v215 = vunpack.c.h.bf16 %v173
      %v216 = vunpack.c.l.bf16 %v174
      %v217 = vunpack.c.h.bf16 %v174
      %v218 = vunpack.c.l.bf16 %v175
      %v219 = vunpack.c.h.bf16 %v175
      %v220 = vunpack.c.l.bf16 %v176
      %v221 = vunpack.c.h.bf16 %v176
      %v222 = vunpack.c.l.bf16 %v177
      %v223 = vunpack.c.h.bf16 %v177
      %v224 = vunpack.c.l.bf16 %v178
      %v225 = vunpack.c.h.bf16 %v178
      %v226 = vunpack.c.l.bf16 %v179
      %v227 = vunpack.c.h.bf16 %v179
      %v228 = vunpack.c.l.bf16 %v180
      %v229 = vunpack.c.h.bf16 %v180
      %v230 = vunpack.c.l.bf16 %v181
      %v231 = vunpack.c.h.bf16 %v181
      %v232 = vunpack.c.l.bf16 %v182
      %v233 = vunpack.c.h.bf16 %v182
      %v234 = vunpack.c.l.bf16 %v183
      %v235 = vunpack.c.h.bf16 %v183
      %v236 = vunpack.c.l.bf16 %v184
      %v237 = vunpack.c.h.bf16 %v184
      %v238 = vunpack.c.l.bf16 %v185
      %v239 = vunpack.c.h.bf16 %v185
      %v240 = vunpack.c.l.bf16 %v186
      %v241 = vunpack.c.h.bf16 %v186
      %v242 = vunpack.c.l.bf16 %v187
      %v243 = vunpack.c.h.bf16 %v187
      %v244 = vunpack.c.l.bf16 %v188
      %v245 = vunpack.c.h.bf16 %v188
      %v246 = vunpack.c.l.bf16 %v189
      %v247 = vunpack.c.h.bf16 %v189
      %v248 = vunpack.c.l.bf16 %v190
      %v249 = vunpack.c.h.bf16 %v190
      %v250 = vunpack.c.l.bf16 %v191
      %v251 = vunpack.c.h.bf16 %v191
      %v252 = vunpack.c.l.bf16 %v192
      %v253 = vunpack.c.h.bf16 %v192
      %v254 = vunpack.c.l.bf16 %v193
      %v255 = vunpack.c.h.bf16 %v193
      %v256 = vunpack.c.l.bf16 %v194
      %v257 = vunpack.c.h.bf16 %v194
      %v258 = vunpack.c.l.bf16 %v195
      %v259 = vunpack.c.h.bf16 %v195
      %v260 = vunpack.c.l.bf16 %v196
      %v261 = vunpack.c.h.bf16 %v196
      %v262 = vunpack.c.l.bf16 %v197
      %v263 = vunpack.c.h.bf16 %v197
      %v264 = vunpack.c.l.bf16 %v198
      %v265 = vunpack.c.h.bf16 %v198
      %v266 = vunpack.c.l.bf16 %v199
      %v267 = vunpack.c.h.bf16 %v199
      %v268 = vunpack.c.l.bf16 %v200
      %v269 = vunpack.c.h.bf16 %v200
      %v270 = vunpack.c.l.bf16 %v201
      %v271 = vunpack.c.h.bf16 %v201
      %v272 = vunpack.c.l.bf16 %v202
      %v273 = vunpack.c.h.bf16 %v202
      %v274 = vunpack.c.l.bf16 %v203
      %v275 = vunpack.c.h.bf16 %v203
      %v276 = vunpack.c.l.bf16 %v204
      %v277 = vunpack.c.h.bf16 %v204
      %v278 = vunpack.c.l.bf16 %v205
      %v279 = vunpack.c.h.bf16 %v205
      %v280 = vunpack.c.l.bf16 %v206
      %v281 = vunpack.c.h.bf16 %v206
      %v282 = vunpack.c.l.bf16 %v207
      %v283 = vunpack.c.h.bf16 %v207
      %v284 = vunpack.c.l.bf16 %v208
      %v285 = vunpack.c.h.bf16 %v208
      %v286 = vunpack.c.l.bf16 %v209
      %v287 = vunpack.c.h.bf16 %v209
      %v288 = vunpack.c.l.bf16 %v210
      %v289 = vunpack.c.h.bf16 %v210
      %v290 = vunpack.c.l.bf16 %v211
      %v291 = vunpack.c.h.bf16 %v211
      %v292 = vtanh.pop %v212
      %v293 = vtanh.pop %v213
      %v294 = vtanh.pop %v214
      %v295 = vtanh.pop %v215
      %v296 = vtanh.pop %v216
      %v297 = vtanh.pop %v217
      %v298 = vtanh.pop %v218
      %v299 = vtanh.pop %v219
      %v300 = vtanh.pop %v220
      %v301 = vtanh.pop %v221
      %v302 = vtanh.pop %v222
      %v303 = vtanh.pop %v223
      %v304 = vtanh.pop %v224
      %v305 = vtanh.pop %v225
      %v306 = vtanh.pop %v226
      %v307 = vtanh.pop %v227
      %v308 = vtanh.pop %v228
      %v309 = vtanh.pop %v229
      %v310 = vtanh.pop %v230
      %v311 = vtanh.pop %v231
      %v312 = vtanh.pop %v232
      %v313 = vtanh.pop %v233
      %v314 = vtanh.pop %v234
      %v315 = vtanh.pop %v235
      %v316 = vtanh.pop %v236
      %v317 = vtanh.pop %v237
      %v318 = vtanh.pop %v238
      %v319 = vtanh.pop %v239
      %v320 = vtanh.pop %v240
      %v321 = vtanh.pop %v241
      %v322 = vtanh.pop %v242
      %v323 = vtanh.pop %v243
      %v324 = vtanh.pop %v244
      %v325 = vtanh.pop %v245
      %v326 = vtanh.pop %v246
      %v327 = vtanh.pop %v247
      %v328 = vtanh.pop %v248
      %v329 = vtanh.pop %v249
      %v330 = vtanh.pop %v250
      %v331 = vtanh.pop %v251
      %v332 = vtanh.pop %v252
      %v333 = vtanh.pop %v253
      %v334 = vtanh.pop %v254
      %v335 = vtanh.pop %v255
      %v336 = vtanh.pop %v256
      %v337 = vtanh.pop %v257
      %v338 = vtanh.pop %v258
      %v339 = vtanh.pop %v259
      %v340 = vtanh.pop %v260
      %v341 = vtanh.pop %v261
      %v342 = vtanh.pop %v262
      %v343 = vtanh.pop %v263
      %v344 = vtanh.pop %v264
      %v345 = vtanh.pop %v265
      %v346 = vtanh.pop %v266
      %v347 = vtanh.pop %v267
      %v348 = vtanh.pop %v268
      %v349 = vtanh.pop %v269
      %v350 = vtanh.pop %v270
      %v351 = vtanh.pop %v271
      %v352 = vtanh.pop %v272
      %v353 = vtanh.pop %v273
      %v354 = vtanh.pop %v274
      %v355 = vtanh.pop %v275
      %v356 = vtanh.pop %v276
      %v357 = vtanh.pop %v277
      %v358 = vtanh.pop %v278
      %v359 = vtanh.pop %v279
      %v360 = vtanh.pop %v280
      %v361 = vtanh.pop %v281
      %v362 = vtanh.pop %v282
      %v363 = vtanh.pop %v283
      %v364 = vtanh.pop %v284
      %v365 = vtanh.pop %v285
      %v366 = vtanh.pop %v286
      %v367 = vtanh.pop %v287
      %v368 = vtanh.pop %v288
      %v369 = vtanh.pop %v289
      %v370 = vtanh.pop %v290
      %v371 = vtanh.pop %v291
      %v372 = vpack.c.bf16 %v293, %v292
      %v373 = vpack.c.bf16 %v295, %v294
      %v374 = vpack.c.bf16 %v297, %v296
      %v375 = vpack.c.bf16 %v299, %v298
      %v376 = vpack.c.bf16 %v301, %v300
      %v377 = vpack.c.bf16 %v303, %v302
      %v378 = vpack.c.bf16 %v305, %v304
      %v379 = vpack.c.bf16 %v307, %v306
      %v380 = vpack.c.bf16 %v309, %v308
      %v381 = vpack.c.bf16 %v311, %v310
      %v382 = vpack.c.bf16 %v313, %v312
      %v383 = vpack.c.bf16 %v315, %v314
      %v384 = vpack.c.bf16 %v317, %v316
      %v385 = vpack.c.bf16 %v319, %v318
      %v386 = vpack.c.bf16 %v321, %v320
      %v387 = vpack.c.bf16 %v323, %v322
      %v388 = vpack.c.bf16 %v325, %v324
      %v389 = vpack.c.bf16 %v327, %v326
      %v390 = vpack.c.bf16 %v329, %v328
      %v391 = vpack.c.bf16 %v331, %v330
      %v392 = vpack.c.bf16 %v333, %v332
      %v393 = vpack.c.bf16 %v335, %v334
      %v394 = vpack.c.bf16 %v337, %v336
      %v395 = vpack.c.bf16 %v339, %v338
      %v396 = vpack.c.bf16 %v341, %v340
      %v397 = vpack.c.bf16 %v343, %v342
      %v398 = vpack.c.bf16 %v345, %v344
      %v399 = vpack.c.bf16 %v347, %v346
      %v400 = vpack.c.bf16 %v349, %v348
      %v401 = vpack.c.bf16 %v351, %v350
      %v402 = vpack.c.bf16 %v353, %v352
      %v403 = vpack.c.bf16 %v355, %v354
      %v404 = vpack.c.bf16 %v357, %v356
      %v405 = vpack.c.bf16 %v359, %v358
      %v406 = vpack.c.bf16 %v361, %v360
      %v407 = vpack.c.bf16 %v363, %v362
      %v408 = vpack.c.bf16 %v365, %v364
      %v409 = vpack.c.bf16 %v367, %v366
      %v410 = vpack.c.bf16 %v369, %v368
      %v411 = vpack.c.bf16 %v371, %v370
      %412 = vst [vmem:[#allocation2] sm:$0xff] %v372
      %413 = vst [vmem:[#allocation2 + $0x8] sm:$0xff] %v373
      %414 = vst [vmem:[#allocation2 + $0x10] sm:$0xff] %v374
      %415 = vst [vmem:[#allocation2 + $0x18] sm:$0xff] %v375
      %416 = vst [vmem:[#allocation2 + $0x20] sm:$0xff] %v376
      %417 = vst [vmem:[#allocation2 + $0x28] sm:$0xff] %v377
      %418 = vst [vmem:[#allocation2 + $0x30] sm:$0xff] %v378
      %419 = vst [vmem:[#allocation2 + $0x38] sm:$0xff] %v379
      %420 = vst [vmem:[#allocation2 + $0x40] sm:$0xff] %v380
      %421 = vst [vmem:[#allocation2 + $0x48] sm:$0xff] %v381
      %422 = vst [vmem:[#allocation2 + $0x50] sm:$0xff] %v382
      %423 = vst [vmem:[#allocation2 + $0x58] sm:$0xff] %v383
      %424 = vst [vmem:[#allocation2 + $0x60] sm:$0xff] %v384
      %425 = vst [vmem:[#allocation2 + $0x68] sm:$0xff] %v385
      %426 = vst [vmem:[#allocation2 + $0x70] sm:$0xff] %v386
      %427 = vst [vmem:[#allocation2 + $0x78] sm:$0xff] %v387
      %428 = vst [vmem:[#allocation2 + $0x80] sm:$0xff] %v388
      %429 = vst [vmem:[#allocation2 + $0x88] sm:$0xff] %v389
      %430 = vst [vmem:[#allocation2 + $0x90] sm:$0xff] %v390
      %431 = vst [vmem:[#allocation2 + $0x98] sm:$0xff] %v391
      %432 = vst [vmem:[#allocation2 + $0xa0] sm:$0xff] %v392
      %433 = vst [vmem:[#allocation2 + $0xa8] sm:$0xff] %v393
      %434 = vst [vmem:[#allocation2 + $0xb0] sm:$0xff] %v394
      %435 = vst [vmem:[#allocation2 + $0xb8] sm:$0xff] %v395
      %436 = vst [vmem:[#allocation2 + $0xc0] sm:$0xff] %v396
      %437 = vst [vmem:[#allocation2 + $0xc8] sm:$0xff] %v397
      %438 = vst [vmem:[#allocation2 + $0xd0] sm:$0xff] %v398
      %439 = vst [vmem:[#allocation2 + $0xd8] sm:$0xff] %v399
      %440 = vst [vmem:[#allocation2 + $0xe0] sm:$0xff] %v400
      %441 = vst [vmem:[#allocation2 + $0xe8] sm:$0xff] %v401
      %442 = vst [vmem:[#allocation2 + $0xf0] sm:$0xff] %v402
      %443 = vst [vmem:[#allocation2 + $0xf8] sm:$0xff] %v403
      %444 = vst [vmem:[#allocation2 + $0x100] sm:$0xff] %v404
      %445 = vst [vmem:[#allocation2 + $0x108] sm:$0xff] %v405
      %446 = vst [vmem:[#allocation2 + $0x110] sm:$0xff] %v406
      %447 = vst [vmem:[#allocation2 + $0x118] sm:$0xff] %v407
      %448 = vst [vmem:[#allocation2 + $0x120] sm:$0xff] %v408
      %449 = vst [vmem:[#allocation2 + $0x128] sm:$0xff] %v409
      %450 = vst [vmem:[#allocation2 + $0x130] sm:$0xff] %v410
      %451 = vst [vmem:[#allocation2 + $0x138] sm:$0xff] %v411
      %v452 = vld [vmem:[#allocation2] sm:$0xff]
      %v453 = vld [vmem:[#allocation2 + $0x8] sm:$0xff]
      %v454 = vld [vmem:[#allocation2 + $0x10] sm:$0xff]
      %v455 = vld [vmem:[#allocation2 + $0x18] sm:$0xff]
      %v456 = vld [vmem:[#allocation2 + $0x20] sm:$0xff]
      %v457 = vld [vmem:[#allocation2 + $0x28] sm:$0xff]
      %v458 = vld [vmem:[#allocation2 + $0x30] sm:$0xff]
      %v459 = vld [vmem:[#allocation2 + $0x38] sm:$0xff]
      %v460 = vld [vmem:[#allocation2 + $0x40] sm:$0xff]
      %v461 = vld [vmem:[#allocation2 + $0x48] sm:$0xf]
      %v462 = vld [vmem:[#allocation2 + $0x50] sm:$0xff]
      %v463 = vld [vmem:[#allocation2 + $0x58] sm:$0xff]
      %v464 = vld [vmem:[#allocation2 + $0x60] sm:$0xff]
      %v465 = vld [vmem:[#allocation2 + $0x68] sm:$0xff]
      %v466 = vld [vmem:[#allocation2 + $0x70] sm:$0xff]
      %v467 = vld [vmem:[#allocation2 + $0x78] sm:$0xff]
      %v468 = vld [vmem:[#allocation2 + $0x80] sm:$0xff]
      %v469 = vld [vmem:[#allocation2 + $0x88] sm:$0xff]
      %v470 = vld [vmem:[#allocation2 + $0x90] sm:$0xff]
      %v471 = vld [vmem:[#allocation2 + $0x98] sm:$0xf]
      %v472 = vld [vmem:[#allocation2 + $0xa0] sm:$0xff]
      %v473 = vld [vmem:[#allocation2 + $0xa8] sm:$0xff]
      %v474 = vld [vmem:[#allocation2 + $0xb0] sm:$0xff]
      %v475 = vld [vmem:[#allocation2 + $0xb8] sm:$0xff]
      %v476 = vld [vmem:[#allocation2 + $0xc0] sm:$0xff]
      %v477 = vld [vmem:[#allocation2 + $0xc8] sm:$0xff]
      %v478 = vld [vmem:[#allocation2 + $0xd0] sm:$0xff]
      %v479 = vld [vmem:[#allocation2 + $0xd8] sm:$0xff]
      %v480 = vld [vmem:[#allocation2 + $0xe0] sm:$0xff]
      %v481 = vld [vmem:[#allocation2 + $0xe8] sm:$0xf]
      %v482 = vld [vmem:[#allocation2 + $0xf0] sm:$0xff]
      %v483 = vld [vmem:[#allocation2 + $0xf8] sm:$0xff]
      %v484 = vld [vmem:[#allocation2 + $0x100] sm:$0xff]
      %v485 = vld [vmem:[#allocation2 + $0x108] sm:$0xff]
      %v486 = vld [vmem:[#allocation2 + $0x110] sm:$0xff]
      %v487 = vld [vmem:[#allocation2 + $0x118] sm:$0xff]
      %v488 = vld [vmem:[#allocation2 + $0x120] sm:$0xff]
      %v489 = vld [vmem:[#allocation2 + $0x128] sm:$0xff]
      %v490 = vld [vmem:[#allocation2 + $0x130] sm:$0xff]
      %v491 = vld [vmem:[#allocation2 + $0x138] sm:$0xf]
      %492 = vst [vmem:[#allocation3] sm:$0xff] %v452
      %493 = vst [vmem:[#allocation3 + $0x8] sm:$0xff] %v453
      %494 = vst [vmem:[#allocation3 + $0x10] sm:$0xff] %v454
      %495 = vst [vmem:[#allocation3 + $0x18] sm:$0xff] %v455
      %496 = vst [vmem:[#allocation3 + $0x20] sm:$0xff] %v456
      %497 = vst [vmem:[#allocation3 + $0x28] sm:$0xff] %v457
      %498 = vst [vmem:[#allocation3 + $0x30] sm:$0xff] %v458
      %499 = vst [vmem:[#allocation3 + $0x38] sm:$0xff] %v459
      %500 = vst [vmem:[#allocation3 + $0x40] sm:$0xf] %v460
      %501 = vst [vmem:[#allocation3 + $0x44] sm:$0xff] %v462
      %502 = vst [vmem:[#allocation3 + $0x4c] sm:$0xff] %v463
      %503 = vst [vmem:[#allocation3 + $0x54] sm:$0xff] %v464
      %504 = vst [vmem:[#allocation3 + $0x5c] sm:$0xff] %v465
      %505 = vst [vmem:[#allocation3 + $0x64] sm:$0xff] %v466
      %506 = vst [vmem:[#allocation3 + $0x6c] sm:$0xff] %v467
      %507 = vst [vmem:[#allocation3 + $0x74] sm:$0xff] %v468
      %508 = vst [vmem:[#allocation3 + $0x7c] sm:$0xff] %v469
      %509 = vst [vmem:[#allocation3 + $0x84] sm:$0xf] %v470
      %510 = vst [vmem:[#allocation3 + $0x88] sm:$0xff] %v472
      %511 = vst [vmem:[#allocation3 + $0x90] sm:$0xff] %v473
      %512 = vst [vmem:[#allocation3 + $0x98] sm:$0xff] %v474
      %513 = vst [vmem:[#allocation3 + $0xa0] sm:$0xff] %v475
      %514 = vst [vmem:[#allocation3 + $0xa8] sm:$0xff] %v476
      %515 = vst [vmem:[#allocation3 + $0xb0] sm:$0xff] %v477
      %516 = vst [vmem:[#allocation3 + $0xb8] sm:$0xff] %v478
      %517 = vst [vmem:[#allocation3 + $0xc0] sm:$0xff] %v479
      %518 = vst [vmem:[#allocation3 + $0xc8] sm:$0xf] %v480
      %519 = vst [vmem:[#allocation3 + $0xcc] sm:$0xff] %v482
      %520 = vst [vmem:[#allocation3 + $0xd4] sm:$0xff] %v483
      %521 = vst [vmem:[#allocation3 + $0xdc] sm:$0xff] %v484
      %522 = vst [vmem:[#allocation3 + $0xe4] sm:$0xff] %v485
      %523 = vst [vmem:[#allocation3 + $0xec] sm:$0xff] %v486
      %524 = vst [vmem:[#allocation3 + $0xf4] sm:$0xff] %v487
      %525 = vst [vmem:[#allocation3 + $0xfc] sm:$0xff] %v488
      %526 = vst [vmem:[#allocation3 + $0x104] sm:$0xff] %v489
      %527 = vst [vmem:[#allocation3 + $0x10c] sm:$0xf] %v490
      %v564 = vrot.slane %v452, 4
      %v565 = vrot.slane %v453, 4
      %v566 = vrot.slane %v454, 4
      %v567 = vrot.slane %v455, 4
      %v568 = vrot.slane %v456, 4
      %v569 = vrot.slane %v457, 4
      %v570 = vrot.slane %v458, 4
      %v571 = vrot.slane %v459, 4
      %v572 = vrot.slane %v460, 4
      %v573 = vrot.slane %v462, 4
      %v574 = vrot.slane %v463, 4
      %v575 = vrot.slane %v464, 4
      %v576 = vrot.slane %v465, 4
      %v577 = vrot.slane %v466, 4
      %v578 = vrot.slane %v467, 4
      %v579 = vrot.slane %v468, 4
      %v580 = vrot.slane %v469, 4
      %v581 = vrot.slane %v470, 4
      %v582 = vrot.slane %v472, 4
      %v583 = vrot.slane %v473, 4
      %v584 = vrot.slane %v474, 4
      %v585 = vrot.slane %v475, 4
      %v586 = vrot.slane %v476, 4
      %v587 = vrot.slane %v477, 4
      %v588 = vrot.slane %v478, 4
      %v589 = vrot.slane %v479, 4
      %v590 = vrot.slane %v480, 4
      %v591 = vrot.slane %v482, 4
      %v592 = vrot.slane %v483, 4
      %v593 = vrot.slane %v484, 4
      %v594 = vrot.slane %v485, 4
      %v595 = vrot.slane %v486, 4
      %v596 = vrot.slane %v487, 4
      %v597 = vrot.slane %v488, 4
      %v598 = vrot.slane %v489, 4
      %v599 = vrot.slane %v490, 4
      %vm600 = vcmask 1043456
      %v601 = vsel %vm600, %v564, %v565
      %v602 = vsel %vm600, %v565, %v566
      %v603 = vsel %vm600, %v566, %v567
      %v604 = vsel %vm600, %v567, %v568
      %v605 = vsel %vm600, %v568, %v569
      %v606 = vsel %vm600, %v569, %v570
      %v607 = vsel %vm600, %v570, %v571
      %v608 = vsel %vm600, %v571, %v572
      %v609 = vsel %vm600, %v573, %v574
      %v610 = vsel %vm600, %v574, %v575
      %v611 = vsel %vm600, %v575, %v576
      %v612 = vsel %vm600, %v576, %v577
      %v613 = vsel %vm600, %v577, %v578
      %v614 = vsel %vm600, %v578, %v579
      %v615 = vsel %vm600, %v579, %v580
      %v616 = vsel %vm600, %v580, %v581
      %v617 = vsel %vm600, %v582, %v583
      %v618 = vsel %vm600, %v583, %v584
      %v619 = vsel %vm600, %v584, %v585
      %v620 = vsel %vm600, %v585, %v586
      %v621 = vsel %vm600, %v586, %v587
      %v622 = vsel %vm600, %v587, %v588
      %v623 = vsel %vm600, %v588, %v589
      %v624 = vsel %vm600, %v589, %v590
      %v625 = vsel %vm600, %v591, %v592
      %v626 = vsel %vm600, %v592, %v593
      %v627 = vsel %vm600, %v593, %v594
      %v628 = vsel %vm600, %v594, %v595
      %v629 = vsel %vm600, %v595, %v596
      %v630 = vsel %vm600, %v596, %v597
      %v631 = vsel %vm600, %v597, %v598
      %v632 = vsel %vm600, %v598, %v599
      %669 = vst [vmem:[#allocation3 + $0x330] sm:$0xff] %v601
      %670 = vst [vmem:[#allocation3 + $0x338] sm:$0xff] %v602
      %671 = vst [vmem:[#allocation3 + $0x340] sm:$0xff] %v603
      %672 = vst [vmem:[#allocation3 + $0x348] sm:$0xff] %v604
      %673 = vst [vmem:[#allocation3 + $0x350] sm:$0xff] %v605
      %674 = vst [vmem:[#allocation3 + $0x358] sm:$0xff] %v606
      %675 = vst [vmem:[#allocation3 + $0x360] sm:$0xff] %v607
      %676 = vst [vmem:[#allocation3 + $0x368] sm:$0xff] %v608
      %677 = vst [vmem:[#allocation3 + $0x370] sm:$0xf] %v572
      %678 = vst [vmem:[#allocation3 + $0x374] sm:$0xff] %v609
      %679 = vst [vmem:[#allocation3 + $0x37c] sm:$0xff] %v610
      %680 = vst [vmem:[#allocation3 + $0x384] sm:$0xff] %v611
      %681 = vst [vmem:[#allocation3 + $0x38c] sm:$0xff] %v612
      %682 = vst [vmem:[#allocation3 + $0x394] sm:$0xff] %v613
      %683 = vst [vmem:[#allocation3 + $0x39c] sm:$0xff] %v614
      %684 = vst [vmem:[#allocation3 + $0x3a4] sm:$0xff] %v615
      %685 = vst [vmem:[#allocation3 + $0x3ac] sm:$0xff] %v616
      %686 = vst [vmem:[#allocation3 + $0x3b4] sm:$0xf] %v581
      %687 = vst [vmem:[#allocation3 + $0x3b8] sm:$0xff] %v617
      %688 = vst [vmem:[#allocation3 + $0x3c0] sm:$0xff] %v618
      %689 = vst [vmem:[#allocation3 + $0x3c8] sm:$0xff] %v619
      %690 = vst [vmem:[#allocation3 + $0x3d0] sm:$0xff] %v620
      %691 = vst [vmem:[#allocation3 + $0x3d8] sm:$0xff] %v621
      %692 = vst [vmem:[#allocation3 + $0x3e0] sm:$0xff] %v622
      %693 = vst [vmem:[#allocation3 + $0x3e8] sm:$0xff] %v623
      %694 = vst [vmem:[#allocation3 + $0x3f0] sm:$0xff] %v624
      %695 = vst [vmem:[#allocation3 + $0x3f8] sm:$0xf] %v590
      %696 = vst [vmem:[#allocation3 + $0x3fc] sm:$0xff] %v625
      %697 = vst [vmem:[#allocation3 + $0x404] sm:$0xff] %v626
      %698 = vst [vmem:[#allocation3 + $0x40c] sm:$0xff] %v627
      %699 = vst [vmem:[#allocation3 + $0x414] sm:$0xff] %v628
      %700 = vst [vmem:[#allocation3 + $0x41c] sm:$0xff] %v629
      %701 = vst [vmem:[#allocation3 + $0x424] sm:$0xff] %v630
      %702 = vst [vmem:[#allocation3 + $0x42c] sm:$0xff] %v631
      %703 = vst [vmem:[#allocation3 + $0x434] sm:$0xff] %v632
      %704 = vst [vmem:[#allocation3 + $0x43c] sm:$0xf] %v599
      %705 = vst [vmem:[#allocation3 + $0x660] sm:$0xff] %v453
      %706 = vst [vmem:[#allocation3 + $0x668] sm:$0xff] %v454
      %707 = vst [vmem:[#allocation3 + $0x670] sm:$0xff] %v455
      %708 = vst [vmem:[#allocation3 + $0x678] sm:$0xff] %v456
      %709 = vst [vmem:[#allocation3 + $0x680] sm:$0xff] %v457
      %710 = vst [vmem:[#allocation3 + $0x688] sm:$0xff] %v458
      %711 = vst [vmem:[#allocation3 + $0x690] sm:$0xff] %v459
      %712 = vst [vmem:[#allocation3 + $0x698] sm:$0xff] %v460
      %713 = vst [vmem:[#allocation3 + $0x6a0] sm:$0xf] %v461
      %714 = vst [vmem:[#allocation3 + $0x6a4] sm:$0xff] %v463
      %715 = vst [vmem:[#allocation3 + $0x6ac] sm:$0xff] %v464
      %716 = vst [vmem:[#allocation3 + $0x6b4] sm:$0xff] %v465
      %717 = vst [vmem:[#allocation3 + $0x6bc] sm:$0xff] %v466
      %718 = vst [vmem:[#allocation3 + $0x6c4] sm:$0xff] %v467
      %719 = vst [vmem:[#allocation3 + $0x6cc] sm:$0xff] %v468
      %720 = vst [vmem:[#allocation3 + $0x6d4] sm:$0xff] %v469
      %721 = vst [vmem:[#allocation3 + $0x6dc] sm:$0xff] %v470
      %722 = vst [vmem:[#allocation3 + $0x6e4] sm:$0xf] %v471
      %723 = vst [vmem:[#allocation3 + $0x6e8] sm:$0xff] %v473
      %724 = vst [vmem:[#allocation3 + $0x6f0] sm:$0xff] %v474
      %725 = vst [vmem:[#allocation3 + $0x6f8] sm:$0xff] %v475
      %726 = vst [vmem:[#allocation3 + $0x700] sm:$0xff] %v476
      %727 = vst [vmem:[#allocation3 + $0x708] sm:$0xff] %v477
      %728 = vst [vmem:[#allocation3 + $0x710] sm:$0xff] %v478
      %729 = vst [vmem:[#allocation3 + $0x718] sm:$0xff] %v479
      %730 = vst [vmem:[#allocation3 + $0x720] sm:$0xff] %v480
      %731 = vst [vmem:[#allocation3 + $0x728] sm:$0xf] %v481
      %732 = vst [vmem:[#allocation3 + $0x72c] sm:$0xff] %v483
      %733 = vst [vmem:[#allocation3 + $0x734] sm:$0xff] %v484
      %734 = vst [vmem:[#allocation3 + $0x73c] sm:$0xff] %v485
      %735 = vst [vmem:[#allocation3 + $0x744] sm:$0xff] %v486
      %736 = vst [vmem:[#allocation3 + $0x74c] sm:$0xff] %v487
      %737 = vst [vmem:[#allocation3 + $0x754] sm:$0xff] %v488
      %738 = vst [vmem:[#allocation3 + $0x75c] sm:$0xff] %v489
      %739 = vst [vmem:[#allocation3 + $0x764] sm:$0xff] %v490
      %740 = vst [vmem:[#allocation3 + $0x76c] sm:$0xf] %v491
      %v741 = vld [vmem:[#allocation2] sm:$0xff]
      %v742 = vld [vmem:[#allocation2 + $0x8] sm:$0xff]
      %v743 = vld [vmem:[#allocation2 + $0x10] sm:$0xff]
      %v744 = vld [vmem:[#allocation2 + $0x18] sm:$0xff]
      %v745 = vld [vmem:[#allocation2 + $0x20] sm:$0xff]
      %v746 = vld [vmem:[#allocation2 + $0x28] sm:$0xff]
      %v747 = vld [vmem:[#allocation2 + $0x30] sm:$0xff]
      %v748 = vld [vmem:[#allocation2 + $0x38] sm:$0xff]
      %v749 = vld [vmem:[#allocation2 + $0x40] sm:$0xff]
      %v750 = vld [vmem:[#allocation2 + $0x48] sm:$0xff]
      %v751 = vld [vmem:[#allocation2 + $0x50] sm:$0xff]
      %v752 = vld [vmem:[#allocation2 + $0x58] sm:$0xff]
      %v753 = vld [vmem:[#allocation2 + $0x60] sm:$0xff]
      %v754 = vld [vmem:[#allocation2 + $0x68] sm:$0xff]
      %v755 = vld [vmem:[#allocation2 + $0x70] sm:$0xff]
      %v756 = vld [vmem:[#allocation2 + $0x78] sm:$0xff]
      %v757 = vld [vmem:[#allocation2 + $0x80] sm:$0xff]
      %v758 = vld [vmem:[#allocation2 + $0x88] sm:$0xff]
      %v759 = vld [vmem:[#allocation2 + $0x90] sm:$0xff]
      %v760 = vld [vmem:[#allocation2 + $0x98] sm:$0xff]
      %v761 = vld [vmem:[#allocation2 + $0xa0] sm:$0xff]
      %v762 = vld [vmem:[#allocation2 + $0xa8] sm:$0xff]
      %v763 = vld [vmem:[#allocation2 + $0xb0] sm:$0xff]
      %v764 = vld [vmem:[#allocation2 + $0xb8] sm:$0xff]
      %v765 = vld [vmem:[#allocation2 + $0xc0] sm:$0xff]
      %v766 = vld [vmem:[#allocation2 + $0xc8] sm:$0xff]
      %v767 = vld [vmem:[#allocation2 + $0xd0] sm:$0xff]
      %v768 = vld [vmem:[#allocation2 + $0xd8] sm:$0xff]
      %v769 = vld [vmem:[#allocation2 + $0xe0] sm:$0xff]
      %v770 = vld [vmem:[#allocation2 + $0xe8] sm:$0xff]
      %v771 = vld [vmem:[#allocation2 + $0xf0] sm:$0xff]
      %v772 = vld [vmem:[#allocation2 + $0xf8] sm:$0xff]
      %v773 = vld [vmem:[#allocation2 + $0x100] sm:$0xff]
      %v774 = vld [vmem:[#allocation2 + $0x108] sm:$0xff]
      %v775 = vld [vmem:[#allocation2 + $0x110] sm:$0xff]
      %v776 = vld [vmem:[#allocation2 + $0x118] sm:$0xff]
      %v777 = vld [vmem:[#allocation2 + $0x120] sm:$0xff]
      %v778 = vld [vmem:[#allocation2 + $0x128] sm:$0xff]
      %v779 = vld [vmem:[#allocation2 + $0x130] sm:$0xff]
      %v780 = vld [vmem:[#allocation2 + $0x138] sm:$0xff]
      %817 = vrot.lane.b32.xlu0 %v741, 127
      %v818 = vpop.permute.xlu0 %817
      %819 = vrot.lane.b32.xlu0 %v742, 127
      %v820 = vpop.permute.xlu0 %819
      %821 = vrot.lane.b32.xlu0 %v743, 127
      %v822 = vpop.permute.xlu0 %821
      %823 = vrot.lane.b32.xlu0 %v744, 127
      %v824 = vpop.permute.xlu0 %823
      %825 = vrot.lane.b32.xlu0 %v745, 127
      %v826 = vpop.permute.xlu0 %825
      %827 = vrot.lane.b32.xlu0 %v746, 127
      %v828 = vpop.permute.xlu0 %827
      %829 = vrot.lane.b32.xlu0 %v747, 127
      %v830 = vpop.permute.xlu0 %829
      %831 = vrot.lane.b32.xlu0 %v748, 127
      %v832 = vpop.permute.xlu0 %831
      %833 = vrot.lane.b32.xlu0 %v749, 127
      %v834 = vpop.permute.xlu0 %833
      %835 = vrot.lane.b32.xlu0 %v751, 127
      %v836 = vpop.permute.xlu0 %835
      %837 = vrot.lane.b32.xlu0 %v752, 127
      %v838 = vpop.permute.xlu0 %837
      %839 = vrot.lane.b32.xlu0 %v753, 127
      %v840 = vpop.permute.xlu0 %839
      %841 = vrot.lane.b32.xlu0 %v754, 127
      %v842 = vpop.permute.xlu0 %841
      %843 = vrot.lane.b32.xlu0 %v755, 127
      %v844 = vpop.permute.xlu0 %843
      %845 = vrot.lane.b32.xlu0 %v756, 127
      %v846 = vpop.permute.xlu0 %845
      %847 = vrot.lane.b32.xlu0 %v757, 127
      %v848 = vpop.permute.xlu0 %847
      %849 = vrot.lane.b32.xlu0 %v758, 127
      %v850 = vpop.permute.xlu0 %849
      %851 = vrot.lane.b32.xlu0 %v759, 127
      %v852 = vpop.permute.xlu0 %851
      %853 = vrot.lane.b32.xlu0 %v761, 127
      %v854 = vpop.permute.xlu0 %853
      %855 = vrot.lane.b32.xlu0 %v762, 127
      %v856 = vpop.permute.xlu0 %855
      %857 = vrot.lane.b32.xlu0 %v763, 127
      %v858 = vpop.permute.xlu0 %857
      %859 = vrot.lane.b32.xlu0 %v764, 127
      %v860 = vpop.permute.xlu0 %859
      %861 = vrot.lane.b32.xlu0 %v765, 127
      %v862 = vpop.permute.xlu0 %861
      %863 = vrot.lane.b32.xlu0 %v766, 127
      %v864 = vpop.permute.xlu0 %863
      %865 = vrot.lane.b32.xlu0 %v767, 127
      %v866 = vpop.permute.xlu0 %865
      %867 = vrot.lane.b32.xlu0 %v768, 127
      %v868 = vpop.permute.xlu0 %867
      %869 = vrot.lane.b32.xlu0 %v769, 127
      %v870 = vpop.permute.xlu0 %869
      %871 = vrot.lane.b32.xlu0 %v771, 127
      %v872 = vpop.permute.xlu0 %871
      %873 = vrot.lane.b32.xlu0 %v772, 127
      %v874 = vpop.permute.xlu0 %873
      %875 = vrot.lane.b32.xlu0 %v773, 127
      %v876 = vpop.permute.xlu0 %875
      %877 = vrot.lane.b32.xlu0 %v774, 127
      %v878 = vpop.permute.xlu0 %877
      %879 = vrot.lane.b32.xlu0 %v775, 127
      %v880 = vpop.permute.xlu0 %879
      %881 = vrot.lane.b32.xlu0 %v776, 127
      %v882 = vpop.permute.xlu0 %881
      %883 = vrot.lane.b32.xlu0 %v777, 127
      %v884 = vpop.permute.xlu0 %883
      %885 = vrot.lane.b32.xlu0 %v778, 127
      %v886 = vpop.permute.xlu0 %885
      %887 = vrot.lane.b32.xlu0 %v779, 127
      %v888 = vpop.permute.xlu0 %887
      %v889 = vrot.slane %v818, 4
      %v890 = vrot.slane %v820, 4
      %v891 = vrot.slane %v822, 4
      %v892 = vrot.slane %v824, 4
      %v893 = vrot.slane %v826, 4
      %v894 = vrot.slane %v828, 4
      %v895 = vrot.slane %v830, 4
      %v896 = vrot.slane %v832, 4
      %v897 = vrot.slane %v834, 4
      %v898 = vrot.slane %v836, 4
      %v899 = vrot.slane %v838, 4
      %v900 = vrot.slane %v840, 4
      %v901 = vrot.slane %v842, 4
      %v902 = vrot.slane %v844, 4
      %v903 = vrot.slane %v846, 4
      %v904 = vrot.slane %v848, 4
      %v905 = vrot.slane %v850, 4
      %v906 = vrot.slane %v852, 4
      %v907 = vrot.slane %v854, 4
      %v908 = vrot.slane %v856, 4
      %v909 = vrot.slane %v858, 4
      %v910 = vrot.slane %v860, 4
      %v911 = vrot.slane %v862, 4
      %v912 = vrot.slane %v864, 4
      %v913 = vrot.slane %v866, 4
      %v914 = vrot.slane %v868, 4
      %v915 = vrot.slane %v870, 4
      %v916 = vrot.slane %v872, 4
      %v917 = vrot.slane %v874, 4
      %v918 = vrot.slane %v876, 4
      %v919 = vrot.slane %v878, 4
      %v920 = vrot.slane %v880, 4
      %v921 = vrot.slane %v882, 4
      %v922 = vrot.slane %v884, 4
      %v923 = vrot.slane %v886, 4
      %v924 = vrot.slane %v888, 4
      %v925 = vsel %vm600, %v889, %v890
      %vm926 = vcmask 1039360
      %v927 = vsel %vm926, %v818, %v925
      %v928 = vsel %vm600, %v890, %v891
      %v929 = vsel %vm926, %v820, %v928
      %v930 = vsel %vm600, %v891, %v892
      %v931 = vsel %vm926, %v822, %v930
      %v932 = vsel %vm600, %v892, %v893
      %v933 = vsel %vm926, %v824, %v932
      %v934 = vsel %vm600, %v893, %v894
      %v935 = vsel %vm926, %v826, %v934
      %v936 = vsel %vm600, %v894, %v895
      %v937 = vsel %vm926, %v828, %v936
      %v938 = vsel %vm600, %v895, %v896
      %v939 = vsel %vm926, %v830, %v938
      %v940 = vsel %vm600, %v896, %v897
      %v941 = vsel %vm926, %v832, %v940
      %v942 = vsel %vm926, %v834, %v897
      %v943 = vsel %vm600, %v898, %v899
      %v944 = vsel %vm926, %v836, %v943
      %v945 = vsel %vm600, %v899, %v900
      %v946 = vsel %vm926, %v838, %v945
      %v947 = vsel %vm600, %v900, %v901
      %v948 = vsel %vm926, %v840, %v947
      %v949 = vsel %vm600, %v901, %v902
      %v950 = vsel %vm926, %v842, %v949
      %v951 = vsel %vm600, %v902, %v903
      %v952 = vsel %vm926, %v844, %v951
      %v953 = vsel %vm600, %v903, %v904
      %v954 = vsel %vm926, %v846, %v953
      %v955 = vsel %vm600, %v904, %v905
      %v956 = vsel %vm926, %v848, %v955
      %v957 = vsel %vm600, %v905, %v906
      %v958 = vsel %vm926, %v850, %v957
      %v959 = vsel %vm926, %v852, %v906
      %v960 = vsel %vm600, %v907, %v908
      %v961 = vsel %vm926, %v854, %v960
      %v962 = vsel %vm600, %v908, %v909
      %v963 = vsel %vm926, %v856, %v962
      %v964 = vsel %vm600, %v909, %v910
      %v965 = vsel %vm926, %v858, %v964
      %v966 = vsel %vm600, %v910, %v911
      %v967 = vsel %vm926, %v860, %v966
      %v968 = vsel %vm600, %v911, %v912
      %v969 = vsel %vm926, %v862, %v968
      %v970 = vsel %vm600, %v912, %v913
      %v971 = vsel %vm926, %v864, %v970
      %v972 = vsel %vm600, %v913, %v914
      %v973 = vsel %vm926, %v866, %v972
      %v974 = vsel %vm600, %v914, %v915
      %v975 = vsel %vm926, %v868, %v974
      %v976 = vsel %vm926, %v870, %v915
      %v977 = vsel %vm600, %v916, %v917
      %v978 = vsel %vm926, %v872, %v977
      %v979 = vsel %vm600, %v917, %v918
      %v980 = vsel %vm926, %v874, %v979
      %v981 = vsel %vm600, %v918, %v919
      %v982 = vsel %vm926, %v876, %v981
      %v983 = vsel %vm600, %v919, %v920
      %v984 = vsel %vm926, %v878, %v983
      %v985 = vsel %vm600, %v920, %v921
      %v986 = vsel %vm926, %v880, %v985
      %v987 = vsel %vm600, %v921, %v922
      %v988 = vsel %vm926, %v882, %v987
      %v989 = vsel %vm600, %v922, %v923
      %v990 = vsel %vm926, %v884, %v989
      %v991 = vsel %vm600, %v923, %v924
      %v992 = vsel %vm926, %v886, %v991
      %v993 = vsel %vm926, %v888, %v924
      %1030 = vst [vmem:[#allocation3 + $0x110] sm:$0xff] %v927
      %1031 = vst [vmem:[#allocation3 + $0x118] sm:$0xff] %v929
      %1032 = vst [vmem:[#allocation3 + $0x120] sm:$0xff] %v931
      %1033 = vst [vmem:[#allocation3 + $0x128] sm:$0xff] %v933
      %1034 = vst [vmem:[#allocation3 + $0x130] sm:$0xff] %v935
      %1035 = vst [vmem:[#allocation3 + $0x138] sm:$0xff] %v937
      %1036 = vst [vmem:[#allocation3 + $0x140] sm:$0xff] %v939
      %1037 = vst [vmem:[#allocation3 + $0x148] sm:$0xff] %v941
      %1038 = vst [vmem:[#allocation3 + $0x150] sm:$0xf] %v942
      %1039 = vst [vmem:[#allocation3 + $0x154] sm:$0xff] %v944
      %1040 = vst [vmem:[#allocation3 + $0x15c] sm:$0xff] %v946
      %1041 = vst [vmem:[#allocation3 + $0x164] sm:$0xff] %v948
      %1042 = vst [vmem:[#allocation3 + $0x16c] sm:$0xff] %v950
      %1043 = vst [vmem:[#allocation3 + $0x174] sm:$0xff] %v952
      %1044 = vst [vmem:[#allocation3 + $0x17c] sm:$0xff] %v954
      %1045 = vst [vmem:[#allocation3 + $0x184] sm:$0xff] %v956
      %1046 = vst [vmem:[#allocation3 + $0x18c] sm:$0xff] %v958
      %1047 = vst [vmem:[#allocation3 + $0x194] sm:$0xf] %v959
      %1048 = vst [vmem:[#allocation3 + $0x198] sm:$0xff] %v961
      %1049 = vst [vmem:[#allocation3 + $0x1a0] sm:$0xff] %v963
      %1050 = vst [vmem:[#allocation3 + $0x1a8] sm:$0xff] %v965
      %1051 = vst [vmem:[#allocation3 + $0x1b0] sm:$0xff] %v967
      %1052 = vst [vmem:[#allocation3 + $0x1b8] sm:$0xff] %v969
      %1053 = vst [vmem:[#allocation3 + $0x1c0] sm:$0xff] %v971
      %1054 = vst [vmem:[#allocation3 + $0x1c8] sm:$0xff] %v973
      %1055 = vst [vmem:[#allocation3 + $0x1d0] sm:$0xff] %v975
      %1056 = vst [vmem:[#allocation3 + $0x1d8] sm:$0xf] %v976
      %1057 = vst [vmem:[#allocation3 + $0x1dc] sm:$0xff] %v978
      %1058 = vst [vmem:[#allocation3 + $0x1e4] sm:$0xff] %v980
      %1059 = vst [vmem:[#allocation3 + $0x1ec] sm:$0xff] %v982
      %1060 = vst [vmem:[#allocation3 + $0x1f4] sm:$0xff] %v984
      %1061 = vst [vmem:[#allocation3 + $0x1fc] sm:$0xff] %v986
      %1062 = vst [vmem:[#allocation3 + $0x204] sm:$0xff] %v988
      %1063 = vst [vmem:[#allocation3 + $0x20c] sm:$0xff] %v990
      %1064 = vst [vmem:[#allocation3 + $0x214] sm:$0xff] %v992
      %1065 = vst [vmem:[#allocation3 + $0x21c] sm:$0xf] %v993
      %1070 = vrot.lane.b32.xlu0 %v750, 127
      %v1071 = vpop.permute.xlu0 %1070
      %1072 = vrot.lane.b32.xlu0 %v760, 127
      %v1073 = vpop.permute.xlu0 %1072
      %1074 = vrot.lane.b32.xlu0 %v770, 127
      %v1075 = vpop.permute.xlu0 %1074
      %1076 = vrot.lane.b32.xlu0 %v780, 127
      %v1077 = vpop.permute.xlu0 %1076
      %v1078 = vsel %vm926, %v925, %v820
      %v1079 = vsel %vm926, %v928, %v822
      %v1080 = vsel %vm926, %v930, %v824
      %v1081 = vsel %vm926, %v932, %v826
      %v1082 = vsel %vm926, %v934, %v828
      %v1083 = vsel %vm926, %v936, %v830
      %v1084 = vsel %vm926, %v938, %v832
      %v1085 = vsel %vm926, %v940, %v834
      %v1086 = vsel %vm926, %v897, %v1071
      %v1087 = vsel %vm926, %v943, %v838
      %v1088 = vsel %vm926, %v945, %v840
      %v1089 = vsel %vm926, %v947, %v842
      %v1090 = vsel %vm926, %v949, %v844
      %v1091 = vsel %vm926, %v951, %v846
      %v1092 = vsel %vm926, %v953, %v848
      %v1093 = vsel %vm926, %v955, %v850
      %v1094 = vsel %vm926, %v957, %v852
      %v1095 = vsel %vm926, %v906, %v1073
      %v1096 = vsel %vm926, %v960, %v856
      %v1097 = vsel %vm926, %v962, %v858
      %v1098 = vsel %vm926, %v964, %v860
      %v1099 = vsel %vm926, %v966, %v862
      %v1100 = vsel %vm926, %v968, %v864
      %v1101 = vsel %vm926, %v970, %v866
      %v1102 = vsel %vm926, %v972, %v868
      %v1103 = vsel %vm926, %v974, %v870
      %v1104 = vsel %vm926, %v915, %v1075
      %v1105 = vsel %vm926, %v977, %v874
      %v1106 = vsel %vm926, %v979, %v876
      %v1107 = vsel %vm926, %v981, %v878
      %v1108 = vsel %vm926, %v983, %v880
      %v1109 = vsel %vm926, %v985, %v882
      %v1110 = vsel %vm926, %v987, %v884
      %v1111 = vsel %vm926, %v989, %v886
      %v1112 = vsel %vm926, %v991, %v888
      %v1113 = vsel %vm926, %v924, %v1077
      %1150 = vst [vmem:[#allocation3 + $0x440] sm:$0xff] %v1078
      %1151 = vst [vmem:[#allocation3 + $0x448] sm:$0xff] %v1079
      %1152 = vst [vmem:[#allocation3 + $0x450] sm:$0xff] %v1080
      %1153 = vst [vmem:[#allocation3 + $0x458] sm:$0xff] %v1081
      %1154 = vst [vmem:[#allocation3 + $0x460] sm:$0xff] %v1082
      %1155 = vst [vmem:[#allocation3 + $0x468] sm:$0xff] %v1083
      %1156 = vst [vmem:[#allocation3 + $0x470] sm:$0xff] %v1084
      %1157 = vst [vmem:[#allocation3 + $0x478] sm:$0xff] %v1085
      %1158 = vst [vmem:[#allocation3 + $0x480] sm:$0xf] %v1086
      %1159 = vst [vmem:[#allocation3 + $0x484] sm:$0xff] %v1087
      %1160 = vst [vmem:[#allocation3 + $0x48c] sm:$0xff] %v1088
      %1161 = vst [vmem:[#allocation3 + $0x494] sm:$0xff] %v1089
      %1162 = vst [vmem:[#allocation3 + $0x49c] sm:$0xff] %v1090
      %1163 = vst [vmem:[#allocation3 + $0x4a4] sm:$0xff] %v1091
      %1164 = vst [vmem:[#allocation3 + $0x4ac] sm:$0xff] %v1092
      %1165 = vst [vmem:[#allocation3 + $0x4b4] sm:$0xff] %v1093
      %1166 = vst [vmem:[#allocation3 + $0x4bc] sm:$0xff] %v1094
      %1167 = vst [vmem:[#allocation3 + $0x4c4] sm:$0xf] %v1095
      %1168 = vst [vmem:[#allocation3 + $0x4c8] sm:$0xff] %v1096
      %1169 = vst [vmem:[#allocation3 + $0x4d0] sm:$0xff] %v1097
      %1170 = vst [vmem:[#allocation3 + $0x4d8] sm:$0xff] %v1098
      %1171 = vst [vmem:[#allocation3 + $0x4e0] sm:$0xff] %v1099
      %1172 = vst [vmem:[#allocation3 + $0x4e8] sm:$0xff] %v1100
      %1173 = vst [vmem:[#allocation3 + $0x4f0] sm:$0xff] %v1101
      %1174 = vst [vmem:[#allocation3 + $0x4f8] sm:$0xff] %v1102
      %1175 = vst [vmem:[#allocation3 + $0x500] sm:$0xff] %v1103
      %1176 = vst [vmem:[#allocation3 + $0x508] sm:$0xf] %v1104
      %1177 = vst [vmem:[#allocation3 + $0x50c] sm:$0xff] %v1105
      %1178 = vst [vmem:[#allocation3 + $0x514] sm:$0xff] %v1106
      %1179 = vst [vmem:[#allocation3 + $0x51c] sm:$0xff] %v1107
      %1180 = vst [vmem:[#allocation3 + $0x524] sm:$0xff] %v1108
      %1181 = vst [vmem:[#allocation3 + $0x52c] sm:$0xff] %v1109
      %1182 = vst [vmem:[#allocation3 + $0x534] sm:$0xff] %v1110
      %1183 = vst [vmem:[#allocation3 + $0x53c] sm:$0xff] %v1111
      %1184 = vst [vmem:[#allocation3 + $0x544] sm:$0xff] %v1112
      %1185 = vst [vmem:[#allocation3 + $0x54c] sm:$0xf] %v1113
      %v1186 = vrot.slane %v1071, 4
      %v1187 = vrot.slane %v1073, 4
      %v1188 = vrot.slane %v1075, 4
      %v1189 = vrot.slane %v1077, 4
      %v1190 = vsel %vm600, %v897, %v1186
      %v1191 = vsel %vm926, %v834, %v1190
      %v1192 = vsel %vm926, %v1071, %v1186
      %v1193 = vsel %vm600, %v906, %v1187
      %v1194 = vsel %vm926, %v852, %v1193
      %v1195 = vsel %vm926, %v1073, %v1187
      %v1196 = vsel %vm600, %v915, %v1188
      %v1197 = vsel %vm926, %v870, %v1196
      %v1198 = vsel %vm926, %v1075, %v1188
      %v1199 = vsel %vm600, %v924, %v1189
      %v1200 = vsel %vm926, %v888, %v1199
      %v1201 = vsel %vm926, %v1077, %v1189
      %1210 = vst [vmem:[#allocation3 + $0x770] sm:$0xff] %v929
      %1211 = vst [vmem:[#allocation3 + $0x778] sm:$0xff] %v931
      %1212 = vst [vmem:[#allocation3 + $0x780] sm:$0xff] %v933
      %1213 = vst [vmem:[#allocation3 + $0x788] sm:$0xff] %v935
      %1214 = vst [vmem:[#allocation3 + $0x790] sm:$0xff] %v937
      %1215 = vst [vmem:[#allocation3 + $0x798] sm:$0xff] %v939
      %1216 = vst [vmem:[#allocation3 + $0x7a0] sm:$0xff] %v941
      %1217 = vst [vmem:[#allocation3 + $0x7a8] sm:$0xff] %v1191
      %1218 = vst [vmem:[#allocation3 + $0x7b0] sm:$0xf] %v1192
      %1219 = vst [vmem:[#allocation3 + $0x7b4] sm:$0xff] %v946
      %1220 = vst [vmem:[#allocation3 + $0x7bc] sm:$0xff] %v948
      %1221 = vst [vmem:[#allocation3 + $0x7c4] sm:$0xff] %v950
      %1222 = vst [vmem:[#allocation3 + $0x7cc] sm:$0xff] %v952
      %1223 = vst [vmem:[#allocation3 + $0x7d4] sm:$0xff] %v954
      %1224 = vst [vmem:[#allocation3 + $0x7dc] sm:$0xff] %v956
      %1225 = vst [vmem:[#allocation3 + $0x7e4] sm:$0xff] %v958
      %1226 = vst [vmem:[#allocation3 + $0x7ec] sm:$0xff] %v1194
      %1227 = vst [vmem:[#allocation3 + $0x7f4] sm:$0xf] %v1195
      %1228 = vst [vmem:[#allocation3 + $0x7f8] sm:$0xff] %v963
      %1229 = vst [vmem:[#allocation3 + $0x800] sm:$0xff] %v965
      %1230 = vst [vmem:[#allocation3 + $0x808] sm:$0xff] %v967
      %1231 = vst [vmem:[#allocation3 + $0x810] sm:$0xff] %v969
      %1232 = vst [vmem:[#allocation3 + $0x818] sm:$0xff] %v971
      %1233 = vst [vmem:[#allocation3 + $0x820] sm:$0xff] %v973
      %1234 = vst [vmem:[#allocation3 + $0x828] sm:$0xff] %v975
      %1235 = vst [vmem:[#allocation3 + $0x830] sm:$0xff] %v1197
      %1236 = vst [vmem:[#allocation3 + $0x838] sm:$0xf] %v1198
      %1237 = vst [vmem:[#allocation3 + $0x83c] sm:$0xff] %v980
      %1238 = vst [vmem:[#allocation3 + $0x844] sm:$0xff] %v982
      %1239 = vst [vmem:[#allocation3 + $0x84c] sm:$0xff] %v984
      %1240 = vst [vmem:[#allocation3 + $0x854] sm:$0xff] %v986
      %1241 = vst [vmem:[#allocation3 + $0x85c] sm:$0xff] %v988
      %1242 = vst [vmem:[#allocation3 + $0x864] sm:$0xff] %v990
      %1243 = vst [vmem:[#allocation3 + $0x86c] sm:$0xff] %v992
      %1244 = vst [vmem:[#allocation3 + $0x874] sm:$0xff] %v1200
      %1245 = vst [vmem:[#allocation3 + $0x87c] sm:$0xf] %v1201
      %v1246 = vld [vmem:[#allocation2] sm:$0xff]
      %v1247 = vld [vmem:[#allocation2 + $0x8] sm:$0xff]
      %v1248 = vld [vmem:[#allocation2 + $0x10] sm:$0xff]
      %v1249 = vld [vmem:[#allocation2 + $0x18] sm:$0xff]
      %v1250 = vld [vmem:[#allocation2 + $0x20] sm:$0xff]
      %v1251 = vld [vmem:[#allocation2 + $0x28] sm:$0xff]
      %v1252 = vld [vmem:[#allocation2 + $0x30] sm:$0xff]
      %v1253 = vld [vmem:[#allocation2 + $0x38] sm:$0xff]
      %v1254 = vld [vmem:[#allocation2 + $0x40] sm:$0xff]
      %v1255 = vld [vmem:[#allocation2 + $0x48] sm:$0xff]
      %v1256 = vld [vmem:[#allocation2 + $0x50] sm:$0xff]
      %v1257 = vld [vmem:[#allocation2 + $0x58] sm:$0xff]
      %v1258 = vld [vmem:[#allocation2 + $0x60] sm:$0xff]
      %v1259 = vld [vmem:[#allocation2 + $0x68] sm:$0xff]
      %v1260 = vld [vmem:[#allocation2 + $0x70] sm:$0xff]
      %v1261 = vld [vmem:[#allocation2 + $0x78] sm:$0xff]
      %v1262 = vld [vmem:[#allocation2 + $0x80] sm:$0xff]
      %v1263 = vld [vmem:[#allocation2 + $0x88] sm:$0xff]
      %v1264 = vld [vmem:[#allocation2 + $0x90] sm:$0xff]
      %v1265 = vld [vmem:[#allocation2 + $0x98] sm:$0xff]
      %v1266 = vld [vmem:[#allocation2 + $0xa0] sm:$0xff]
      %v1267 = vld [vmem:[#allocation2 + $0xa8] sm:$0xff]
      %v1268 = vld [vmem:[#allocation2 + $0xb0] sm:$0xff]
      %v1269 = vld [vmem:[#allocation2 + $0xb8] sm:$0xff]
      %v1270 = vld [vmem:[#allocation2 + $0xc0] sm:$0xff]
      %v1271 = vld [vmem:[#allocation2 + $0xc8] sm:$0xff]
      %v1272 = vld [vmem:[#allocation2 + $0xd0] sm:$0xff]
      %v1273 = vld [vmem:[#allocation2 + $0xd8] sm:$0xff]
      %v1274 = vld [vmem:[#allocation2 + $0xe0] sm:$0xff]
      %v1275 = vld [vmem:[#allocation2 + $0xe8] sm:$0xff]
      %v1276 = vld [vmem:[#allocation2 + $0xf0] sm:$0xff]
      %v1277 = vld [vmem:[#allocation2 + $0xf8] sm:$0xff]
      %v1278 = vld [vmem:[#allocation2 + $0x100] sm:$0xff]
      %v1279 = vld [vmem:[#allocation2 + $0x108] sm:$0xff]
      %v1280 = vld [vmem:[#allocation2 + $0x110] sm:$0xff]
      %v1281 = vld [vmem:[#allocation2 + $0x118] sm:$0xff]
      %v1282 = vld [vmem:[#allocation2 + $0x120] sm:$0xff]
      %v1283 = vld [vmem:[#allocation2 + $0x128] sm:$0xff]
      %v1284 = vld [vmem:[#allocation2 + $0x130] sm:$0xff]
      %v1285 = vld [vmem:[#allocation2 + $0x138] sm:$0xff]
      %1322 = vrot.lane.b32.xlu0 %v1246, 126
      %v1323 = vpop.permute.xlu0 %1322
      %1324 = vrot.lane.b32.xlu0 %v1247, 126
      %v1325 = vpop.permute.xlu0 %1324
      %1326 = vrot.lane.b32.xlu0 %v1248, 126
      %v1327 = vpop.permute.xlu0 %1326
      %1328 = vrot.lane.b32.xlu0 %v1249, 126
      %v1329 = vpop.permute.xlu0 %1328
      %1330 = vrot.lane.b32.xlu0 %v1250, 126
      %v1331 = vpop.permute.xlu0 %1330
      %1332 = vrot.lane.b32.xlu0 %v1251, 126
      %v1333 = vpop.permute.xlu0 %1332
      %1334 = vrot.lane.b32.xlu0 %v1252, 126
      %v1335 = vpop.permute.xlu0 %1334
      %1336 = vrot.lane.b32.xlu0 %v1253, 126
      %v1337 = vpop.permute.xlu0 %1336
      %1338 = vrot.lane.b32.xlu0 %v1254, 126
      %v1339 = vpop.permute.xlu0 %1338
      %1340 = vrot.lane.b32.xlu0 %v1256, 126
      %v1341 = vpop.permute.xlu0 %1340
      %1342 = vrot.lane.b32.xlu0 %v1257, 126
      %v1343 = vpop.permute.xlu0 %1342
      %1344 = vrot.lane.b32.xlu0 %v1258, 126
      %v1345 = vpop.permute.xlu0 %1344
      %1346 = vrot.lane.b32.xlu0 %v1259, 126
      %v1347 = vpop.permute.xlu0 %1346
      %1348 = vrot.lane.b32.xlu0 %v1260, 126
      %v1349 = vpop.permute.xlu0 %1348
      %1350 = vrot.lane.b32.xlu0 %v1261, 126
      %v1351 = vpop.permute.xlu0 %1350
      %1352 = vrot.lane.b32.xlu0 %v1262, 126
      %v1353 = vpop.permute.xlu0 %1352
      %1354 = vrot.lane.b32.xlu0 %v1263, 126
      %v1355 = vpop.permute.xlu0 %1354
      %1356 = vrot.lane.b32.xlu0 %v1264, 126
      %v1357 = vpop.permute.xlu0 %1356
      %1358 = vrot.lane.b32.xlu0 %v1266, 126
      %v1359 = vpop.permute.xlu0 %1358
      %1360 = vrot.lane.b32.xlu0 %v1267, 126
      %v1361 = vpop.permute.xlu0 %1360
      %1362 = vrot.lane.b32.xlu0 %v1268, 126
      %v1363 = vpop.permute.xlu0 %1362
      %1364 = vrot.lane.b32.xlu0 %v1269, 126
      %v1365 = vpop.permute.xlu0 %1364
      %1366 = vrot.lane.b32.xlu0 %v1270, 126
      %v1367 = vpop.permute.xlu0 %1366
      %1368 = vrot.lane.b32.xlu0 %v1271, 126
      %v1369 = vpop.permute.xlu0 %1368
      %1370 = vrot.lane.b32.xlu0 %v1272, 126
      %v1371 = vpop.permute.xlu0 %1370
      %1372 = vrot.lane.b32.xlu0 %v1273, 126
      %v1373 = vpop.permute.xlu0 %1372
      %1374 = vrot.lane.b32.xlu0 %v1274, 126
      %v1375 = vpop.permute.xlu0 %1374
      %1376 = vrot.lane.b32.xlu0 %v1276, 126
      %v1377 = vpop.permute.xlu0 %1376
      %1378 = vrot.lane.b32.xlu0 %v1277, 126
      %v1379 = vpop.permute.xlu0 %1378
      %1380 = vrot.lane.b32.xlu0 %v1278, 126
      %v1381 = vpop.permute.xlu0 %1380
      %1382 = vrot.lane.b32.xlu0 %v1279, 126
      %v1383 = vpop.permute.xlu0 %1382
      %1384 = vrot.lane.b32.xlu0 %v1280, 126
      %v1385 = vpop.permute.xlu0 %1384
      %1386 = vrot.lane.b32.xlu0 %v1281, 126
      %v1387 = vpop.permute.xlu0 %1386
      %1388 = vrot.lane.b32.xlu0 %v1282, 126
      %v1389 = vpop.permute.xlu0 %1388
      %1390 = vrot.lane.b32.xlu0 %v1283, 126
      %v1391 = vpop.permute.xlu0 %1390
      %1392 = vrot.lane.b32.xlu0 %v1284, 126
      %v1393 = vpop.permute.xlu0 %1392
      %v1394 = vrot.slane %v1323, 4
      %v1395 = vrot.slane %v1325, 4
      %v1396 = vrot.slane %v1327, 4
      %v1397 = vrot.slane %v1329, 4
      %v1398 = vrot.slane %v1331, 4
      %v1399 = vrot.slane %v1333, 4
      %v1400 = vrot.slane %v1335, 4
      %v1401 = vrot.slane %v1337, 4
      %v1402 = vrot.slane %v1339, 4
      %v1403 = vrot.slane %v1341, 4
      %v1404 = vrot.slane %v1343, 4
      %v1405 = vrot.slane %v1345, 4
      %v1406 = vrot.slane %v1347, 4
      %v1407 = vrot.slane %v1349, 4
      %v1408 = vrot.slane %v1351, 4
      %v1409 = vrot.slane %v1353, 4
      %v1410 = vrot.slane %v1355, 4
      %v1411 = vrot.slane %v1357, 4
      %v1412 = vrot.slane %v1359, 4
      %v1413 = vrot.slane %v1361, 4
      %v1414 = vrot.slane %v1363, 4
      %v1415 = vrot.slane %v1365, 4
      %v1416 = vrot.slane %v1367, 4
      %v1417 = vrot.slane %v1369, 4
      %v1418 = vrot.slane %v1371, 4
      %v1419 = vrot.slane %v1373, 4
      %v1420 = vrot.slane %v1375, 4
      %v1421 = vrot.slane %v1377, 4
      %v1422 = vrot.slane %v1379, 4
      %v1423 = vrot.slane %v1381, 4
      %v1424 = vrot.slane %v1383, 4
      %v1425 = vrot.slane %v1385, 4
      %v1426 = vrot.slane %v1387, 4
      %v1427 = vrot.slane %v1389, 4
      %v1428 = vrot.slane %v1391, 4
      %v1429 = vrot.slane %v1393, 4
      %v1430 = vsel %vm600, %v1394, %v1395
      %vm1431 = vcmask 1031168
      %v1432 = vsel %vm1431, %v1323, %v1430
      %v1433 = vsel %vm600, %v1395, %v1396
      %v1434 = vsel %vm1431, %v1325, %v1433
      %v1435 = vsel %vm600, %v1396, %v1397
      %v1436 = vsel %vm1431, %v1327, %v1435
      %v1437 = vsel %vm600, %v1397, %v1398
      %v1438 = vsel %vm1431, %v1329, %v1437
      %v1439 = vsel %vm600, %v1398, %v1399
      %v1440 = vsel %vm1431, %v1331, %v1439
      %v1441 = vsel %vm600, %v1399, %v1400
      %v1442 = vsel %vm1431, %v1333, %v1441
      %v1443 = vsel %vm600, %v1400, %v1401
      %v1444 = vsel %vm1431, %v1335, %v1443
      %v1445 = vsel %vm600, %v1401, %v1402
      %v1446 = vsel %vm1431, %v1337, %v1445
      %v1447 = vsel %vm1431, %v1339, %v1402
      %v1448 = vsel %vm600, %v1403, %v1404
      %v1449 = vsel %vm1431, %v1341, %v1448
      %v1450 = vsel %vm600, %v1404, %v1405
      %v1451 = vsel %vm1431, %v1343, %v1450
      %v1452 = vsel %vm600, %v1405, %v1406
      %v1453 = vsel %vm1431, %v1345, %v1452
      %v1454 = vsel %vm600, %v1406, %v1407
      %v1455 = vsel %vm1431, %v1347, %v1454
      %v1456 = vsel %vm600, %v1407, %v1408
      %v1457 = vsel %vm1431, %v1349, %v1456
      %v1458 = vsel %vm600, %v1408, %v1409
      %v1459 = vsel %vm1431, %v1351, %v1458
      %v1460 = vsel %vm600, %v1409, %v1410
      %v1461 = vsel %vm1431, %v1353, %v1460
      %v1462 = vsel %vm600, %v1410, %v1411
      %v1463 = vsel %vm1431, %v1355, %v1462
      %v1464 = vsel %vm1431, %v1357, %v1411
      %v1465 = vsel %vm600, %v1412, %v1413
      %v1466 = vsel %vm1431, %v1359, %v1465
      %v1467 = vsel %vm600, %v1413, %v1414
      %v1468 = vsel %vm1431, %v1361, %v1467
      %v1469 = vsel %vm600, %v1414, %v1415
      %v1470 = vsel %vm1431, %v1363, %v1469
      %v1471 = vsel %vm600, %v1415, %v1416
      %v1472 = vsel %vm1431, %v1365, %v1471
      %v1473 = vsel %vm600, %v1416, %v1417
      %v1474 = vsel %vm1431, %v1367, %v1473
      %v1475 = vsel %vm600, %v1417, %v1418
      %v1476 = vsel %vm1431, %v1369, %v1475
      %v1477 = vsel %vm600, %v1418, %v1419
      %v1478 = vsel %vm1431, %v1371, %v1477
      %v1479 = vsel %vm600, %v1419, %v1420
      %v1480 = vsel %vm1431, %v1373, %v1479
      %v1481 = vsel %vm1431, %v1375, %v1420
      %v1482 = vsel %vm600, %v1421, %v1422
      %v1483 = vsel %vm1431, %v1377, %v1482
      %v1484 = vsel %vm600, %v1422, %v1423
      %v1485 = vsel %vm1431, %v1379, %v1484
      %v1486 = vsel %vm600, %v1423, %v1424
      %v1487 = vsel %vm1431, %v1381, %v1486
      %v1488 = vsel %vm600, %v1424, %v1425
      %v1489 = vsel %vm1431, %v1383, %v1488
      %v1490 = vsel %vm600, %v1425, %v1426
      %v1491 = vsel %vm1431, %v1385, %v1490
      %v1492 = vsel %vm600, %v1426, %v1427
      %v1493 = vsel %vm1431, %v1387, %v1492
      %v1494 = vsel %vm600, %v1427, %v1428
      %v1495 = vsel %vm1431, %v1389, %v1494
      %v1496 = vsel %vm600, %v1428, %v1429
      %v1497 = vsel %vm1431, %v1391, %v1496
      %v1498 = vsel %vm1431, %v1393, %v1429
      %1535 = vst [vmem:[#allocation3 + $0x220] sm:$0xff] %v1432
      %1536 = vst [vmem:[#allocation3 + $0x228] sm:$0xff] %v1434
      %1537 = vst [vmem:[#allocation3 + $0x230] sm:$0xff] %v1436
      %1538 = vst [vmem:[#allocation3 + $0x238] sm:$0xff] %v1438
      %1539 = vst [vmem:[#allocation3 + $0x240] sm:$0xff] %v1440
      %1540 = vst [vmem:[#allocation3 + $0x248] sm:$0xff] %v1442
      %1541 = vst [vmem:[#allocation3 + $0x250] sm:$0xff] %v1444
      %1542 = vst [vmem:[#allocation3 + $0x258] sm:$0xff] %v1446
      %1543 = vst [vmem:[#allocation3 + $0x260] sm:$0xf] %v1447
      %1544 = vst [vmem:[#allocation3 + $0x264] sm:$0xff] %v1449
      %1545 = vst [vmem:[#allocation3 + $0x26c] sm:$0xff] %v1451
      %1546 = vst [vmem:[#allocation3 + $0x274] sm:$0xff] %v1453
      %1547 = vst [vmem:[#allocation3 + $0x27c] sm:$0xff] %v1455
      %1548 = vst [vmem:[#allocation3 + $0x284] sm:$0xff] %v1457
      %1549 = vst [vmem:[#allocation3 + $0x28c] sm:$0xff] %v1459
      %1550 = vst [vmem:[#allocation3 + $0x294] sm:$0xff] %v1461
      %1551 = vst [vmem:[#allocation3 + $0x29c] sm:$0xff] %v1463
      %1552 = vst [vmem:[#allocation3 + $0x2a4] sm:$0xf] %v1464
      %1553 = vst [vmem:[#allocation3 + $0x2a8] sm:$0xff] %v1466
      %1554 = vst [vmem:[#allocation3 + $0x2b0] sm:$0xff] %v1468
      %1555 = vst [vmem:[#allocation3 + $0x2b8] sm:$0xff] %v1470
      %1556 = vst [vmem:[#allocation3 + $0x2c0] sm:$0xff] %v1472
      %1557 = vst [vmem:[#allocation3 + $0x2c8] sm:$0xff] %v1474
      %1558 = vst [vmem:[#allocation3 + $0x2d0] sm:$0xff] %v1476
      %1559 = vst [vmem:[#allocation3 + $0x2d8] sm:$0xff] %v1478
      %1560 = vst [vmem:[#allocation3 + $0x2e0] sm:$0xff] %v1480
      %1561 = vst [vmem:[#allocation3 + $0x2e8] sm:$0xf] %v1481
      %1562 = vst [vmem:[#allocation3 + $0x2ec] sm:$0xff] %v1483
      %1563 = vst [vmem:[#allocation3 + $0x2f4] sm:$0xff] %v1485
      %1564 = vst [vmem:[#allocation3 + $0x2fc] sm:$0xff] %v1487
      %1565 = vst [vmem:[#allocation3 + $0x304] sm:$0xff] %v1489
      %1566 = vst [vmem:[#allocation3 + $0x30c] sm:$0xff] %v1491
      %1567 = vst [vmem:[#allocation3 + $0x314] sm:$0xff] %v1493
      %1568 = vst [vmem:[#allocation3 + $0x31c] sm:$0xff] %v1495
      %1569 = vst [vmem:[#allocation3 + $0x324] sm:$0xff] %v1497
      %1570 = vst [vmem:[#allocation3 + $0x32c] sm:$0xf] %v1498
      %1575 = vrot.lane.b32.xlu0 %v1255, 126
      %v1576 = vpop.permute.xlu0 %1575
      %1577 = vrot.lane.b32.xlu0 %v1265, 126
      %v1578 = vpop.permute.xlu0 %1577
      %1579 = vrot.lane.b32.xlu0 %v1275, 126
      %v1580 = vpop.permute.xlu0 %1579
      %1581 = vrot.lane.b32.xlu0 %v1285, 126
      %v1582 = vpop.permute.xlu0 %1581
      %v1583 = vsel %vm1431, %v1430, %v1325
      %v1584 = vsel %vm1431, %v1433, %v1327
      %v1585 = vsel %vm1431, %v1435, %v1329
      %v1586 = vsel %vm1431, %v1437, %v1331
      %v1587 = vsel %vm1431, %v1439, %v1333
      %v1588 = vsel %vm1431, %v1441, %v1335
      %v1589 = vsel %vm1431, %v1443, %v1337
      %v1590 = vsel %vm1431, %v1445, %v1339
      %v1591 = vsel %vm1431, %v1402, %v1576
      %v1592 = vsel %vm1431, %v1448, %v1343
      %v1593 = vsel %vm1431, %v1450, %v1345
      %v1594 = vsel %vm1431, %v1452, %v1347
      %v1595 = vsel %vm1431, %v1454, %v1349
      %v1596 = vsel %vm1431, %v1456, %v1351
      %v1597 = vsel %vm1431, %v1458, %v1353
      %v1598 = vsel %vm1431, %v1460, %v1355
      %v1599 = vsel %vm1431, %v1462, %v1357
      %v1600 = vsel %vm1431, %v1411, %v1578
      %v1601 = vsel %vm1431, %v1465, %v1361
      %v1602 = vsel %vm1431, %v1467, %v1363
      %v1603 = vsel %vm1431, %v1469, %v1365
      %v1604 = vsel %vm1431, %v1471, %v1367
      %v1605 = vsel %vm1431, %v1473, %v1369
      %v1606 = vsel %vm1431, %v1475, %v1371
      %v1607 = vsel %vm1431, %v1477, %v1373
      %v1608 = vsel %vm1431, %v1479, %v1375
      %v1609 = vsel %vm1431, %v1420, %v1580
      %v1610 = vsel %vm1431, %v1482, %v1379
      %v1611 = vsel %vm1431, %v1484, %v1381
      %v1612 = vsel %vm1431, %v1486, %v1383
      %v1613 = vsel %vm1431, %v1488, %v1385
      %v1614 = vsel %vm1431, %v1490, %v1387
      %v1615 = vsel %vm1431, %v1492, %v1389
      %v1616 = vsel %vm1431, %v1494, %v1391
      %v1617 = vsel %vm1431, %v1496, %v1393
      %v1618 = vsel %vm1431, %v1429, %v1582
      %1655 = vst [vmem:[#allocation3 + $0x550] sm:$0xff] %v1583
      %1656 = vst [vmem:[#allocation3 + $0x558] sm:$0xff] %v1584
      %1657 = vst [vmem:[#allocation3 + $0x560] sm:$0xff] %v1585
      %1658 = vst [vmem:[#allocation3 + $0x568] sm:$0xff] %v1586
      %1659 = vst [vmem:[#allocation3 + $0x570] sm:$0xff] %v1587
      %1660 = vst [vmem:[#allocation3 + $0x578] sm:$0xff] %v1588
      %1661 = vst [vmem:[#allocation3 + $0x580] sm:$0xff] %v1589
      %1662 = vst [vmem:[#allocation3 + $0x588] sm:$0xff] %v1590
      %1663 = vst [vmem:[#allocation3 + $0x590] sm:$0xf] %v1591
      %1664 = vst [vmem:[#allocation3 + $0x594] sm:$0xff] %v1592
      %1665 = vst [vmem:[#allocation3 + $0x59c] sm:$0xff] %v1593
      %1666 = vst [vmem:[#allocation3 + $0x5a4] sm:$0xff] %v1594
      %1667 = vst [vmem:[#allocation3 + $0x5ac] sm:$0xff] %v1595
      %1668 = vst [vmem:[#allocation3 + $0x5b4] sm:$0xff] %v1596
      %1669 = vst [vmem:[#allocation3 + $0x5bc] sm:$0xff] %v1597
      %1670 = vst [vmem:[#allocation3 + $0x5c4] sm:$0xff] %v1598
      %1671 = vst [vmem:[#allocation3 + $0x5cc] sm:$0xff] %v1599
      %1672 = vst [vmem:[#allocation3 + $0x5d4] sm:$0xf] %v1600
      %1673 = vst [vmem:[#allocation3 + $0x5d8] sm:$0xff] %v1601
      %1674 = vst [vmem:[#allocation3 + $0x5e0] sm:$0xff] %v1602
      %1675 = vst [vmem:[#allocation3 + $0x5e8] sm:$0xff] %v1603
      %1676 = vst [vmem:[#allocation3 + $0x5f0] sm:$0xff] %v1604
      %1677 = vst [vmem:[#allocation3 + $0x5f8] sm:$0xff] %v1605
      %1678 = vst [vmem:[#allocation3 + $0x600] sm:$0xff] %v1606
      %1679 = vst [vmem:[#allocation3 + $0x608] sm:$0xff] %v1607
      %1680 = vst [vmem:[#allocation3 + $0x610] sm:$0xff] %v1608
      %1681 = vst [vmem:[#allocation3 + $0x618] sm:$0xf] %v1609
      %1682 = vst [vmem:[#allocation3 + $0x61c] sm:$0xff] %v1610
      %1683 = vst [vmem:[#allocation3 + $0x624] sm:$0xff] %v1611
      %1684 = vst [vmem:[#allocation3 + $0x62c] sm:$0xff] %v1612
      %1685 = vst [vmem:[#allocation3 + $0x634] sm:$0xff] %v1613
      %1686 = vst [vmem:[#allocation3 + $0x63c] sm:$0xff] %v1614
      %1687 = vst [vmem:[#allocation3 + $0x644] sm:$0xff] %v1615
      %1688 = vst [vmem:[#allocation3 + $0x64c] sm:$0xff] %v1616
      %1689 = vst [vmem:[#allocation3 + $0x654] sm:$0xff] %v1617
      %1690 = vst [vmem:[#allocation3 + $0x65c] sm:$0xf] %v1618
      %v1691 = vrot.slane %v1576, 4
      %v1692 = vrot.slane %v1578, 4
      %v1693 = vrot.slane %v1580, 4
      %v1694 = vrot.slane %v1582, 4
      %v1695 = vsel %vm600, %v1402, %v1691
      %v1696 = vsel %vm1431, %v1339, %v1695
      %v1697 = vsel %vm1431, %v1576, %v1691
      %v1698 = vsel %vm600, %v1411, %v1692
      %v1699 = vsel %vm1431, %v1357, %v1698
      %v1700 = vsel %vm1431, %v1578, %v1692
      %v1701 = vsel %vm600, %v1420, %v1693
      %v1702 = vsel %vm1431, %v1375, %v1701
      %v1703 = vsel %vm1431, %v1580, %v1693
      %v1704 = vsel %vm600, %v1429, %v1694
      %v1705 = vsel %vm1431, %v1393, %v1704
      %v1706 = vsel %vm1431, %v1582, %v1694
      %1715 = vst [vmem:[#allocation3 + $0x880] sm:$0xff] %v1434
      %1716 = vst [vmem:[#allocation3 + $0x888] sm:$0xff] %v1436
      %1717 = vst [vmem:[#allocation3 + $0x890] sm:$0xff] %v1438
      %1718 = vst [vmem:[#allocation3 + $0x898] sm:$0xff] %v1440
      %1719 = vst [vmem:[#allocation3 + $0x8a0] sm:$0xff] %v1442
      %1720 = vst [vmem:[#allocation3 + $0x8a8] sm:$0xff] %v1444
      %1721 = vst [vmem:[#allocation3 + $0x8b0] sm:$0xff] %v1446
      %1722 = vst [vmem:[#allocation3 + $0x8b8] sm:$0xff] %v1696
      %1723 = vst [vmem:[#allocation3 + $0x8c0] sm:$0xf] %v1697
      %1724 = vst [vmem:[#allocation3 + $0x8c4] sm:$0xff] %v1451
      %1725 = vst [vmem:[#allocation3 + $0x8cc] sm:$0xff] %v1453
      %1726 = vst [vmem:[#allocation3 + $0x8d4] sm:$0xff] %v1455
      %1727 = vst [vmem:[#allocation3 + $0x8dc] sm:$0xff] %v1457
      %1728 = vst [vmem:[#allocation3 + $0x8e4] sm:$0xff] %v1459
      %1729 = vst [vmem:[#allocation3 + $0x8ec] sm:$0xff] %v1461
      %1730 = vst [vmem:[#allocation3 + $0x8f4] sm:$0xff] %v1463
      %1731 = vst [vmem:[#allocation3 + $0x8fc] sm:$0xff] %v1699
      %1732 = vst [vmem:[#allocation3 + $0x904] sm:$0xf] %v1700
      %1733 = vst [vmem:[#allocation3 + $0x908] sm:$0xff] %v1468
      %1734 = vst [vmem:[#allocation3 + $0x910] sm:$0xff] %v1470
      %1735 = vst [vmem:[#allocation3 + $0x918] sm:$0xff] %v1472
      %1736 = vst [vmem:[#allocation3 + $0x920] sm:$0xff] %v1474
      %1737 = vst [vmem:[#allocation3 + $0x928] sm:$0xff] %v1476
      %1738 = vst [vmem:[#allocation3 + $0x930] sm:$0xff] %v1478
      %1739 = vst [vmem:[#allocation3 + $0x938] sm:$0xff] %v1480
      %1740 = vst [vmem:[#allocation3 + $0x940] sm:$0xff] %v1702
      %1741 = vst [vmem:[#allocation3 + $0x948] sm:$0xf] %v1703
      %1742 = vst [vmem:[#allocation3 + $0x94c] sm:$0xff] %v1485
      %1743 = vst [vmem:[#allocation3 + $0x954] sm:$0xff] %v1487
      %1744 = vst [vmem:[#allocation3 + $0x95c] sm:$0xff] %v1489
      %1745 = vst [vmem:[#allocation3 + $0x964] sm:$0xff] %v1491
      %1746 = vst [vmem:[#allocation3 + $0x96c] sm:$0xff] %v1493
      %1747 = vst [vmem:[#allocation3 + $0x974] sm:$0xff] %v1495
      %1748 = vst [vmem:[#allocation3 + $0x97c] sm:$0xff] %v1497
      %1749 = vst [vmem:[#allocation3 + $0x984] sm:$0xff] %v1705
      %1750 = vst [vmem:[#allocation3 + $0x98c] sm:$0xf] %v1706
      %v1751 = vld [vmem:[%s1] sm:$0xff]
      %v1752 = vld [vmem:[%s1 + $0x8] sm:$0xf]
      %v1753 = vld [vmem:[%s1 + $0xc] sm:$0xff]
      %v1754 = vld [vmem:[%s1 + $0x14] sm:$0xf]
      %v1755 = vld [vmem:[#allocation3] sm:$0xff]
      %v1756 = vld [vmem:[#allocation3 + $0x8] sm:$0xff]
      %v1757 = vld [vmem:[#allocation3 + $0x10] sm:$0xff]
      %v1758 = vld [vmem:[#allocation3 + $0x18] sm:$0xff]
      %v1759 = vld [vmem:[#allocation3 + $0x20] sm:$0xff]
      %v1760 = vld [vmem:[#allocation3 + $0x28] sm:$0xff]
      %v1761 = vld [vmem:[#allocation3 + $0x30] sm:$0xff]
      %v1762 = vld [vmem:[#allocation3 + $0x38] sm:$0xff]
      %v1763 = vld [vmem:[#allocation3 + $0x40] sm:$0xf]
      %v1764 = vld [vmem:[#allocation3 + $0x44] sm:$0xff]
      %v1765 = vld [vmem:[#allocation3 + $0x4c] sm:$0xff]
      %v1766 = vld [vmem:[#allocation3 + $0x54] sm:$0xff]
      %v1767 = vld [vmem:[#allocation3 + $0x5c] sm:$0xff]
      %v1768 = vld [vmem:[#allocation3 + $0x64] sm:$0xff]
      %v1769 = vld [vmem:[#allocation3 + $0x6c] sm:$0xff]
      %v1770 = vld [vmem:[#allocation3 + $0x74] sm:$0xff]
      %v1771 = vld [vmem:[#allocation3 + $0x7c] sm:$0xff]
      %v1772 = vld [vmem:[#allocation3 + $0x84] sm:$0xf]
      %v1773 = vld [vmem:[#allocation3 + $0x88] sm:$0xff]
      %v1774 = vld [vmem:[#allocation3 + $0x90] sm:$0xff]
      %v1775 = vld [vmem:[#allocation3 + $0x98] sm:$0xff]
      %v1776 = vld [vmem:[#allocation3 + $0xa0] sm:$0xff]
      %v1777 = vld [vmem:[#allocation3 + $0xa8] sm:$0xff]
      %v1778 = vld [vmem:[#allocation3 + $0xb0] sm:$0xff]
      %v1779 = vld [vmem:[#allocation3 + $0xb8] sm:$0xff]
      %v1780 = vld [vmem:[#allocation3 + $0xc0] sm:$0xff]
      %v1781 = vld [vmem:[#allocation3 + $0xc8] sm:$0xf]
      %v1782 = vld [vmem:[#allocation3 + $0xcc] sm:$0xff]
      %v1783 = vld [vmem:[#allocation3 + $0xd4] sm:$0xff]
      %v1784 = vld [vmem:[#allocation3 + $0xdc] sm:$0xff]
      %v1785 = vld [vmem:[#allocation3 + $0xe4] sm:$0xff]
      %v1786 = vld [vmem:[#allocation3 + $0xec] sm:$0xff]
      %v1787 = vld [vmem:[#allocation3 + $0xf4] sm:$0xff]
      %v1788 = vld [vmem:[#allocation3 + $0xfc] sm:$0xff]
      %v1789 = vld [vmem:[#allocation3 + $0x104] sm:$0xff]
      %v1790 = vld [vmem:[#allocation3 + $0x10c] sm:$0xf]
      %v1791 = vld [vmem:[#allocation3 + $0x110] sm:$0xff]
      %v1792 = vld [vmem:[#allocation3 + $0x118] sm:$0xff]
      %v1793 = vld [vmem:[#allocation3 + $0x120] sm:$0xff]
      %v1794 = vld [vmem:[#allocation3 + $0x128] sm:$0xff]
      %v1795 = vld [vmem:[#allocation3 + $0x130] sm:$0xff]
      %v1796 = vld [vmem:[#allocation3 + $0x138] sm:$0xff]
      %v1797 = vld [vmem:[#allocation3 + $0x140] sm:$0xff]
      %v1798 = vld [vmem:[#allocation3 + $0x148] sm:$0xff]
      %v1799 = vld [vmem:[#allocation3 + $0x150] sm:$0xf]
      %v1800 = vld [vmem:[#allocation3 + $0x154] sm:$0xff]
      %v1801 = vld [vmem:[#allocation3 + $0x15c] sm:$0xff]
      %v1802 = vld [vmem:[#allocation3 + $0x164] sm:$0xff]
      %v1803 = vld [vmem:[#allocation3 + $0x16c] sm:$0xff]
      %v1804 = vld [vmem:[#allocation3 + $0x174] sm:$0xff]
      %v1805 = vld [vmem:[#allocation3 + $0x17c] sm:$0xff]
      %v1806 = vld [vmem:[#allocation3 + $0x184] sm:$0xff]
      %v1807 = vld [vmem:[#allocation3 + $0x18c] sm:$0xff]
      %v1808 = vld [vmem:[#allocation3 + $0x194] sm:$0xf]
      %v1809 = vld [vmem:[#allocation3 + $0x198] sm:$0xff]
      %v1810 = vld [vmem:[#allocation3 + $0x1a0] sm:$0xff]
      %v1811 = vld [vmem:[#allocation3 + $0x1a8] sm:$0xff]
      %v1812 = vld [vmem:[#allocation3 + $0x1b0] sm:$0xff]
      %v1813 = vld [vmem:[#allocation3 + $0x1b8] sm:$0xff]
      %v1814 = vld [vmem:[#allocation3 + $0x1c0] sm:$0xff]
      %v1815 = vld [vmem:[#allocation3 + $0x1c8] sm:$0xff]
      %v1816 = vld [vmem:[#allocation3 + $0x1d0] sm:$0xff]
      %v1817 = vld [vmem:[#allocation3 + $0x1d8] sm:$0xf]
      %v1818 = vld [vmem:[#allocation3 + $0x1dc] sm:$0xff]
      %v1819 = vld [vmem:[#allocation3 + $0x1e4] sm:$0xff]
      %v1820 = vld [vmem:[#allocation3 + $0x1ec] sm:$0xff]
      %v1821 = vld [vmem:[#allocation3 + $0x1f4] sm:$0xff]
      %v1822 = vld [vmem:[#allocation3 + $0x1fc] sm:$0xff]
      %v1823 = vld [vmem:[#allocation3 + $0x204] sm:$0xff]
      %v1824 = vld [vmem:[#allocation3 + $0x20c] sm:$0xff]
      %v1825 = vld [vmem:[#allocation3 + $0x214] sm:$0xff]
      %v1826 = vld [vmem:[#allocation3 + $0x21c] sm:$0xf]
      %v1827 = vld [vmem:[#allocation3 + $0x220] sm:$0xff]
      %v1828 = vld [vmem:[#allocation3 + $0x228] sm:$0xff]
      %v1829 = vld [vmem:[#allocation3 + $0x230] sm:$0xff]
      %v1830 = vld [vmem:[#allocation3 + $0x238] sm:$0xff]
      %v1831 = vld [vmem:[#allocation3 + $0x240] sm:$0xff]
      %v1832 = vld [vmem:[#allocation3 + $0x248] sm:$0xff]
      %v1833 = vld [vmem:[#allocation3 + $0x250] sm:$0xff]
      %v1834 = vld [vmem:[#allocation3 + $0x258] sm:$0xff]
      %v1835 = vld [vmem:[#allocation3 + $0x260] sm:$0xf]
      %v1836 = vld [vmem:[#allocation3 + $0x264] sm:$0xff]
      %v1837 = vld [vmem:[#allocation3 + $0x26c] sm:$0xff]
      %v1838 = vld [vmem:[#allocation3 + $0x274] sm:$0xff]
      %v1839 = vld [vmem:[#allocation3 + $0x27c] sm:$0xff]
      %v1840 = vld [vmem:[#allocation3 + $0x284] sm:$0xff]
      %v1841 = vld [vmem:[#allocation3 + $0x28c] sm:$0xff]
      %v1842 = vld [vmem:[#allocation3 + $0x294] sm:$0xff]
      %v1843 = vld [vmem:[#allocation3 + $0x29c] sm:$0xff]
      %v1844 = vld [vmem:[#allocation3 + $0x2a4] sm:$0xf]
      %v1845 = vld [vmem:[#allocation3 + $0x2a8] sm:$0xff]
      %v1846 = vld [vmem:[#allocation3 + $0x2b0] sm:$0xff]
      %v1847 = vld [vmem:[#allocation3 + $0x2b8] sm:$0xff]
      %v1848 = vld [vmem:[#allocation3 + $0x2c0] sm:$0xff]
      %v1849 = vld [vmem:[#allocation3 + $0x2c8] sm:$0xff]
      %v1850 = vld [vmem:[#allocation3 + $0x2d0] sm:$0xff]
      %v1851 = vld [vmem:[#allocation3 + $0x2d8] sm:$0xff]
      %v1852 = vld [vmem:[#allocation3 + $0x2e0] sm:$0xff]
      %v1853 = vld [vmem:[#allocation3 + $0x2e8] sm:$0xf]
      %v1854 = vld [vmem:[#allocation3 + $0x2ec] sm:$0xff]
      %v1855 = vld [vmem:[#allocation3 + $0x2f4] sm:$0xff]
      %v1856 = vld [vmem:[#allocation3 + $0x2fc] sm:$0xff]
      %v1857 = vld [vmem:[#allocation3 + $0x304] sm:$0xff]
      %v1858 = vld [vmem:[#allocation3 + $0x30c] sm:$0xff]
      %v1859 = vld [vmem:[#allocation3 + $0x314] sm:$0xff]
      %v1860 = vld [vmem:[#allocation3 + $0x31c] sm:$0xff]
      %v1861 = vld [vmem:[#allocation3 + $0x324] sm:$0xff]
      %v1862 = vld [vmem:[#allocation3 + $0x32c] sm:$0xf]
      %v1863 = vld [vmem:[#allocation3 + $0x330] sm:$0xff]
      %v1864 = vld [vmem:[#allocation3 + $0x338] sm:$0xff]
      %v1865 = vld [vmem:[#allocation3 + $0x340] sm:$0xff]
      %v1866 = vld [vmem:[#allocation3 + $0x348] sm:$0xff]
      %v1867 = vld [vmem:[#allocation3 + $0x350] sm:$0xff]
      %v1868 = vld [vmem:[#allocation3 + $0x358] sm:$0xff]
      %v1869 = vld [vmem:[#allocation3 + $0x360] sm:$0xff]
      %v1870 = vld [vmem:[#allocation3 + $0x368] sm:$0xff]
      %v1871 = vld [vmem:[#allocation3 + $0x370] sm:$0xf]
      %v1872 = vld [vmem:[#allocation3 + $0x374] sm:$0xff]
      %v1873 = vld [vmem:[#allocation3 + $0x37c] sm:$0xff]
      %v1874 = vld [vmem:[#allocation3 + $0x384] sm:$0xff]
      %v1875 = vld [vmem:[#allocation3 + $0x38c] sm:$0xff]
      %v1876 = vld [vmem:[#allocation3 + $0x394] sm:$0xff]
      %v1877 = vld [vmem:[#allocation3 + $0x39c] sm:$0xff]
      %v1878 = vld [vmem:[#allocation3 + $0x3a4] sm:$0xff]
      %v1879 = vld [vmem:[#allocation3 + $0x3ac] sm:$0xff]
      %v1880 = vld [vmem:[#allocation3 + $0x3b4] sm:$0xf]
      %v1881 = vld [vmem:[#allocation3 + $0x3b8] sm:$0xff]
      %v1882 = vld [vmem:[#allocation3 + $0x3c0] sm:$0xff]
      %v1883 = vld [vmem:[#allocation3 + $0x3c8] sm:$0xff]
      %v1884 = vld [vmem:[#allocation3 + $0x3d0] sm:$0xff]
      %v1885 = vld [vmem:[#allocation3 + $0x3d8] sm:$0xff]
      %v1886 = vld [vmem:[#allocation3 + $0x3e0] sm:$0xff]
      %v1887 = vld [vmem:[#allocation3 + $0x3e8] sm:$0xff]
      %v1888 = vld [vmem:[#allocation3 + $0x3f0] sm:$0xff]
      %v1889 = vld [vmem:[#allocation3 + $0x3f8] sm:$0xf]
      %v1890 = vld [vmem:[#allocation3 + $0x3fc] sm:$0xff]
      %v1891 = vld [vmem:[#allocation3 + $0x404] sm:$0xff]
      %v1892 = vld [vmem:[#allocation3 + $0x40c] sm:$0xff]
      %v1893 = vld [vmem:[#allocation3 + $0x414] sm:$0xff]
      %v1894 = vld [vmem:[#allocation3 + $0x41c] sm:$0xff]
      %v1895 = vld [vmem:[#allocation3 + $0x424] sm:$0xff]
      %v1896 = vld [vmem:[#allocation3 + $0x42c] sm:$0xff]
      %v1897 = vld [vmem:[#allocation3 + $0x434] sm:$0xff]
      %v1898 = vld [vmem:[#allocation3 + $0x43c] sm:$0xf]
      %v1899 = vld [vmem:[#allocation3 + $0x440] sm:$0xff]
      %v1900 = vld [vmem:[#allocation3 + $0x448] sm:$0xff]
      %v1901 = vld [vmem:[#allocation3 + $0x450] sm:$0xff]
      %v1902 = vld [vmem:[#allocation3 + $0x458] sm:$0xff]
      %v1903 = vld [vmem:[#allocation3 + $0x460] sm:$0xff]
      %v1904 = vld [vmem:[#allocation3 + $0x468] sm:$0xff]
      %v1905 = vld [vmem:[#allocation3 + $0x470] sm:$0xff]
      %v1906 = vld [vmem:[#allocation3 + $0x478] sm:$0xff]
      %v1907 = vld [vmem:[#allocation3 + $0x480] sm:$0xf]
      %v1908 = vld [vmem:[#allocation3 + $0x484] sm:$0xff]
      %v1909 = vld [vmem:[#allocation3 + $0x48c] sm:$0xff]
      %v1910 = vld [vmem:[#allocation3 + $0x494] sm:$0xff]
      %v1911 = vld [vmem:[#allocation3 + $0x49c] sm:$0xff]
      %v1912 = vld [vmem:[#allocation3 + $0x4a4] sm:$0xff]
      %v1913 = vld [vmem:[#allocation3 + $0x4ac] sm:$0xff]
      %v1914 = vld [vmem:[#allocation3 + $0x4b4] sm:$0xff]
      %v1915 = vld [vmem:[#allocation3 + $0x4bc] sm:$0xff]
      %v1916 = vld [vmem:[#allocation3 + $0x4c4] sm:$0xf]
      %v1917 = vld [vmem:[#allocation3 + $0x4c8] sm:$0xff]
      %v1918 = vld [vmem:[#allocation3 + $0x4d0] sm:$0xff]
      %v1919 = vld [vmem:[#allocation3 + $0x4d8] sm:$0xff]
      %v1920 = vld [vmem:[#allocation3 + $0x4e0] sm:$0xff]
      %v1921 = vld [vmem:[#allocation3 + $0x4e8] sm:$0xff]
      %v1922 = vld [vmem:[#allocation3 + $0x4f0] sm:$0xff]
      %v1923 = vld [vmem:[#allocation3 + $0x4f8] sm:$0xff]
      %v1924 = vld [vmem:[#allocation3 + $0x500] sm:$0xff]
      %v1925 = vld [vmem:[#allocation3 + $0x508] sm:$0xf]
      %v1926 = vld [vmem:[#allocation3 + $0x50c] sm:$0xff]
      %v1927 = vld [vmem:[#allocation3 + $0x514] sm:$0xff]
      %v1928 = vld [vmem:[#allocation3 + $0x51c] sm:$0xff]
      %v1929 = vld [vmem:[#allocation3 + $0x524] sm:$0xff]
      %v1930 = vld [vmem:[#allocation3 + $0x52c] sm:$0xff]
      %v1931 = vld [vmem:[#allocation3 + $0x534] sm:$0xff]
      %v1932 = vld [vmem:[#allocation3 + $0x53c] sm:$0xff]
      %v1933 = vld [vmem:[#allocation3 + $0x544] sm:$0xff]
      %v1934 = vld [vmem:[#allocation3 + $0x54c] sm:$0xf]
      %v1935 = vld [vmem:[#allocation3 + $0x550] sm:$0xff]
      %v1936 = vld [vmem:[#allocation3 + $0x558] sm:$0xff]
      %v1937 = vld [vmem:[#allocation3 + $0x560] sm:$0xff]
      %v1938 = vld [vmem:[#allocation3 + $0x568] sm:$0xff]
      %v1939 = vld [vmem:[#allocation3 + $0x570] sm:$0xff]
      %v1940 = vld [vmem:[#allocation3 + $0x578] sm:$0xff]
      %v1941 = vld [vmem:[#allocation3 + $0x580] sm:$0xff]
      %v1942 = vld [vmem:[#allocation3 + $0x588] sm:$0xff]
      %v1943 = vld [vmem:[#allocation3 + $0x590] sm:$0xf]
      %v1944 = vld [vmem:[#allocation3 + $0x594] sm:$0xff]
      %v1945 = vld [vmem:[#allocation3 + $0x59c] sm:$0xff]
      %v1946 = vld [vmem:[#allocation3 + $0x5a4] sm:$0xff]
      %v1947 = vld [vmem:[#allocation3 + $0x5ac] sm:$0xff]
      %v1948 = vld [vmem:[#allocation3 + $0x5b4] sm:$0xff]
      %v1949 = vld [vmem:[#allocation3 + $0x5bc] sm:$0xff]
      %v1950 = vld [vmem:[#allocation3 + $0x5c4] sm:$0xff]
      %v1951 = vld [vmem:[#allocation3 + $0x5cc] sm:$0xff]
      %v1952 = vld [vmem:[#allocation3 + $0x5d4] sm:$0xf]
      %v1953 = vld [vmem:[#allocation3 + $0x5d8] sm:$0xff]
      %v1954 = vld [vmem:[#allocation3 + $0x5e0] sm:$0xff]
      %v1955 = vld [vmem:[#allocation3 + $0x5e8] sm:$0xff]
      %v1956 = vld [vmem:[#allocation3 + $0x5f0] sm:$0xff]
      %v1957 = vld [vmem:[#allocation3 + $0x5f8] sm:$0xff]
      %v1958 = vld [vmem:[#allocation3 + $0x600] sm:$0xff]
      %v1959 = vld [vmem:[#allocation3 + $0x608] sm:$0xff]
      %v1960 = vld [vmem:[#allocation3 + $0x610] sm:$0xff]
      %v1961 = vld [vmem:[#allocation3 + $0x618] sm:$0xf]
      %v1962 = vld [vmem:[#allocation3 + $0x61c] sm:$0xff]
      %v1963 = vld [vmem:[#allocation3 + $0x624] sm:$0xff]
      %v1964 = vld [vmem:[#allocation3 + $0x62c] sm:$0xff]
      %v1965 = vld [vmem:[#allocation3 + $0x634] sm:$0xff]
      %v1966 = vld [vmem:[#allocation3 + $0x63c] sm:$0xff]
      %v1967 = vld [vmem:[#allocation3 + $0x644] sm:$0xff]
      %v1968 = vld [vmem:[#allocation3 + $0x64c] sm:$0xff]
      %v1969 = vld [vmem:[#allocation3 + $0x654] sm:$0xff]
      %v1970 = vld [vmem:[#allocation3 + $0x65c] sm:$0xf]
      %v1971 = vld [vmem:[#allocation3 + $0x660] sm:$0xff]
      %v1972 = vld [vmem:[#allocation3 + $0x668] sm:$0xff]
      %v1973 = vld [vmem:[#allocation3 + $0x670] sm:$0xff]
      %v1974 = vld [vmem:[#allocation3 + $0x678] sm:$0xff]
      %v1975 = vld [vmem:[#allocation3 + $0x680] sm:$0xff]
      %v1976 = vld [vmem:[#allocation3 + $0x688] sm:$0xff]
      %v1977 = vld [vmem:[#allocation3 + $0x690] sm:$0xff]
      %v1978 = vld [vmem:[#allocation3 + $0x698] sm:$0xff]
      %v1979 = vld [vmem:[#allocation3 + $0x6a0] sm:$0xf]
      %v1980 = vld [vmem:[#allocation3 + $0x6a4] sm:$0xff]
      %v1981 = vld [vmem:[#allocation3 + $0x6ac] sm:$0xff]
      %v1982 = vld [vmem:[#allocation3 + $0x6b4] sm:$0xff]
      %v1983 = vld [vmem:[#allocation3 + $0x6bc] sm:$0xff]
      %v1984 = vld [vmem:[#allocation3 + $0x6c4] sm:$0xff]
      %v1985 = vld [vmem:[#allocation3 + $0x6cc] sm:$0xff]
      %v1986 = vld [vmem:[#allocation3 + $0x6d4] sm:$0xff]
      %v1987 = vld [vmem:[#allocation3 + $0x6dc] sm:$0xff]
      %v1988 = vld [vmem:[#allocation3 + $0x6e4] sm:$0xf]
      %v1989 = vld [vmem:[#allocation3 + $0x6e8] sm:$0xff]
      %v1990 = vld [vmem:[#allocation3 + $0x6f0] sm:$0xff]
      %v1991 = vld [vmem:[#allocation3 + $0x6f8] sm:$0xff]
      %v1992 = vld [vmem:[#allocation3 + $0x700] sm:$0xff]
      %v1993 = vld [vmem:[#allocation3 + $0x708] sm:$0xff]
      %v1994 = vld [vmem:[#allocation3 + $0x710] sm:$0xff]
      %v1995 = vld [vmem:[#allocation3 + $0x718] sm:$0xff]
      %v1996 = vld [vmem:[#allocation3 + $0x720] sm:$0xff]
      %v1997 = vld [vmem:[#allocation3 + $0x728] sm:$0xf]
      %v1998 = vld [vmem:[#allocation3 + $0x72c] sm:$0xff]
      %v1999 = vld [vmem:[#allocation3 + $0x734] sm:$0xff]
      %v2000 = vld [vmem:[#allocation3 + $0x73c] sm:$0xff]
      %v2001 = vld [vmem:[#allocation3 + $0x744] sm:$0xff]
      %v2002 = vld [vmem:[#allocation3 + $0x74c] sm:$0xff]
      %v2003 = vld [vmem:[#allocation3 + $0x754] sm:$0xff]
      %v2004 = vld [vmem:[#allocation3 + $0x75c] sm:$0xff]
      %v2005 = vld [vmem:[#allocation3 + $0x764] sm:$0xff]
      %v2006 = vld [vmem:[#allocation3 + $0x76c] sm:$0xf]
      %v2007 = vld [vmem:[#allocation3 + $0x770] sm:$0xff]
      %v2008 = vld [vmem:[#allocation3 + $0x778] sm:$0xff]
      %v2009 = vld [vmem:[#allocation3 + $0x780] sm:$0xff]
      %v2010 = vld [vmem:[#allocation3 + $0x788] sm:$0xff]
      %v2011 = vld [vmem:[#allocation3 + $0x790] sm:$0xff]
      %v2012 = vld [vmem:[#allocation3 + $0x798] sm:$0xff]
      %v2013 = vld [vmem:[#allocation3 + $0x7a0] sm:$0xff]
      %v2014 = vld [vmem:[#allocation3 + $0x7a8] sm:$0xff]
      %v2015 = vld [vmem:[#allocation3 + $0x7b0] sm:$0xf]
      %v2016 = vld [vmem:[#allocation3 + $0x7b4] sm:$0xff]
      %v2017 = vld [vmem:[#allocation3 + $0x7bc] sm:$0xff]
      %v2018 = vld [vmem:[#allocation3 + $0x7c4] sm:$0xff]
      %v2019 = vld [vmem:[#allocation3 + $0x7cc] sm:$0xff]
      %v2020 = vld [vmem:[#allocation3 + $0x7d4] sm:$0xff]
      %v2021 = vld [vmem:[#allocation3 + $0x7dc] sm:$0xff]
      %v2022 = vld [vmem:[#allocation3 + $0x7e4] sm:$0xff]
      %v2023 = vld [vmem:[#allocation3 + $0x7ec] sm:$0xff]
      %v2024 = vld [vmem:[#allocation3 + $0x7f4] sm:$0xf]
      %v2025 = vld [vmem:[#allocation3 + $0x7f8] sm:$0xff]
      %v2026 = vld [vmem:[#allocation3 + $0x800] sm:$0xff]
      %v2027 = vld [vmem:[#allocation3 + $0x808] sm:$0xff]
      %v2028 = vld [vmem:[#allocation3 + $0x810] sm:$0xff]
      %v2029 = vld [vmem:[#allocation3 + $0x818] sm:$0xff]
      %v2030 = vld [vmem:[#allocation3 + $0x820] sm:$0xff]
      %v2031 = vld [vmem:[#allocation3 + $0x828] sm:$0xff]
      %v2032 = vld [vmem:[#allocation3 + $0x830] sm:$0xff]
      %v2033 = vld [vmem:[#allocation3 + $0x838] sm:$0xf]
      %v2034 = vld [vmem:[#allocation3 + $0x83c] sm:$0xff]
      %v2035 = vld [vmem:[#allocation3 + $0x844] sm:$0xff]
      %v2036 = vld [vmem:[#allocation3 + $0x84c] sm:$0xff]
      %v2037 = vld [vmem:[#allocation3 + $0x854] sm:$0xff]
      %v2038 = vld [vmem:[#allocation3 + $0x85c] sm:$0xff]
      %v2039 = vld [vmem:[#allocation3 + $0x864] sm:$0xff]
      %v2040 = vld [vmem:[#allocation3 + $0x86c] sm:$0xff]
      %v2041 = vld [vmem:[#allocation3 + $0x874] sm:$0xff]
      %v2042 = vld [vmem:[#allocation3 + $0x87c] sm:$0xf]
      %v2043 = vld [vmem:[#allocation3 + $0x880] sm:$0xff]
      %v2044 = vld [vmem:[#allocation3 + $0x888] sm:$0xff]
      %v2045 = vld [vmem:[#allocation3 + $0x890] sm:$0xff]
      %v2046 = vld [vmem:[#allocation3 + $0x898] sm:$0xff]
      %v2047 = vld [vmem:[#allocation3 + $0x8a0] sm:$0xff]
      %v2048 = vld [vmem:[#allocation3 + $0x8a8] sm:$0xff]
      %v2049 = vld [vmem:[#allocation3 + $0x8b0] sm:$0xff]
      %v2050 = vld [vmem:[#allocation3 + $0x8b8] sm:$0xff]
      %v2051 = vld [vmem:[#allocation3 + $0x8c0] sm:$0xf]
      %v2052 = vld [vmem:[#allocation3 + $0x8c4] sm:$0xff]
      %v2053 = vld [vmem:[#allocation3 + $0x8cc] sm:$0xff]
      %v2054 = vld [vmem:[#allocation3 + $0x8d4] sm:$0xff]
      %v2055 = vld [vmem:[#allocation3 + $0x8dc] sm:$0xff]
      %v2056 = vld [vmem:[#allocation3 + $0x8e4] sm:$0xff]
      %v2057 = vld [vmem:[#allocation3 + $0x8ec] sm:$0xff]
      %v2058 = vld [vmem:[#allocation3 + $0x8f4] sm:$0xff]
      %v2059 = vld [vmem:[#allocation3 + $0x8fc] sm:$0xff]
      %v2060 = vld [vmem:[#allocation3 + $0x904] sm:$0xf]
      %v2061 = vld [vmem:[#allocation3 + $0x908] sm:$0xff]
      %v2062 = vld [vmem:[#allocation3 + $0x910] sm:$0xff]
      %v2063 = vld [vmem:[#allocation3 + $0x918] sm:$0xff]
      %v2064 = vld [vmem:[#allocation3 + $0x920] sm:$0xff]
      %v2065 = vld [vmem:[#allocation3 + $0x928] sm:$0xff]
      %v2066 = vld [vmem:[#allocation3 + $0x930] sm:$0xff]
      %v2067 = vld [vmem:[#allocation3 + $0x938] sm:$0xff]
      %v2068 = vld [vmem:[#allocation3 + $0x940] sm:$0xff]
      %v2069 = vld [vmem:[#allocation3 + $0x948] sm:$0xf]
      %v2070 = vld [vmem:[#allocation3 + $0x94c] sm:$0xff]
      %v2071 = vld [vmem:[#allocation3 + $0x954] sm:$0xff]
      %v2072 = vld [vmem:[#allocation3 + $0x95c] sm:$0xff]
      %v2073 = vld [vmem:[#allocation3 + $0x964] sm:$0xff]
      %v2074 = vld [vmem:[#allocation3 + $0x96c] sm:$0xff]
      %v2075 = vld [vmem:[#allocation3 + $0x974] sm:$0xff]
      %v2076 = vld [vmem:[#allocation3 + $0x97c] sm:$0xff]
      %v2077 = vld [vmem:[#allocation3 + $0x984] sm:$0xff]
      %v2078 = vld [vmem:[#allocation3 + $0x98c] sm:$0xf]
      %v2079 = vld [vmem:[%s2] sm:$0xff]
      %v2080 = vld [vmem:[%s2 + $0x8] sm:$0xff]
      %2082 = vset.pattern.permute.xlu0 0
      %2083 = vperm.xlu0 %2082, %v2079
      %v2084 = vpop.permute.xlu0 %2083
      %2087 = vset.pattern.permute.xlu0 0
      %2088 = vperm.xlu0 %2087, %v2080
      %v2089 = vpop.permute.xlu0 %2088
      %v2095 = vunpack.c.l.b16 %v1751
      %v2096 = vunpack.c.h.b16 %v1751
      %v2097 = vunpack.c.l.b16 %v1752
      %v2098 = vunpack.c.l.b16 %v1753
      %v2099 = vunpack.c.h.b16 %v1753
      %v2100 = vunpack.c.l.b16 %v1754
      %v2101 = vpack.c.b16 %v2098, %v2095
      %v2102 = vpack.c.b16 %v2099, %v2096
      %v2103 = vpack.c.b16 %v2100, %v2097
      %v2430 = vunpack.c.l.b16 %v1755
      %v2431 = vunpack.c.h.b16 %v1755
      %v2432 = vunpack.c.l.b16 %v1756
      %v2433 = vunpack.c.h.b16 %v1756
      %v2434 = vunpack.c.l.b16 %v1757
      %v2435 = vunpack.c.h.b16 %v1757
      %v2436 = vunpack.c.l.b16 %v1758
      %v2437 = vunpack.c.h.b16 %v1758
      %v2438 = vunpack.c.l.b16 %v1759
      %v2439 = vunpack.c.h.b16 %v1759
      %v2440 = vunpack.c.l.b16 %v1760
      %v2441 = vunpack.c.h.b16 %v1760
      %v2442 = vunpack.c.l.b16 %v1761
      %v2443 = vunpack.c.h.b16 %v1761
      %v2444 = vunpack.c.l.b16 %v1762
      %v2445 = vunpack.c.h.b16 %v1762
      %v2446 = vunpack.c.l.b16 %v1763
      %v2447 = vunpack.c.l.b16 %v1764
      %v2448 = vunpack.c.h.b16 %v1764
      %v2449 = vunpack.c.l.b16 %v1765
      %v2450 = vunpack.c.h.b16 %v1765
      %v2451 = vunpack.c.l.b16 %v1766
      %v2452 = vunpack.c.h.b16 %v1766
      %v2453 = vunpack.c.l.b16 %v1767
      %v2454 = vunpack.c.h.b16 %v1767
      %v2455 = vunpack.c.l.b16 %v1768
      %v2456 = vunpack.c.h.b16 %v1768
      %v2457 = vunpack.c.l.b16 %v1769
      %v2458 = vunpack.c.h.b16 %v1769
      %v2459 = vunpack.c.l.b16 %v1770
      %v2460 = vunpack.c.h.b16 %v1770
      %v2461 = vunpack.c.l.b16 %v1771
      %v2462 = vunpack.c.h.b16 %v1771
      %v2463 = vunpack.c.l.b16 %v1772
      %v2464 = vunpack.c.l.b16 %v1773
      %v2465 = vunpack.c.h.b16 %v1773
      %v2466 = vunpack.c.l.b16 %v1774
      %v2467 = vunpack.c.h.b16 %v1774
      %v2468 = vunpack.c.l.b16 %v1775
      %v2469 = vunpack.c.h.b16 %v1775
      %v2470 = vunpack.c.l.b16 %v1776
      %v2471 = vunpack.c.h.b16 %v1776
      %v2472 = vunpack.c.l.b16 %v1777
      %v2473 = vunpack.c.h.b16 %v1777
      %v2474 = vunpack.c.l.b16 %v1778
      %v2475 = vunpack.c.h.b16 %v1778
      %v2476 = vunpack.c.l.b16 %v1779
      %v2477 = vunpack.c.h.b16 %v1779
      %v2478 = vunpack.c.l.b16 %v1780
      %v2479 = vunpack.c.h.b16 %v1780
      %v2480 = vunpack.c.l.b16 %v1781
      %v2481 = vunpack.c.l.b16 %v1782
      %v2482 = vunpack.c.h.b16 %v1782
      %v2483 = vunpack.c.l.b16 %v1783
      %v2484 = vunpack.c.h.b16 %v1783
      %v2485 = vunpack.c.l.b16 %v1784
      %v2486 = vunpack.c.h.b16 %v1784
      %v2487 = vunpack.c.l.b16 %v1785
      %v2488 = vunpack.c.h.b16 %v1785
      %v2489 = vunpack.c.l.b16 %v1786
      %v2490 = vunpack.c.h.b16 %v1786
      %v2491 = vunpack.c.l.b16 %v1787
      %v2492 = vunpack.c.h.b16 %v1787
      %v2493 = vunpack.c.l.b16 %v1788
      %v2494 = vunpack.c.h.b16 %v1788
      %v2495 = vunpack.c.l.b16 %v1789
      %v2496 = vunpack.c.h.b16 %v1789
      %v2497 = vunpack.c.l.b16 %v1790
      %v2498 = vunpack.c.l.b16 %v1791
      %v2499 = vunpack.c.h.b16 %v1791
      %v2500 = vunpack.c.l.b16 %v1792
      %v2501 = vunpack.c.h.b16 %v1792
      %v2502 = vunpack.c.l.b16 %v1793
      %v2503 = vunpack.c.h.b16 %v1793
      %v2504 = vunpack.c.l.b16 %v1794
      %v2505 = vunpack.c.h.b16 %v1794
      %v2506 = vunpack.c.l.b16 %v1795
      %v2507 = vunpack.c.h.b16 %v1795
      %v2508 = vunpack.c.l.b16 %v1796
      %v2509 = vunpack.c.h.b16 %v1796
      %v2510 = vunpack.c.l.b16 %v1797
      %v2511 = vunpack.c.h.b16 %v1797
      %v2512 = vunpack.c.l.b16 %v1798
      %v2513 = vunpack.c.h.b16 %v1798
      %v2514 = vunpack.c.l.b16 %v1799
      %v2515 = vunpack.c.l.b16 %v1800
      %v2516 = vunpack.c.h.b16 %v1800
      %v2517 = vunpack.c.l.b16 %v1801
      %v2518 = vunpack.c.h.b16 %v1801
      %v2519 = vunpack.c.l.b16 %v1802
      %v2520 = vunpack.c.h.b16 %v1802
      %v2521 = vunpack.c.l.b16 %v1803
      %v2522 = vunpack.c.h.b16 %v1803
      %v2523 = vunpack.c.l.b16 %v1804
      %v2524 = vunpack.c.h.b16 %v1804
      %v2525 = vunpack.c.l.b16 %v1805
      %v2526 = vunpack.c.h.b16 %v1805
      %v2527 = vunpack.c.l.b16 %v1806
      %v2528 = vunpack.c.h.b16 %v1806
      %v2529 = vunpack.c.l.b16 %v1807
      %v2530 = vunpack.c.h.b16 %v1807
      %v2531 = vunpack.c.l.b16 %v1808
      %v2532 = vunpack.c.l.b16 %v1809
      %v2533 = vunpack.c.h.b16 %v1809
      %v2534 = vunpack.c.l.b16 %v1810
      %v2535 = vunpack.c.h.b16 %v1810
      %v2536 = vunpack.c.l.b16 %v1811
      %v2537 = vunpack.c.h.b16 %v1811
      %v2538 = vunpack.c.l.b16 %v1812
      %v2539 = vunpack.c.h.b16 %v1812
      %v2540 = vunpack.c.l.b16 %v1813
      %v2541 = vunpack.c.h.b16 %v1813
      %v2542 = vunpack.c.l.b16 %v1814
      %v2543 = vunpack.c.h.b16 %v1814
      %v2544 = vunpack.c.l.b16 %v1815
      %v2545 = vunpack.c.h.b16 %v1815
      %v2546 = vunpack.c.l.b16 %v1816
      %v2547 = vunpack.c.h.b16 %v1816
      %v2548 = vunpack.c.l.b16 %v1817
      %v2549 = vunpack.c.l.b16 %v1818
      %v2550 = vunpack.c.h.b16 %v1818
      %v2551 = vunpack.c.l.b16 %v1819
      %v2552 = vunpack.c.h.b16 %v1819
      %v2553 = vunpack.c.l.b16 %v1820
      %v2554 = vunpack.c.h.b16 %v1820
      %v2555 = vunpack.c.l.b16 %v1821
      %v2556 = vunpack.c.h.b16 %v1821
      %v2557 = vunpack.c.l.b16 %v1822
      %v2558 = vunpack.c.h.b16 %v1822
      %v2559 = vunpack.c.l.b16 %v1823
      %v2560 = vunpack.c.h.b16 %v1823
      %v2561 = vunpack.c.l.b16 %v1824
      %v2562 = vunpack.c.h.b16 %v1824
      %v2563 = vunpack.c.l.b16 %v1825
      %v2564 = vunpack.c.h.b16 %v1825
      %v2565 = vunpack.c.l.b16 %v1826
      %v2566 = vunpack.c.l.b16 %v1827
      %v2567 = vunpack.c.h.b16 %v1827
      %v2568 = vunpack.c.l.b16 %v1828
      %v2569 = vunpack.c.h.b16 %v1828
      %v2570 = vunpack.c.l.b16 %v1829
      %v2571 = vunpack.c.h.b16 %v1829
      %v2572 = vunpack.c.l.b16 %v1830
      %v2573 = vunpack.c.h.b16 %v1830
      %v2574 = vunpack.c.l.b16 %v1831
      %v2575 = vunpack.c.h.b16 %v1831
      %v2576 = vunpack.c.l.b16 %v1832
      %v2577 = vunpack.c.h.b16 %v1832
      %v2578 = vunpack.c.l.b16 %v1833
      %v2579 = vunpack.c.h.b16 %v1833
      %v2580 = vunpack.c.l.b16 %v1834
      %v2581 = vunpack.c.h.b16 %v1834
      %v2582 = vunpack.c.l.b16 %v1835
      %v2583 = vunpack.c.l.b16 %v1836
      %v2584 = vunpack.c.h.b16 %v1836
      %v2585 = vunpack.c.l.b16 %v1837
      %v2586 = vunpack.c.h.b16 %v1837
      %v2587 = vunpack.c.l.b16 %v1838
      %v2588 = vunpack.c.h.b16 %v1838
      %v2589 = vunpack.c.l.b16 %v1839
      %v2590 = vunpack.c.h.b16 %v1839
      %v2591 = vunpack.c.l.b16 %v1840
      %v2592 = vunpack.c.h.b16 %v1840
      %v2593 = vunpack.c.l.b16 %v1841
      %v2594 = vunpack.c.h.b16 %v1841
      %v2595 = vunpack.c.l.b16 %v1842
      %v2596 = vunpack.c.h.b16 %v1842
      %v2597 = vunpack.c.l.b16 %v1843
      %v2598 = vunpack.c.h.b16 %v1843
      %v2599 = vunpack.c.l.b16 %v1844
      %v2600 = vunpack.c.l.b16 %v1845
      %v2601 = vunpack.c.h.b16 %v1845
      %v2602 = vunpack.c.l.b16 %v1846
      %v2603 = vunpack.c.h.b16 %v1846
      %v2604 = vunpack.c.l.b16 %v1847
      %v2605 = vunpack.c.h.b16 %v1847
      %v2606 = vunpack.c.l.b16 %v1848
      %v2607 = vunpack.c.h.b16 %v1848
      %v2608 = vunpack.c.l.b16 %v1849
      %v2609 = vunpack.c.h.b16 %v1849
      %v2610 = vunpack.c.l.b16 %v1850
      %v2611 = vunpack.c.h.b16 %v1850
      %v2612 = vunpack.c.l.b16 %v1851
      %v2613 = vunpack.c.h.b16 %v1851
      %v2614 = vunpack.c.l.b16 %v1852
      %v2615 = vunpack.c.h.b16 %v1852
      %v2616 = vunpack.c.l.b16 %v1853
      %v2617 = vunpack.c.l.b16 %v1854
      %v2618 = vunpack.c.h.b16 %v1854
      %v2619 = vunpack.c.l.b16 %v1855
      %v2620 = vunpack.c.h.b16 %v1855
      %v2621 = vunpack.c.l.b16 %v1856
      %v2622 = vunpack.c.h.b16 %v1856
      %v2623 = vunpack.c.l.b16 %v1857
      %v2624 = vunpack.c.h.b16 %v1857
      %v2625 = vunpack.c.l.b16 %v1858
      %v2626 = vunpack.c.h.b16 %v1858
      %v2627 = vunpack.c.l.b16 %v1859
      %v2628 = vunpack.c.h.b16 %v1859
      %v2629 = vunpack.c.l.b16 %v1860
      %v2630 = vunpack.c.h.b16 %v1860
      %v2631 = vunpack.c.l.b16 %v1861
      %v2632 = vunpack.c.h.b16 %v1861
      %v2633 = vunpack.c.l.b16 %v1862
      %v2634 = vunpack.c.l.b16 %v1863
      %v2635 = vunpack.c.h.b16 %v1863
      %v2636 = vunpack.c.l.b16 %v1864
      %v2637 = vunpack.c.h.b16 %v1864
      %v2638 = vunpack.c.l.b16 %v1865
      %v2639 = vunpack.c.h.b16 %v1865
      %v2640 = vunpack.c.l.b16 %v1866
      %v2641 = vunpack.c.h.b16 %v1866
      %v2642 = vunpack.c.l.b16 %v1867
      %v2643 = vunpack.c.h.b16 %v1867
      %v2644 = vunpack.c.l.b16 %v1868
      %v2645 = vunpack.c.h.b16 %v1868
      %v2646 = vunpack.c.l.b16 %v1869
      %v2647 = vunpack.c.h.b16 %v1869
      %v2648 = vunpack.c.l.b16 %v1870
      %v2649 = vunpack.c.h.b16 %v1870
      %v2650 = vunpack.c.l.b16 %v1871
      %v2651 = vunpack.c.l.b16 %v1872
      %v2652 = vunpack.c.h.b16 %v1872
      %v2653 = vunpack.c.l.b16 %v1873
      %v2654 = vunpack.c.h.b16 %v1873
      %v2655 = vunpack.c.l.b16 %v1874
      %v2656 = vunpack.c.h.b16 %v1874
      %v2657 = vunpack.c.l.b16 %v1875
      %v2658 = vunpack.c.h.b16 %v1875
      %v2659 = vunpack.c.l.b16 %v1876
      %v2660 = vunpack.c.h.b16 %v1876
      %v2661 = vunpack.c.l.b16 %v1877
      %v2662 = vunpack.c.h.b16 %v1877
      %v2663 = vunpack.c.l.b16 %v1878
      %v2664 = vunpack.c.h.b16 %v1878
      %v2665 = vunpack.c.l.b16 %v1879
      %v2666 = vunpack.c.h.b16 %v1879
      %v2667 = vunpack.c.l.b16 %v1880
      %v2668 = vunpack.c.l.b16 %v1881
      %v2669 = vunpack.c.h.b16 %v1881
      %v2670 = vunpack.c.l.b16 %v1882
      %v2671 = vunpack.c.h.b16 %v1882
      %v2672 = vunpack.c.l.b16 %v1883
      %v2673 = vunpack.c.h.b16 %v1883
      %v2674 = vunpack.c.l.b16 %v1884
      %v2675 = vunpack.c.h.b16 %v1884
      %v2676 = vunpack.c.l.b16 %v1885
      %v2677 = vunpack.c.h.b16 %v1885
      %v2678 = vunpack.c.l.b16 %v1886
      %v2679 = vunpack.c.h.b16 %v1886
      %v2680 = vunpack.c.l.b16 %v1887
      %v2681 = vunpack.c.h.b16 %v1887
      %v2682 = vunpack.c.l.b16 %v1888
      %v2683 = vunpack.c.h.b16 %v1888
      %v2684 = vunpack.c.l.b16 %v1889
      %v2685 = vunpack.c.l.b16 %v1890
      %v2686 = vunpack.c.h.b16 %v1890
      %v2687 = vunpack.c.l.b16 %v1891
      %v2688 = vunpack.c.h.b16 %v1891
      %v2689 = vunpack.c.l.b16 %v1892
      %v2690 = vunpack.c.h.b16 %v1892
      %v2691 = vunpack.c.l.b16 %v1893
      %v2692 = vunpack.c.h.b16 %v1893
      %v2693 = vunpack.c.l.b16 %v1894
      %v2694 = vunpack.c.h.b16 %v1894
      %v2695 = vunpack.c.l.b16 %v1895
      %v2696 = vunpack.c.h.b16 %v1895
      %v2697 = vunpack.c.l.b16 %v1896
      %v2698 = vunpack.c.h.b16 %v1896
      %v2699 = vunpack.c.l.b16 %v1897
      %v2700 = vunpack.c.h.b16 %v1897
      %v2701 = vunpack.c.l.b16 %v1898
      %v2702 = vunpack.c.l.b16 %v1899
      %v2703 = vunpack.c.h.b16 %v1899
      %v2704 = vunpack.c.l.b16 %v1900
      %v2705 = vunpack.c.h.b16 %v1900
      %v2706 = vunpack.c.l.b16 %v1901
      %v2707 = vunpack.c.h.b16 %v1901
      %v2708 = vunpack.c.l.b16 %v1902
      %v2709 = vunpack.c.h.b16 %v1902
      %v2710 = vunpack.c.l.b16 %v1903
      %v2711 = vunpack.c.h.b16 %v1903
      %v2712 = vunpack.c.l.b16 %v1904
      %v2713 = vunpack.c.h.b16 %v1904
      %v2714 = vunpack.c.l.b16 %v1905
      %v2715 = vunpack.c.h.b16 %v1905
      %v2716 = vunpack.c.l.b16 %v1906
      %v2717 = vunpack.c.h.b16 %v1906
      %v2718 = vunpack.c.l.b16 %v1907
      %v2719 = vunpack.c.l.b16 %v1908
      %v2720 = vunpack.c.h.b16 %v1908
      %v2721 = vunpack.c.l.b16 %v1909
      %v2722 = vunpack.c.h.b16 %v1909
      %v2723 = vunpack.c.l.b16 %v1910
      %v2724 = vunpack.c.h.b16 %v1910
      %v2725 = vunpack.c.l.b16 %v1911
      %v2726 = vunpack.c.h.b16 %v1911
      %v2727 = vunpack.c.l.b16 %v1912
      %v2728 = vunpack.c.h.b16 %v1912
      %v2729 = vunpack.c.l.b16 %v1913
      %v2730 = vunpack.c.h.b16 %v1913
      %v2731 = vunpack.c.l.b16 %v1914
      %v2732 = vunpack.c.h.b16 %v1914
      %v2733 = vunpack.c.l.b16 %v1915
      %v2734 = vunpack.c.h.b16 %v1915
      %v2735 = vunpack.c.l.b16 %v1916
      %v2736 = vunpack.c.l.b16 %v1917
      %v2737 = vunpack.c.h.b16 %v1917
      %v2738 = vunpack.c.l.b16 %v1918
      %v2739 = vunpack.c.h.b16 %v1918
      %v2740 = vunpack.c.l.b16 %v1919
      %v2741 = vunpack.c.h.b16 %v1919
      %v2742 = vunpack.c.l.b16 %v1920
      %v2743 = vunpack.c.h.b16 %v1920
      %v2744 = vunpack.c.l.b16 %v1921
      %v2745 = vunpack.c.h.b16 %v1921
      %v2746 = vunpack.c.l.b16 %v1922
      %v2747 = vunpack.c.h.b16 %v1922
      %v2748 = vunpack.c.l.b16 %v1923
      %v2749 = vunpack.c.h.b16 %v1923
      %v2750 = vunpack.c.l.b16 %v1924
      %v2751 = vunpack.c.h.b16 %v1924
      %v2752 = vunpack.c.l.b16 %v1925
      %v2753 = vunpack.c.l.b16 %v1926
      %v2754 = vunpack.c.h.b16 %v1926
      %v2755 = vunpack.c.l.b16 %v1927
      %v2756 = vunpack.c.h.b16 %v1927
      %v2757 = vunpack.c.l.b16 %v1928
      %v2758 = vunpack.c.h.b16 %v1928
      %v2759 = vunpack.c.l.b16 %v1929
      %v2760 = vunpack.c.h.b16 %v1929
      %v2761 = vunpack.c.l.b16 %v1930
      %v2762 = vunpack.c.h.b16 %v1930
      %v2763 = vunpack.c.l.b16 %v1931
      %v2764 = vunpack.c.h.b16 %v1931
      %v2765 = vunpack.c.l.b16 %v1932
      %v2766 = vunpack.c.h.b16 %v1932
      %v2767 = vunpack.c.l.b16 %v1933
      %v2768 = vunpack.c.h.b16 %v1933
      %v2769 = vunpack.c.l.b16 %v1934
      %v2770 = vunpack.c.l.b16 %v1935
      %v2771 = vunpack.c.h.b16 %v1935
      %v2772 = vunpack.c.l.b16 %v1936
      %v2773 = vunpack.c.h.b16 %v1936
      %v2774 = vunpack.c.l.b16 %v1937
      %v2775 = vunpack.c.h.b16 %v1937
      %v2776 = vunpack.c.l.b16 %v1938
      %v2777 = vunpack.c.h.b16 %v1938
      %v2778 = vunpack.c.l.b16 %v1939
      %v2779 = vunpack.c.h.b16 %v1939
      %v2780 = vunpack.c.l.b16 %v1940
      %v2781 = vunpack.c.h.b16 %v1940
      %v2782 = vunpack.c.l.b16 %v1941
      %v2783 = vunpack.c.h.b16 %v1941
      %v2784 = vunpack.c.l.b16 %v1942
      %v2785 = vunpack.c.h.b16 %v1942
      %v2786 = vunpack.c.l.b16 %v1943
      %v2787 = vunpack.c.l.b16 %v1944
      %v2788 = vunpack.c.h.b16 %v1944
      %v2789 = vunpack.c.l.b16 %v1945
      %v2790 = vunpack.c.h.b16 %v1945
      %v2791 = vunpack.c.l.b16 %v1946
      %v2792 = vunpack.c.h.b16 %v1946
      %v2793 = vunpack.c.l.b16 %v1947
      %v2794 = vunpack.c.h.b16 %v1947
      %v2795 = vunpack.c.l.b16 %v1948
      %v2796 = vunpack.c.h.b16 %v1948
      %v2797 = vunpack.c.l.b16 %v1949
      %v2798 = vunpack.c.h.b16 %v1949
      %v2799 = vunpack.c.l.b16 %v1950
      %v2800 = vunpack.c.h.b16 %v1950
      %v2801 = vunpack.c.l.b16 %v1951
      %v2802 = vunpack.c.h.b16 %v1951
      %v2803 = vunpack.c.l.b16 %v1952
      %v2804 = vunpack.c.l.b16 %v1953
      %v2805 = vunpack.c.h.b16 %v1953
      %v2806 = vunpack.c.l.b16 %v1954
      %v2807 = vunpack.c.h.b16 %v1954
      %v2808 = vunpack.c.l.b16 %v1955
      %v2809 = vunpack.c.h.b16 %v1955
      %v2810 = vunpack.c.l.b16 %v1956
      %v2811 = vunpack.c.h.b16 %v1956
      %v2812 = vunpack.c.l.b16 %v1957
      %v2813 = vunpack.c.h.b16 %v1957
      %v2814 = vunpack.c.l.b16 %v1958
      %v2815 = vunpack.c.h.b16 %v1958
      %v2816 = vunpack.c.l.b16 %v1959
      %v2817 = vunpack.c.h.b16 %v1959
      %v2818 = vunpack.c.l.b16 %v1960
      %v2819 = vunpack.c.h.b16 %v1960
      %v2820 = vunpack.c.l.b16 %v1961
      %v2821 = vunpack.c.l.b16 %v1962
      %v2822 = vunpack.c.h.b16 %v1962
      %v2823 = vunpack.c.l.b16 %v1963
      %v2824 = vunpack.c.h.b16 %v1963
      %v2825 = vunpack.c.l.b16 %v1964
      %v2826 = vunpack.c.h.b16 %v1964
      %v2827 = vunpack.c.l.b16 %v1965
      %v2828 = vunpack.c.h.b16 %v1965
      %v2829 = vunpack.c.l.b16 %v1966
      %v2830 = vunpack.c.h.b16 %v1966
      %v2831 = vunpack.c.l.b16 %v1967
      %v2832 = vunpack.c.h.b16 %v1967
      %v2833 = vunpack.c.l.b16 %v1968
      %v2834 = vunpack.c.h.b16 %v1968
      %v2835 = vunpack.c.l.b16 %v1969
      %v2836 = vunpack.c.h.b16 %v1969
      %v2837 = vunpack.c.l.b16 %v1970
      %v2838 = vunpack.c.l.b16 %v1971
      %v2839 = vunpack.c.h.b16 %v1971
      %v2840 = vunpack.c.l.b16 %v1972
      %v2841 = vunpack.c.h.b16 %v1972
      %v2842 = vunpack.c.l.b16 %v1973
      %v2843 = vunpack.c.h.b16 %v1973
      %v2844 = vunpack.c.l.b16 %v1974
      %v2845 = vunpack.c.h.b16 %v1974
      %v2846 = vunpack.c.l.b16 %v1975
      %v2847 = vunpack.c.h.b16 %v1975
      %v2848 = vunpack.c.l.b16 %v1976
      %v2849 = vunpack.c.h.b16 %v1976
      %v2850 = vunpack.c.l.b16 %v1977
      %v2851 = vunpack.c.h.b16 %v1977
      %v2852 = vunpack.c.l.b16 %v1978
      %v2853 = vunpack.c.h.b16 %v1978
      %v2854 = vunpack.c.l.b16 %v1979
      %v2855 = vunpack.c.l.b16 %v1980
      %v2856 = vunpack.c.h.b16 %v1980
      %v2857 = vunpack.c.l.b16 %v1981
      %v2858 = vunpack.c.h.b16 %v1981
      %v2859 = vunpack.c.l.b16 %v1982
      %v2860 = vunpack.c.h.b16 %v1982
      %v2861 = vunpack.c.l.b16 %v1983
      %v2862 = vunpack.c.h.b16 %v1983
      %v2863 = vunpack.c.l.b16 %v1984
      %v2864 = vunpack.c.h.b16 %v1984
      %v2865 = vunpack.c.l.b16 %v1985
      %v2866 = vunpack.c.h.b16 %v1985
      %v2867 = vunpack.c.l.b16 %v1986
      %v2868 = vunpack.c.h.b16 %v1986
      %v2869 = vunpack.c.l.b16 %v1987
      %v2870 = vunpack.c.h.b16 %v1987
      %v2871 = vunpack.c.l.b16 %v1988
      %v2872 = vunpack.c.l.b16 %v1989
      %v2873 = vunpack.c.h.b16 %v1989
      %v2874 = vunpack.c.l.b16 %v1990
      %v2875 = vunpack.c.h.b16 %v1990
      %v2876 = vunpack.c.l.b16 %v1991
      %v2877 = vunpack.c.h.b16 %v1991
      %v2878 = vunpack.c.l.b16 %v1992
      %v2879 = vunpack.c.h.b16 %v1992
      %v2880 = vunpack.c.l.b16 %v1993
      %v2881 = vunpack.c.h.b16 %v1993
      %v2882 = vunpack.c.l.b16 %v1994
      %v2883 = vunpack.c.h.b16 %v1994
      %v2884 = vunpack.c.l.b16 %v1995
      %v2885 = vunpack.c.h.b16 %v1995
      %v2886 = vunpack.c.l.b16 %v1996
      %v2887 = vunpack.c.h.b16 %v1996
      %v2888 = vunpack.c.l.b16 %v1997
      %v2889 = vunpack.c.l.b16 %v1998
      %v2890 = vunpack.c.h.b16 %v1998
      %v2891 = vunpack.c.l.b16 %v1999
      %v2892 = vunpack.c.h.b16 %v1999
      %v2893 = vunpack.c.l.b16 %v2000
      %v2894 = vunpack.c.h.b16 %v2000
      %v2895 = vunpack.c.l.b16 %v2001
      %v2896 = vunpack.c.h.b16 %v2001
      %v2897 = vunpack.c.l.b16 %v2002
      %v2898 = vunpack.c.h.b16 %v2002
      %v2899 = vunpack.c.l.b16 %v2003
      %v2900 = vunpack.c.h.b16 %v2003
      %v2901 = vunpack.c.l.b16 %v2004
      %v2902 = vunpack.c.h.b16 %v2004
      %v2903 = vunpack.c.l.b16 %v2005
      %v2904 = vunpack.c.h.b16 %v2005
      %v2905 = vunpack.c.l.b16 %v2006
      %v2906 = vunpack.c.l.b16 %v2007
      %v2907 = vunpack.c.h.b16 %v2007
      %v2908 = vunpack.c.l.b16 %v2008
      %v2909 = vunpack.c.h.b16 %v2008
      %v2910 = vunpack.c.l.b16 %v2009
      %v2911 = vunpack.c.h.b16 %v2009
      %v2912 = vunpack.c.l.b16 %v2010
      %v2913 = vunpack.c.h.b16 %v2010
      %v2914 = vunpack.c.l.b16 %v2011
      %v2915 = vunpack.c.h.b16 %v2011
      %v2916 = vunpack.c.l.b16 %v2012
      %v2917 = vunpack.c.h.b16 %v2012
      %v2918 = vunpack.c.l.b16 %v2013
      %v2919 = vunpack.c.h.b16 %v2013
      %v2920 = vunpack.c.l.b16 %v2014
      %v2921 = vunpack.c.h.b16 %v2014
      %v2922 = vunpack.c.l.b16 %v2015
      %v2923 = vunpack.c.l.b16 %v2016
      %v2924 = vunpack.c.h.b16 %v2016
      %v2925 = vunpack.c.l.b16 %v2017
      %v2926 = vunpack.c.h.b16 %v2017
      %v2927 = vunpack.c.l.b16 %v2018
      %v2928 = vunpack.c.h.b16 %v2018
      %v2929 = vunpack.c.l.b16 %v2019
      %v2930 = vunpack.c.h.b16 %v2019
      %v2931 = vunpack.c.l.b16 %v2020
      %v2932 = vunpack.c.h.b16 %v2020
      %v2933 = vunpack.c.l.b16 %v2021
      %v2934 = vunpack.c.h.b16 %v2021
      %v2935 = vunpack.c.l.b16 %v2022
      %v2936 = vunpack.c.h.b16 %v2022
      %v2937 = vunpack.c.l.b16 %v2023
      %v2938 = vunpack.c.h.b16 %v2023
      %v2939 = vunpack.c.l.b16 %v2024
      %v2940 = vunpack.c.l.b16 %v2025
      %v2941 = vunpack.c.h.b16 %v2025
      %v2942 = vunpack.c.l.b16 %v2026
      %v2943 = vunpack.c.h.b16 %v2026
      %v2944 = vunpack.c.l.b16 %v2027
      %v2945 = vunpack.c.h.b16 %v2027
      %v2946 = vunpack.c.l.b16 %v2028
      %v2947 = vunpack.c.h.b16 %v2028
      %v2948 = vunpack.c.l.b16 %v2029
      %v2949 = vunpack.c.h.b16 %v2029
      %v2950 = vunpack.c.l.b16 %v2030
      %v2951 = vunpack.c.h.b16 %v2030
      %v2952 = vunpack.c.l.b16 %v2031
      %v2953 = vunpack.c.h.b16 %v2031
      %v2954 = vunpack.c.l.b16 %v2032
      %v2955 = vunpack.c.h.b16 %v2032
      %v2956 = vunpack.c.l.b16 %v2033
      %v2957 = vunpack.c.l.b16 %v2034
      %v2958 = vunpack.c.h.b16 %v2034
      %v2959 = vunpack.c.l.b16 %v2035
      %v2960 = vunpack.c.h.b16 %v2035
      %v2961 = vunpack.c.l.b16 %v2036
      %v2962 = vunpack.c.h.b16 %v2036
      %v2963 = vunpack.c.l.b16 %v2037
      %v2964 = vunpack.c.h.b16 %v2037
      %v2965 = vunpack.c.l.b16 %v2038
      %v2966 = vunpack.c.h.b16 %v2038
      %v2967 = vunpack.c.l.b16 %v2039
      %v2968 = vunpack.c.h.b16 %v2039
      %v2969 = vunpack.c.l.b16 %v2040
      %v2970 = vunpack.c.h.b16 %v2040
      %v2971 = vunpack.c.l.b16 %v2041
      %v2972 = vunpack.c.h.b16 %v2041
      %v2973 = vunpack.c.l.b16 %v2042
      %v2974 = vunpack.c.l.b16 %v2043
      %v2975 = vunpack.c.h.b16 %v2043
      %v2976 = vunpack.c.l.b16 %v2044
      %v2977 = vunpack.c.h.b16 %v2044
      %v2978 = vunpack.c.l.b16 %v2045
      %v2979 = vunpack.c.h.b16 %v2045
      %v2980 = vunpack.c.l.b16 %v2046
      %v2981 = vunpack.c.h.b16 %v2046
      %v2982 = vunpack.c.l.b16 %v2047
      %v2983 = vunpack.c.h.b16 %v2047
      %v2984 = vunpack.c.l.b16 %v2048
      %v2985 = vunpack.c.h.b16 %v2048
      %v2986 = vunpack.c.l.b16 %v2049
      %v2987 = vunpack.c.h.b16 %v2049
      %v2988 = vunpack.c.l.b16 %v2050
      %v2989 = vunpack.c.h.b16 %v2050
      %v2990 = vunpack.c.l.b16 %v2051
      %v2991 = vunpack.c.l.b16 %v2052
      %v2992 = vunpack.c.h.b16 %v2052
      %v2993 = vunpack.c.l.b16 %v2053
      %v2994 = vunpack.c.h.b16 %v2053
      %v2995 = vunpack.c.l.b16 %v2054
      %v2996 = vunpack.c.h.b16 %v2054
      %v2997 = vunpack.c.l.b16 %v2055
      %v2998 = vunpack.c.h.b16 %v2055
      %v2999 = vunpack.c.l.b16 %v2056
      %v3000 = vunpack.c.h.b16 %v2056
      %v3001 = vunpack.c.l.b16 %v2057
      %v3002 = vunpack.c.h.b16 %v2057
      %v3003 = vunpack.c.l.b16 %v2058
      %v3004 = vunpack.c.h.b16 %v2058
      %v3005 = vunpack.c.l.b16 %v2059
      %v3006 = vunpack.c.h.b16 %v2059
      %v3007 = vunpack.c.l.b16 %v2060
      %v3008 = vunpack.c.l.b16 %v2061
      %v3009 = vunpack.c.h.b16 %v2061
      %v3010 = vunpack.c.l.b16 %v2062
      %v3011 = vunpack.c.h.b16 %v2062
      %v3012 = vunpack.c.l.b16 %v2063
      %v3013 = vunpack.c.h.b16 %v2063
      %v3014 = vunpack.c.l.b16 %v2064
      %v3015 = vunpack.c.h.b16 %v2064
      %v3016 = vunpack.c.l.b16 %v2065
      %v3017 = vunpack.c.h.b16 %v2065
      %v3018 = vunpack.c.l.b16 %v2066
      %v3019 = vunpack.c.h.b16 %v2066
      %v3020 = vunpack.c.l.b16 %v2067
      %v3021 = vunpack.c.h.b16 %v2067
      %v3022 = vunpack.c.l.b16 %v2068
      %v3023 = vunpack.c.h.b16 %v2068
      %v3024 = vunpack.c.l.b16 %v2069
      %v3025 = vunpack.c.l.b16 %v2070
      %v3026 = vunpack.c.h.b16 %v2070
      %v3027 = vunpack.c.l.b16 %v2071
      %v3028 = vunpack.c.h.b16 %v2071
      %v3029 = vunpack.c.l.b16 %v2072
      %v3030 = vunpack.c.h.b16 %v2072
      %v3031 = vunpack.c.l.b16 %v2073
      %v3032 = vunpack.c.h.b16 %v2073
      %v3033 = vunpack.c.l.b16 %v2074
      %v3034 = vunpack.c.h.b16 %v2074
      %v3035 = vunpack.c.l.b16 %v2075
      %v3036 = vunpack.c.h.b16 %v2075
      %v3037 = vunpack.c.l.b16 %v2076
      %v3038 = vunpack.c.h.b16 %v2076
      %v3039 = vunpack.c.l.b16 %v2077
      %v3040 = vunpack.c.h.b16 %v2077
      %v3041 = vunpack.c.l.b16 %v2078
      %v3042 = vpack.c.b16 %v2447, %v2430
      %v3043 = vpack.c.b16 %v2448, %v2431
      %v3044 = vpack.c.b16 %v2449, %v2432
      %v3045 = vpack.c.b16 %v2450, %v2433
      %v3046 = vpack.c.b16 %v2451, %v2434
      %v3047 = vpack.c.b16 %v2452, %v2435
      %v3048 = vpack.c.b16 %v2453, %v2436
      %v3049 = vpack.c.b16 %v2454, %v2437
      %v3050 = vpack.c.b16 %v2455, %v2438
      %v3051 = vpack.c.b16 %v2456, %v2439
      %v3052 = vpack.c.b16 %v2457, %v2440
      %v3053 = vpack.c.b16 %v2458, %v2441
      %v3054 = vpack.c.b16 %v2459, %v2442
      %v3055 = vpack.c.b16 %v2460, %v2443
      %v3056 = vpack.c.b16 %v2461, %v2444
      %v3057 = vpack.c.b16 %v2462, %v2445
      %v3058 = vpack.c.b16 %v2463, %v2446
      %v3059 = vpack.c.b16 %v2481, %v2464
      %v3060 = vpack.c.b16 %v2482, %v2465
      %v3061 = vpack.c.b16 %v2483, %v2466
      %v3062 = vpack.c.b16 %v2484, %v2467
      %v3063 = vpack.c.b16 %v2485, %v2468
      %v3064 = vpack.c.b16 %v2486, %v2469
      %v3065 = vpack.c.b16 %v2487, %v2470
      %v3066 = vpack.c.b16 %v2488, %v2471
      %v3067 = vpack.c.b16 %v2489, %v2472
      %v3068 = vpack.c.b16 %v2490, %v2473
      %v3069 = vpack.c.b16 %v2491, %v2474
      %v3070 = vpack.c.b16 %v2492, %v2475
      %v3071 = vpack.c.b16 %v2493, %v2476
      %v3072 = vpack.c.b16 %v2494, %v2477
      %v3073 = vpack.c.b16 %v2495, %v2478
      %v3074 = vpack.c.b16 %v2496, %v2479
      %v3075 = vpack.c.b16 %v2497, %v2480
      %v3076 = vpack.c.b16 %v2515, %v2498
      %v3077 = vpack.c.b16 %v2516, %v2499
      %v3078 = vpack.c.b16 %v2517, %v2500
      %v3079 = vpack.c.b16 %v2518, %v2501
      %v3080 = vpack.c.b16 %v2519, %v2502
      %v3081 = vpack.c.b16 %v2520, %v2503
      %v3082 = vpack.c.b16 %v2521, %v2504
      %v3083 = vpack.c.b16 %v2522, %v2505
      %v3084 = vpack.c.b16 %v2523, %v2506
      %v3085 = vpack.c.b16 %v2524, %v2507
      %v3086 = vpack.c.b16 %v2525, %v2508
      %v3087 = vpack.c.b16 %v2526, %v2509
      %v3088 = vpack.c.b16 %v2527, %v2510
      %v3089 = vpack.c.b16 %v2528, %v2511
      %v3090 = vpack.c.b16 %v2529, %v2512
      %v3091 = vpack.c.b16 %v2530, %v2513
      %v3092 = vpack.c.b16 %v2531, %v2514
      %v3093 = vpack.c.b16 %v2549, %v2532
      %v3094 = vpack.c.b16 %v2550, %v2533
      %v3095 = vpack.c.b16 %v2551, %v2534
      %v3096 = vpack.c.b16 %v2552, %v2535
      %v3097 = vpack.c.b16 %v2553, %v2536
      %v3098 = vpack.c.b16 %v2554, %v2537
      %v3099 = vpack.c.b16 %v2555, %v2538
      %v3100 = vpack.c.b16 %v2556, %v2539
      %v3101 = vpack.c.b16 %v2557, %v2540
      %v3102 = vpack.c.b16 %v2558, %v2541
      %v3103 = vpack.c.b16 %v2559, %v2542
      %v3104 = vpack.c.b16 %v2560, %v2543
      %v3105 = vpack.c.b16 %v2561, %v2544
      %v3106 = vpack.c.b16 %v2562, %v2545
      %v3107 = vpack.c.b16 %v2563, %v2546
      %v3108 = vpack.c.b16 %v2564, %v2547
      %v3109 = vpack.c.b16 %v2565, %v2548
      %v3110 = vpack.c.b16 %v2583, %v2566
      %v3111 = vpack.c.b16 %v2584, %v2567
      %v3112 = vpack.c.b16 %v2585, %v2568
      %v3113 = vpack.c.b16 %v2586, %v2569
      %v3114 = vpack.c.b16 %v2587, %v2570
      %v3115 = vpack.c.b16 %v2588, %v2571
      %v3116 = vpack.c.b16 %v2589, %v2572
      %v3117 = vpack.c.b16 %v2590, %v2573
      %v3118 = vpack.c.b16 %v2591, %v2574
      %v3119 = vpack.c.b16 %v2592, %v2575
      %v3120 = vpack.c.b16 %v2593, %v2576
      %v3121 = vpack.c.b16 %v2594, %v2577
      %v3122 = vpack.c.b16 %v2595, %v2578
      %v3123 = vpack.c.b16 %v2596, %v2579
      %v3124 = vpack.c.b16 %v2597, %v2580
      %v3125 = vpack.c.b16 %v2598, %v2581
      %v3126 = vpack.c.b16 %v2599, %v2582
      %v3127 = vpack.c.b16 %v2617, %v2600
      %v3128 = vpack.c.b16 %v2618, %v2601
      %v3129 = vpack.c.b16 %v2619, %v2602
      %v3130 = vpack.c.b16 %v2620, %v2603
      %v3131 = vpack.c.b16 %v2621, %v2604
      %v3132 = vpack.c.b16 %v2622, %v2605
      %v3133 = vpack.c.b16 %v2623, %v2606
      %v3134 = vpack.c.b16 %v2624, %v2607
      %v3135 = vpack.c.b16 %v2625, %v2608
      %v3136 = vpack.c.b16 %v2626, %v2609
      %v3137 = vpack.c.b16 %v2627, %v2610
      %v3138 = vpack.c.b16 %v2628, %v2611
      %v3139 = vpack.c.b16 %v2629, %v2612
      %v3140 = vpack.c.b16 %v2630, %v2613
      %v3141 = vpack.c.b16 %v2631, %v2614
      %v3142 = vpack.c.b16 %v2632, %v2615
      %v3143 = vpack.c.b16 %v2633, %v2616
      %v3144 = vpack.c.b16 %v2651, %v2634
      %v3145 = vpack.c.b16 %v2652, %v2635
      %v3146 = vpack.c.b16 %v2653, %v2636
      %v3147 = vpack.c.b16 %v2654, %v2637
      %v3148 = vpack.c.b16 %v2655, %v2638
      %v3149 = vpack.c.b16 %v2656, %v2639
      %v3150 = vpack.c.b16 %v2657, %v2640
      %v3151 = vpack.c.b16 %v2658, %v2641
      %v3152 = vpack.c.b16 %v2659, %v2642
      %v3153 = vpack.c.b16 %v2660, %v2643
      %v3154 = vpack.c.b16 %v2661, %v2644
      %v3155 = vpack.c.b16 %v2662, %v2645
      %v3156 = vpack.c.b16 %v2663, %v2646
      %v3157 = vpack.c.b16 %v2664, %v2647
      %v3158 = vpack.c.b16 %v2665, %v2648
      %v3159 = vpack.c.b16 %v2666, %v2649
      %v3160 = vpack.c.b16 %v2667, %v2650
      %v3161 = vpack.c.b16 %v2685, %v2668
      %v3162 = vpack.c.b16 %v2686, %v2669
      %v3163 = vpack.c.b16 %v2687, %v2670
      %v3164 = vpack.c.b16 %v2688, %v2671
      %v3165 = vpack.c.b16 %v2689, %v2672
      %v3166 = vpack.c.b16 %v2690, %v2673
      %v3167 = vpack.c.b16 %v2691, %v2674
      %v3168 = vpack.c.b16 %v2692, %v2675
      %v3169 = vpack.c.b16 %v2693, %v2676
      %v3170 = vpack.c.b16 %v2694, %v2677
      %v3171 = vpack.c.b16 %v2695, %v2678
      %v3172 = vpack.c.b16 %v2696, %v2679
      %v3173 = vpack.c.b16 %v2697, %v2680
      %v3174 = vpack.c.b16 %v2698, %v2681
      %v3175 = vpack.c.b16 %v2699, %v2682
      %v3176 = vpack.c.b16 %v2700, %v2683
      %v3177 = vpack.c.b16 %v2701, %v2684
      %v3178 = vpack.c.b16 %v2719, %v2702
      %v3179 = vpack.c.b16 %v2720, %v2703
      %v3180 = vpack.c.b16 %v2721, %v2704
      %v3181 = vpack.c.b16 %v2722, %v2705
      %v3182 = vpack.c.b16 %v2723, %v2706
      %v3183 = vpack.c.b16 %v2724, %v2707
      %v3184 = vpack.c.b16 %v2725, %v2708
      %v3185 = vpack.c.b16 %v2726, %v2709
      %v3186 = vpack.c.b16 %v2727, %v2710
      %v3187 = vpack.c.b16 %v2728, %v2711
      %v3188 = vpack.c.b16 %v2729, %v2712
      %v3189 = vpack.c.b16 %v2730, %v2713
      %v3190 = vpack.c.b16 %v2731, %v2714
      %v3191 = vpack.c.b16 %v2732, %v2715
      %v3192 = vpack.c.b16 %v2733, %v2716
      %v3193 = vpack.c.b16 %v2734, %v2717
      %v3194 = vpack.c.b16 %v2735, %v2718
      %v3195 = vpack.c.b16 %v2753, %v2736
      %v3196 = vpack.c.b16 %v2754, %v2737
      %v3197 = vpack.c.b16 %v2755, %v2738
      %v3198 = vpack.c.b16 %v2756, %v2739
      %v3199 = vpack.c.b16 %v2757, %v2740
      %v3200 = vpack.c.b16 %v2758, %v2741
      %v3201 = vpack.c.b16 %v2759, %v2742
      %v3202 = vpack.c.b16 %v2760, %v2743
      %v3203 = vpack.c.b16 %v2761, %v2744
      %v3204 = vpack.c.b16 %v2762, %v2745
      %v3205 = vpack.c.b16 %v2763, %v2746
      %v3206 = vpack.c.b16 %v2764, %v2747
      %v3207 = vpack.c.b16 %v2765, %v2748
      %v3208 = vpack.c.b16 %v2766, %v2749
      %v3209 = vpack.c.b16 %v2767, %v2750
      %v3210 = vpack.c.b16 %v2768, %v2751
      %v3211 = vpack.c.b16 %v2769, %v2752
      %v3212 = vpack.c.b16 %v2787, %v2770
      %v3213 = vpack.c.b16 %v2788, %v2771
      %v3214 = vpack.c.b16 %v2789, %v2772
      %v3215 = vpack.c.b16 %v2790, %v2773
      %v3216 = vpack.c.b16 %v2791, %v2774
      %v3217 = vpack.c.b16 %v2792, %v2775
      %v3218 = vpack.c.b16 %v2793, %v2776
      %v3219 = vpack.c.b16 %v2794, %v2777
      %v3220 = vpack.c.b16 %v2795, %v2778
      %v3221 = vpack.c.b16 %v2796, %v2779
      %v3222 = vpack.c.b16 %v2797, %v2780
      %v3223 = vpack.c.b16 %v2798, %v2781
      %v3224 = vpack.c.b16 %v2799, %v2782
      %v3225 = vpack.c.b16 %v2800, %v2783
      %v3226 = vpack.c.b16 %v2801, %v2784
      %v3227 = vpack.c.b16 %v2802, %v2785
      %v3228 = vpack.c.b16 %v2803, %v2786
      %v3229 = vpack.c.b16 %v2821, %v2804
      %v3230 = vpack.c.b16 %v2822, %v2805
      %v3231 = vpack.c.b16 %v2823, %v2806
      %v3232 = vpack.c.b16 %v2824, %v2807
      %v3233 = vpack.c.b16 %v2825, %v2808
      %v3234 = vpack.c.b16 %v2826, %v2809
      %v3235 = vpack.c.b16 %v2827, %v2810
      %v3236 = vpack.c.b16 %v2828, %v2811
      %v3237 = vpack.c.b16 %v2829, %v2812
      %v3238 = vpack.c.b16 %v2830, %v2813
      %v3239 = vpack.c.b16 %v2831, %v2814
      %v3240 = vpack.c.b16 %v2832, %v2815
      %v3241 = vpack.c.b16 %v2833, %v2816
      %v3242 = vpack.c.b16 %v2834, %v2817
      %v3243 = vpack.c.b16 %v2835, %v2818
      %v3244 = vpack.c.b16 %v2836, %v2819
      %v3245 = vpack.c.b16 %v2837, %v2820
      %v3246 = vpack.c.b16 %v2855, %v2838
      %v3247 = vpack.c.b16 %v2856, %v2839
      %v3248 = vpack.c.b16 %v2857, %v2840
      %v3249 = vpack.c.b16 %v2858, %v2841
      %v3250 = vpack.c.b16 %v2859, %v2842
      %v3251 = vpack.c.b16 %v2860, %v2843
      %v3252 = vpack.c.b16 %v2861, %v2844
      %v3253 = vpack.c.b16 %v2862, %v2845
      %v3254 = vpack.c.b16 %v2863, %v2846
      %v3255 = vpack.c.b16 %v2864, %v2847
      %v3256 = vpack.c.b16 %v2865, %v2848
      %v3257 = vpack.c.b16 %v2866, %v2849
      %v3258 = vpack.c.b16 %v2867, %v2850
      %v3259 = vpack.c.b16 %v2868, %v2851
      %v3260 = vpack.c.b16 %v2869, %v2852
      %v3261 = vpack.c.b16 %v2870, %v2853
      %v3262 = vpack.c.b16 %v2871, %v2854
      %v3263 = vpack.c.b16 %v2889, %v2872
      %v3264 = vpack.c.b16 %v2890, %v2873
      %v3265 = vpack.c.b16 %v2891, %v2874
      %v3266 = vpack.c.b16 %v2892, %v2875
      %v3267 = vpack.c.b16 %v2893, %v2876
      %v3268 = vpack.c.b16 %v2894, %v2877
      %v3269 = vpack.c.b16 %v2895, %v2878
      %v3270 = vpack.c.b16 %v2896, %v2879
      %v3271 = vpack.c.b16 %v2897, %v2880
      %v3272 = vpack.c.b16 %v2898, %v2881
      %v3273 = vpack.c.b16 %v2899, %v2882
      %v3274 = vpack.c.b16 %v2900, %v2883
      %v3275 = vpack.c.b16 %v2901, %v2884
      %v3276 = vpack.c.b16 %v2902, %v2885
      %v3277 = vpack.c.b16 %v2903, %v2886
      %v3278 = vpack.c.b16 %v2904, %v2887
      %v3279 = vpack.c.b16 %v2905, %v2888
      %v3280 = vpack.c.b16 %v2923, %v2906
      %v3281 = vpack.c.b16 %v2924, %v2907
      %v3282 = vpack.c.b16 %v2925, %v2908
      %v3283 = vpack.c.b16 %v2926, %v2909
      %v3284 = vpack.c.b16 %v2927, %v2910
      %v3285 = vpack.c.b16 %v2928, %v2911
      %v3286 = vpack.c.b16 %v2929, %v2912
      %v3287 = vpack.c.b16 %v2930, %v2913
      %v3288 = vpack.c.b16 %v2931, %v2914
      %v3289 = vpack.c.b16 %v2932, %v2915
      %v3290 = vpack.c.b16 %v2933, %v2916
      %v3291 = vpack.c.b16 %v2934, %v2917
      %v3292 = vpack.c.b16 %v2935, %v2918
      %v3293 = vpack.c.b16 %v2936, %v2919
      %v3294 = vpack.c.b16 %v2937, %v2920
      %v3295 = vpack.c.b16 %v2938, %v2921
      %v3296 = vpack.c.b16 %v2939, %v2922
      %v3297 = vpack.c.b16 %v2957, %v2940
      %v3298 = vpack.c.b16 %v2958, %v2941
      %v3299 = vpack.c.b16 %v2959, %v2942
      %v3300 = vpack.c.b16 %v2960, %v2943
      %v3301 = vpack.c.b16 %v2961, %v2944
      %v3302 = vpack.c.b16 %v2962, %v2945
      %v3303 = vpack.c.b16 %v2963, %v2946
      %v3304 = vpack.c.b16 %v2964, %v2947
      %v3305 = vpack.c.b16 %v2965, %v2948
      %v3306 = vpack.c.b16 %v2966, %v2949
      %v3307 = vpack.c.b16 %v2967, %v2950
      %v3308 = vpack.c.b16 %v2968, %v2951
      %v3309 = vpack.c.b16 %v2969, %v2952
      %v3310 = vpack.c.b16 %v2970, %v2953
      %v3311 = vpack.c.b16 %v2971, %v2954
      %v3312 = vpack.c.b16 %v2972, %v2955
      %v3313 = vpack.c.b16 %v2973, %v2956
      %v3314 = vpack.c.b16 %v2991, %v2974
      %v3315 = vpack.c.b16 %v2992, %v2975
      %v3316 = vpack.c.b16 %v2993, %v2976
      %v3317 = vpack.c.b16 %v2994, %v2977
      %v3318 = vpack.c.b16 %v2995, %v2978
      %v3319 = vpack.c.b16 %v2996, %v2979
      %v3320 = vpack.c.b16 %v2997, %v2980
      %v3321 = vpack.c.b16 %v2998, %v2981
      %v3322 = vpack.c.b16 %v2999, %v2982
      %v3323 = vpack.c.b16 %v3000, %v2983
      %v3324 = vpack.c.b16 %v3001, %v2984
      %v3325 = vpack.c.b16 %v3002, %v2985
      %v3326 = vpack.c.b16 %v3003, %v2986
      %v3327 = vpack.c.b16 %v3004, %v2987
      %v3328 = vpack.c.b16 %v3005, %v2988
      %v3329 = vpack.c.b16 %v3006, %v2989
      %v3330 = vpack.c.b16 %v3007, %v2990
      %v3331 = vpack.c.b16 %v3025, %v3008
      %v3332 = vpack.c.b16 %v3026, %v3009
      %v3333 = vpack.c.b16 %v3027, %v3010
      %v3334 = vpack.c.b16 %v3028, %v3011
      %v3335 = vpack.c.b16 %v3029, %v3012
      %v3336 = vpack.c.b16 %v3030, %v3013
      %v3337 = vpack.c.b16 %v3031, %v3014
      %v3338 = vpack.c.b16 %v3032, %v3015
      %v3339 = vpack.c.b16 %v3033, %v3016
      %v3340 = vpack.c.b16 %v3034, %v3017
      %v3341 = vpack.c.b16 %v3035, %v3018
      %v3342 = vpack.c.b16 %v3036, %v3019
      %v3343 = vpack.c.b16 %v3037, %v3020
      %v3344 = vpack.c.b16 %v3038, %v3021
      %v3345 = vpack.c.b16 %v3039, %v3022
      %v3346 = vpack.c.b16 %v3040, %v3023
      %v3347 = vpack.c.b16 %v3041, %v3024
      %vm3654 = vcmask 261120
      %v3656 = vsel %vm3654, %v2103, 0
      %3658 = vmatpush.bf16.msra.mxu0 %v3161
      %3659 = vmatpush.bf16.msra.mxu0 %v3144
      %3660 = vmatpush.bf16.msra.mxu0 %v3127
      %3661 = vmatpush.bf16.msra.mxu0 %v3110
      %3662 = vmatpush.bf16.msra.mxu0 %v3093
      %3663 = vmatpush.bf16.msra.mxu0 %v3076
      %3664 = vmatpush.bf16.msra.mxu0 %v3059
      %3665 = vmatpush.bf16.msra.mxu0 %v3042
      %3666 = vmatmul.bf16.gmra.mxu0 %v2101
      %v3667 = vpop.f32.mrf.mxu0
      %v3668 = vadd.f32 %v2084, %v3667
      %v3669 = vpop.f32.mrf.mxu0
      %v3670 = vadd.f32 %v2089, %v3669
      %3671 = vdwg.mxu0
      %3672 = vmatpush.bf16.msra.mxu0 %v3297
      %3673 = vmatpush.bf16.msra.mxu0 %v3280
      %3674 = vmatpush.bf16.msra.mxu0 %v3263
      %3675 = vmatpush.bf16.msra.mxu0 %v3246
      %3676 = vmatpush.bf16.msra.mxu0 %v3229
      %3677 = vmatpush.bf16.msra.mxu0 %v3212
      %3678 = vmatpush.bf16.msra.mxu0 %v3195
      %3679 = vmatpush.bf16.msra.mxu0 %v3178
      %3680 = vmatmul.bf16.gmra.mxu0 %v2102
      %v3681 = vpop.f32.mrf.mxu0
      %v3682 = vadd.f32 %v3668, %v3681
      %v3683 = vpop.f32.mrf.mxu0
      %v3684 = vadd.f32 %v3670, %v3683
      %3685 = vdwg.mxu0
      %3686 = vmatpush.bf16.msra.mxu0 0
      %3687 = vmatpush.bf16.msra.mxu0 0
      %3688 = vmatpush.bf16.msra.mxu0 0
      %3689 = vmatpush.bf16.msra.mxu0 0
      %3690 = vmatpush.bf16.msra.mxu0 0
      %3691 = vmatpush.bf16.msra.mxu0 0
      %3692 = vmatpush.bf16.msra.mxu0 %v3331
      %3693 = vmatpush.bf16.msra.mxu0 %v3314
      %3694 = vmatmul.bf16.gmra.mxu0 %v3656
      %v3695 = vpop.f32.mrf.mxu0
      %v3696 = vadd.f32 %v3682, %v3695
      %v3697 = vpop.f32.mrf.mxu0
      %v3698 = vadd.f32 %v3684, %v3697
      %3699 = vdwg.mxu0
      %3700 = vmatpush.bf16.msra.mxu0 %v3162
      %3701 = vmatpush.bf16.msra.mxu0 %v3145
      %3702 = vmatpush.bf16.msra.mxu0 %v3128
      %3703 = vmatpush.bf16.msra.mxu0 %v3111
      %3704 = vmatpush.bf16.msra.mxu0 %v3094
      %3705 = vmatpush.bf16.msra.mxu0 %v3077
      %3706 = vmatpush.bf16.msra.mxu0 %v3060
      %3707 = vmatpush.bf16.msra.mxu0 %v3043
      %3708 = vmatmul.bf16.gmra.mxu0 %v2101
      %v3709 = vpop.f32.mrf.mxu0
      %v3710 = vadd.f32 %v2084, %v3709
      %v3711 = vpop.f32.mrf.mxu0
      %v3712 = vadd.f32 %v2089, %v3711
      %3713 = vdwg.mxu0
      %3714 = vmatpush.bf16.msra.mxu0 %v3298
      %3715 = vmatpush.bf16.msra.mxu0 %v3281
      %3716 = vmatpush.bf16.msra.mxu0 %v3264
      %3717 = vmatpush.bf16.msra.mxu0 %v3247
      %3718 = vmatpush.bf16.msra.mxu0 %v3230
      %3719 = vmatpush.bf16.msra.mxu0 %v3213
      %3720 = vmatpush.bf16.msra.mxu0 %v3196
      %3721 = vmatpush.bf16.msra.mxu0 %v3179
      %3722 = vmatmul.bf16.gmra.mxu0 %v2102
      %v3723 = vpop.f32.mrf.mxu0
      %v3724 = vadd.f32 %v3710, %v3723
      %v3725 = vpop.f32.mrf.mxu0
      %v3726 = vadd.f32 %v3712, %v3725
      %3727 = vdwg.mxu0
      %3728 = vmatpush.bf16.msra.mxu0 0
      %3729 = vmatpush.bf16.msra.mxu0 0
      %3730 = vmatpush.bf16.msra.mxu0 0
      %3731 = vmatpush.bf16.msra.mxu0 0
      %3732 = vmatpush.bf16.msra.mxu0 0
      %3733 = vmatpush.bf16.msra.mxu0 0
      %3734 = vmatpush.bf16.msra.mxu0 %v3332
      %3735 = vmatpush.bf16.msra.mxu0 %v3315
      %3736 = vmatmul.bf16.gmra.mxu0 %v3656
      %v3737 = vpop.f32.mrf.mxu0
      %v3738 = vadd.f32 %v3724, %v3737
      %v3739 = vpop.f32.mrf.mxu0
      %v3740 = vadd.f32 %v3726, %v3739
      %3741 = vdwg.mxu0
      %3742 = vmatpush.bf16.msra.mxu0 %v3163
      %3743 = vmatpush.bf16.msra.mxu0 %v3146
      %3744 = vmatpush.bf16.msra.mxu0 %v3129
      %3745 = vmatpush.bf16.msra.mxu0 %v3112
      %3746 = vmatpush.bf16.msra.mxu0 %v3095
      %3747 = vmatpush.bf16.msra.mxu0 %v3078
      %3748 = vmatpush.bf16.msra.mxu0 %v3061
      %3749 = vmatpush.bf16.msra.mxu0 %v3044
      %3750 = vmatmul.bf16.gmra.mxu0 %v2101
      %v3751 = vpop.f32.mrf.mxu0
      %v3752 = vadd.f32 %v2084, %v3751
      %v3753 = vpop.f32.mrf.mxu0
      %v3754 = vadd.f32 %v2089, %v3753
      %3755 = vdwg.mxu0
      %3756 = vmatpush.bf16.msra.mxu0 %v3299
      %3757 = vmatpush.bf16.msra.mxu0 %v3282
      %3758 = vmatpush.bf16.msra.mxu0 %v3265
      %3759 = vmatpush.bf16.msra.mxu0 %v3248
      %3760 = vmatpush.bf16.msra.mxu0 %v3231
      %3761 = vmatpush.bf16.msra.mxu0 %v3214
      %3762 = vmatpush.bf16.msra.mxu0 %v3197
      %3763 = vmatpush.bf16.msra.mxu0 %v3180
      %3764 = vmatmul.bf16.gmra.mxu0 %v2102
      %v3765 = vpop.f32.mrf.mxu0
      %v3766 = vadd.f32 %v3752, %v3765
      %v3767 = vpop.f32.mrf.mxu0
      %v3768 = vadd.f32 %v3754, %v3767
      %3769 = vdwg.mxu0
      %3770 = vmatpush.bf16.msra.mxu0 0
      %3771 = vmatpush.bf16.msra.mxu0 0
      %3772 = vmatpush.bf16.msra.mxu0 0
      %3773 = vmatpush.bf16.msra.mxu0 0
      %3774 = vmatpush.bf16.msra.mxu0 0
      %3775 = vmatpush.bf16.msra.mxu0 0
      %3776 = vmatpush.bf16.msra.mxu0 %v3333
      %3777 = vmatpush.bf16.msra.mxu0 %v3316
      %3778 = vmatmul.bf16.gmra.mxu0 %v3656
      %v3779 = vpop.f32.mrf.mxu0
      %v3780 = vadd.f32 %v3766, %v3779
      %v3781 = vpop.f32.mrf.mxu0
      %v3782 = vadd.f32 %v3768, %v3781
      %3783 = vdwg.mxu0
      %3784 = vmatpush.bf16.msra.mxu0 %v3164
      %3785 = vmatpush.bf16.msra.mxu0 %v3147
      %3786 = vmatpush.bf16.msra.mxu0 %v3130
      %3787 = vmatpush.bf16.msra.mxu0 %v3113
      %3788 = vmatpush.bf16.msra.mxu0 %v3096
      %3789 = vmatpush.bf16.msra.mxu0 %v3079
      %3790 = vmatpush.bf16.msra.mxu0 %v3062
      %3791 = vmatpush.bf16.msra.mxu0 %v3045
      %3792 = vmatmul.bf16.gmra.mxu0 %v2101
      %v3793 = vpop.f32.mrf.mxu0
      %v3794 = vadd.f32 %v2084, %v3793
      %v3795 = vpop.f32.mrf.mxu0
      %v3796 = vadd.f32 %v2089, %v3795
      %3797 = vdwg.mxu0
      %3798 = vmatpush.bf16.msra.mxu0 %v3300
      %3799 = vmatpush.bf16.msra.mxu0 %v3283
      %3800 = vmatpush.bf16.msra.mxu0 %v3266
      %3801 = vmatpush.bf16.msra.mxu0 %v3249
      %3802 = vmatpush.bf16.msra.mxu0 %v3232
      %3803 = vmatpush.bf16.msra.mxu0 %v3215
      %3804 = vmatpush.bf16.msra.mxu0 %v3198
      %3805 = vmatpush.bf16.msra.mxu0 %v3181
      %3806 = vmatmul.bf16.gmra.mxu0 %v2102
      %v3807 = vpop.f32.mrf.mxu0
      %v3808 = vadd.f32 %v3794, %v3807
      %v3809 = vpop.f32.mrf.mxu0
      %v3810 = vadd.f32 %v3796, %v3809
      %3811 = vdwg.mxu0
      %3812 = vmatpush.bf16.msra.mxu0 0
      %3813 = vmatpush.bf16.msra.mxu0 0
      %3814 = vmatpush.bf16.msra.mxu0 0
      %3815 = vmatpush.bf16.msra.mxu0 0
      %3816 = vmatpush.bf16.msra.mxu0 0
      %3817 = vmatpush.bf16.msra.mxu0 0
      %3818 = vmatpush.bf16.msra.mxu0 %v3334
      %3819 = vmatpush.bf16.msra.mxu0 %v3317
      %3820 = vmatmul.bf16.gmra.mxu0 %v3656
      %v3821 = vpop.f32.mrf.mxu0
      %v3822 = vadd.f32 %v3808, %v3821
      %v3823 = vpop.f32.mrf.mxu0
      %v3824 = vadd.f32 %v3810, %v3823
      %3825 = vdwg.mxu0
      %3826 = vmatpush.bf16.msra.mxu0 %v3165
      %3827 = vmatpush.bf16.msra.mxu0 %v3148
      %3828 = vmatpush.bf16.msra.mxu0 %v3131
      %3829 = vmatpush.bf16.msra.mxu0 %v3114
      %3830 = vmatpush.bf16.msra.mxu0 %v3097
      %3831 = vmatpush.bf16.msra.mxu0 %v3080
      %3832 = vmatpush.bf16.msra.mxu0 %v3063
      %3833 = vmatpush.bf16.msra.mxu0 %v3046
      %3834 = vmatmul.bf16.gmra.mxu0 %v2101
      %v3835 = vpop.f32.mrf.mxu0
      %v3836 = vadd.f32 %v2084, %v3835
      %v3837 = vpop.f32.mrf.mxu0
      %v3838 = vadd.f32 %v2089, %v3837
      %3839 = vdwg.mxu0
      %3840 = vmatpush.bf16.msra.mxu0 %v3301
      %3841 = vmatpush.bf16.msra.mxu0 %v3284
      %3842 = vmatpush.bf16.msra.mxu0 %v3267
      %3843 = vmatpush.bf16.msra.mxu0 %v3250
      %3844 = vmatpush.bf16.msra.mxu0 %v3233
      %3845 = vmatpush.bf16.msra.mxu0 %v3216
      %3846 = vmatpush.bf16.msra.mxu0 %v3199
      %3847 = vmatpush.bf16.msra.mxu0 %v3182
      %3848 = vmatmul.bf16.gmra.mxu0 %v2102
      %v3849 = vpop.f32.mrf.mxu0
      %v3850 = vadd.f32 %v3836, %v3849
      %v3851 = vpop.f32.mrf.mxu0
      %v3852 = vadd.f32 %v3838, %v3851
      %3853 = vdwg.mxu0
      %3854 = vmatpush.bf16.msra.mxu0 0
      %3855 = vmatpush.bf16.msra.mxu0 0
      %3856 = vmatpush.bf16.msra.mxu0 0
      %3857 = vmatpush.bf16.msra.mxu0 0
      %3858 = vmatpush.bf16.msra.mxu0 0
      %3859 = vmatpush.bf16.msra.mxu0 0
      %3860 = vmatpush.bf16.msra.mxu0 %v3335
      %3861 = vmatpush.bf16.msra.mxu0 %v3318
      %3862 = vmatmul.bf16.gmra.mxu0 %v3656
      %v3863 = vpop.f32.mrf.mxu0
      %v3864 = vadd.f32 %v3850, %v3863
      %v3865 = vpop.f32.mrf.mxu0
      %v3866 = vadd.f32 %v3852, %v3865
      %3867 = vdwg.mxu0
      %3868 = vmatpush.bf16.msra.mxu0 %v3166
      %3869 = vmatpush.bf16.msra.mxu0 %v3149
      %3870 = vmatpush.bf16.msra.mxu0 %v3132
      %3871 = vmatpush.bf16.msra.mxu0 %v3115
      %3872 = vmatpush.bf16.msra.mxu0 %v3098
      %3873 = vmatpush.bf16.msra.mxu0 %v3081
      %3874 = vmatpush.bf16.msra.mxu0 %v3064
      %3875 = vmatpush.bf16.msra.mxu0 %v3047
      %3876 = vmatmul.bf16.gmra.mxu0 %v2101
      %v3877 = vpop.f32.mrf.mxu0
      %v3878 = vadd.f32 %v2084, %v3877
      %v3879 = vpop.f32.mrf.mxu0
      %v3880 = vadd.f32 %v2089, %v3879
      %3881 = vdwg.mxu0
      %3882 = vmatpush.bf16.msra.mxu0 %v3302
      %3883 = vmatpush.bf16.msra.mxu0 %v3285
      %3884 = vmatpush.bf16.msra.mxu0 %v3268
      %3885 = vmatpush.bf16.msra.mxu0 %v3251
      %3886 = vmatpush.bf16.msra.mxu0 %v3234
      %3887 = vmatpush.bf16.msra.mxu0 %v3217
      %3888 = vmatpush.bf16.msra.mxu0 %v3200
      %3889 = vmatpush.bf16.msra.mxu0 %v3183
      %3890 = vmatmul.bf16.gmra.mxu0 %v2102
      %v3891 = vpop.f32.mrf.mxu0
      %v3892 = vadd.f32 %v3878, %v3891
      %v3893 = vpop.f32.mrf.mxu0
      %v3894 = vadd.f32 %v3880, %v3893
      %3895 = vdwg.mxu0
      %3896 = vmatpush.bf16.msra.mxu0 0
      %3897 = vmatpush.bf16.msra.mxu0 0
      %3898 = vmatpush.bf16.msra.mxu0 0
      %3899 = vmatpush.bf16.msra.mxu0 0
      %3900 = vmatpush.bf16.msra.mxu0 0
      %3901 = vmatpush.bf16.msra.mxu0 0
      %3902 = vmatpush.bf16.msra.mxu0 %v3336
      %3903 = vmatpush.bf16.msra.mxu0 %v3319
      %3904 = vmatmul.bf16.gmra.mxu0 %v3656
      %v3905 = vpop.f32.mrf.mxu0
      %v3906 = vadd.f32 %v3892, %v3905
      %v3907 = vpop.f32.mrf.mxu0
      %v3908 = vadd.f32 %v3894, %v3907
      %3909 = vdwg.mxu0
      %3910 = vmatpush.bf16.msra.mxu0 %v3167
      %3911 = vmatpush.bf16.msra.mxu0 %v3150
      %3912 = vmatpush.bf16.msra.mxu0 %v3133
      %3913 = vmatpush.bf16.msra.mxu0 %v3116
      %3914 = vmatpush.bf16.msra.mxu0 %v3099
      %3915 = vmatpush.bf16.msra.mxu0 %v3082
      %3916 = vmatpush.bf16.msra.mxu0 %v3065
      %3917 = vmatpush.bf16.msra.mxu0 %v3048
      %3918 = vmatmul.bf16.gmra.mxu0 %v2101
      %v3919 = vpop.f32.mrf.mxu0
      %v3920 = vadd.f32 %v2084, %v3919
      %v3921 = vpop.f32.mrf.mxu0
      %v3922 = vadd.f32 %v2089, %v3921
      %3923 = vdwg.mxu0
      %3924 = vmatpush.bf16.msra.mxu0 %v3303
      %3925 = vmatpush.bf16.msra.mxu0 %v3286
      %3926 = vmatpush.bf16.msra.mxu0 %v3269
      %3927 = vmatpush.bf16.msra.mxu0 %v3252
      %3928 = vmatpush.bf16.msra.mxu0 %v3235
      %3929 = vmatpush.bf16.msra.mxu0 %v3218
      %3930 = vmatpush.bf16.msra.mxu0 %v3201
      %3931 = vmatpush.bf16.msra.mxu0 %v3184
      %3932 = vmatmul.bf16.gmra.mxu0 %v2102
      %v3933 = vpop.f32.mrf.mxu0
      %v3934 = vadd.f32 %v3920, %v3933
      %v3935 = vpop.f32.mrf.mxu0
      %v3936 = vadd.f32 %v3922, %v3935
      %3937 = vdwg.mxu0
      %3938 = vmatpush.bf16.msra.mxu0 0
      %3939 = vmatpush.bf16.msra.mxu0 0
      %3940 = vmatpush.bf16.msra.mxu0 0
      %3941 = vmatpush.bf16.msra.mxu0 0
      %3942 = vmatpush.bf16.msra.mxu0 0
      %3943 = vmatpush.bf16.msra.mxu0 0
      %3944 = vmatpush.bf16.msra.mxu0 %v3337
      %3945 = vmatpush.bf16.msra.mxu0 %v3320
      %3946 = vmatmul.bf16.gmra.mxu0 %v3656
      %v3947 = vpop.f32.mrf.mxu0
      %v3948 = vadd.f32 %v3934, %v3947
      %v3949 = vpop.f32.mrf.mxu0
      %v3950 = vadd.f32 %v3936, %v3949
      %3951 = vdwg.mxu0
      %3952 = vmatpush.bf16.msra.mxu0 %v3168
      %3953 = vmatpush.bf16.msra.mxu0 %v3151
      %3954 = vmatpush.bf16.msra.mxu0 %v3134
      %3955 = vmatpush.bf16.msra.mxu0 %v3117
      %3956 = vmatpush.bf16.msra.mxu0 %v3100
      %3957 = vmatpush.bf16.msra.mxu0 %v3083
      %3958 = vmatpush.bf16.msra.mxu0 %v3066
      %3959 = vmatpush.bf16.msra.mxu0 %v3049
      %3960 = vmatmul.bf16.gmra.mxu0 %v2101
      %v3961 = vpop.f32.mrf.mxu0
      %v3962 = vadd.f32 %v2084, %v3961
      %v3963 = vpop.f32.mrf.mxu0
      %v3964 = vadd.f32 %v2089, %v3963
      %3965 = vdwg.mxu0
      %3966 = vmatpush.bf16.msra.mxu0 %v3304
      %3967 = vmatpush.bf16.msra.mxu0 %v3287
      %3968 = vmatpush.bf16.msra.mxu0 %v3270
      %3969 = vmatpush.bf16.msra.mxu0 %v3253
      %3970 = vmatpush.bf16.msra.mxu0 %v3236
      %3971 = vmatpush.bf16.msra.mxu0 %v3219
      %3972 = vmatpush.bf16.msra.mxu0 %v3202
      %3973 = vmatpush.bf16.msra.mxu0 %v3185
      %3974 = vmatmul.bf16.gmra.mxu0 %v2102
      %v3975 = vpop.f32.mrf.mxu0
      %v3976 = vadd.f32 %v3962, %v3975
      %v3977 = vpop.f32.mrf.mxu0
      %v3978 = vadd.f32 %v3964, %v3977
      %3979 = vdwg.mxu0
      %3980 = vmatpush.bf16.msra.mxu0 0
      %3981 = vmatpush.bf16.msra.mxu0 0
      %3982 = vmatpush.bf16.msra.mxu0 0
      %3983 = vmatpush.bf16.msra.mxu0 0
      %3984 = vmatpush.bf16.msra.mxu0 0
      %3985 = vmatpush.bf16.msra.mxu0 0
      %3986 = vmatpush.bf16.msra.mxu0 %v3338
      %3987 = vmatpush.bf16.msra.mxu0 %v3321
      %3988 = vmatmul.bf16.gmra.mxu0 %v3656
      %v3989 = vpop.f32.mrf.mxu0
      %v3990 = vadd.f32 %v3976, %v3989
      %v3991 = vpop.f32.mrf.mxu0
      %v3992 = vadd.f32 %v3978, %v3991
      %3993 = vdwg.mxu0
      %3994 = vmatpush.bf16.msra.mxu0 %v3169
      %3995 = vmatpush.bf16.msra.mxu0 %v3152
      %3996 = vmatpush.bf16.msra.mxu0 %v3135
      %3997 = vmatpush.bf16.msra.mxu0 %v3118
      %3998 = vmatpush.bf16.msra.mxu0 %v3101
      %3999 = vmatpush.bf16.msra.mxu0 %v3084
      %4000 = vmatpush.bf16.msra.mxu0 %v3067
      %4001 = vmatpush.bf16.msra.mxu0 %v3050
      %4002 = vmatmul.bf16.gmra.mxu0 %v2101
      %v4003 = vpop.f32.mrf.mxu0
      %v4004 = vadd.f32 %v2084, %v4003
      %v4005 = vpop.f32.mrf.mxu0
      %v4006 = vadd.f32 %v2089, %v4005
      %4007 = vdwg.mxu0
      %4008 = vmatpush.bf16.msra.mxu0 %v3305
      %4009 = vmatpush.bf16.msra.mxu0 %v3288
      %4010 = vmatpush.bf16.msra.mxu0 %v3271
      %4011 = vmatpush.bf16.msra.mxu0 %v3254
      %4012 = vmatpush.bf16.msra.mxu0 %v3237
      %4013 = vmatpush.bf16.msra.mxu0 %v3220
      %4014 = vmatpush.bf16.msra.mxu0 %v3203
      %4015 = vmatpush.bf16.msra.mxu0 %v3186
      %4016 = vmatmul.bf16.gmra.mxu0 %v2102
      %v4017 = vpop.f32.mrf.mxu0
      %v4018 = vadd.f32 %v4004, %v4017
      %v4019 = vpop.f32.mrf.mxu0
      %v4020 = vadd.f32 %v4006, %v4019
      %4021 = vdwg.mxu0
      %4022 = vmatpush.bf16.msra.mxu0 0
      %4023 = vmatpush.bf16.msra.mxu0 0
      %4024 = vmatpush.bf16.msra.mxu0 0
      %4025 = vmatpush.bf16.msra.mxu0 0
      %4026 = vmatpush.bf16.msra.mxu0 0
      %4027 = vmatpush.bf16.msra.mxu0 0
      %4028 = vmatpush.bf16.msra.mxu0 %v3339
      %4029 = vmatpush.bf16.msra.mxu0 %v3322
      %4030 = vmatmul.bf16.gmra.mxu0 %v3656
      %v4031 = vpop.f32.mrf.mxu0
      %v4032 = vadd.f32 %v4018, %v4031
      %v4033 = vpop.f32.mrf.mxu0
      %v4034 = vadd.f32 %v4020, %v4033
      %4035 = vdwg.mxu0
      %4036 = vmatpush.bf16.msra.mxu0 %v3170
      %4037 = vmatpush.bf16.msra.mxu0 %v3153
      %4038 = vmatpush.bf16.msra.mxu0 %v3136
      %4039 = vmatpush.bf16.msra.mxu0 %v3119
      %4040 = vmatpush.bf16.msra.mxu0 %v3102
      %4041 = vmatpush.bf16.msra.mxu0 %v3085
      %4042 = vmatpush.bf16.msra.mxu0 %v3068
      %4043 = vmatpush.bf16.msra.mxu0 %v3051
      %4044 = vmatmul.bf16.gmra.mxu0 %v2101
      %v4045 = vpop.f32.mrf.mxu0
      %v4046 = vadd.f32 %v2084, %v4045
      %v4047 = vpop.f32.mrf.mxu0
      %v4048 = vadd.f32 %v2089, %v4047
      %4049 = vdwg.mxu0
      %4050 = vmatpush.bf16.msra.mxu0 %v3306
      %4051 = vmatpush.bf16.msra.mxu0 %v3289
      %4052 = vmatpush.bf16.msra.mxu0 %v3272
      %4053 = vmatpush.bf16.msra.mxu0 %v3255
      %4054 = vmatpush.bf16.msra.mxu0 %v3238
      %4055 = vmatpush.bf16.msra.mxu0 %v3221
      %4056 = vmatpush.bf16.msra.mxu0 %v3204
      %4057 = vmatpush.bf16.msra.mxu0 %v3187
      %4058 = vmatmul.bf16.gmra.mxu0 %v2102
      %v4059 = vpop.f32.mrf.mxu0
      %v4060 = vadd.f32 %v4046, %v4059
      %v4061 = vpop.f32.mrf.mxu0
      %v4062 = vadd.f32 %v4048, %v4061
      %4063 = vdwg.mxu0
      %4064 = vmatpush.bf16.msra.mxu0 0
      %4065 = vmatpush.bf16.msra.mxu0 0
      %4066 = vmatpush.bf16.msra.mxu0 0
      %4067 = vmatpush.bf16.msra.mxu0 0
      %4068 = vmatpush.bf16.msra.mxu0 0
      %4069 = vmatpush.bf16.msra.mxu0 0
      %4070 = vmatpush.bf16.msra.mxu0 %v3340
      %4071 = vmatpush.bf16.msra.mxu0 %v3323
      %4072 = vmatmul.bf16.gmra.mxu0 %v3656
      %v4073 = vpop.f32.mrf.mxu0
      %v4074 = vadd.f32 %v4060, %v4073
      %v4075 = vpop.f32.mrf.mxu0
      %v4076 = vadd.f32 %v4062, %v4075
      %4077 = vdwg.mxu0
      %4078 = vmatpush.bf16.msra.mxu0 %v3171
      %4079 = vmatpush.bf16.msra.mxu0 %v3154
      %4080 = vmatpush.bf16.msra.mxu0 %v3137
      %4081 = vmatpush.bf16.msra.mxu0 %v3120
      %4082 = vmatpush.bf16.msra.mxu0 %v3103
      %4083 = vmatpush.bf16.msra.mxu0 %v3086
      %4084 = vmatpush.bf16.msra.mxu0 %v3069
      %4085 = vmatpush.bf16.msra.mxu0 %v3052
      %4086 = vmatmul.bf16.gmra.mxu0 %v2101
      %v4087 = vpop.f32.mrf.mxu0
      %v4088 = vadd.f32 %v2084, %v4087
      %v4089 = vpop.f32.mrf.mxu0
      %v4090 = vadd.f32 %v2089, %v4089
      %4091 = vdwg.mxu0
      %4092 = vmatpush.bf16.msra.mxu0 %v3307
      %4093 = vmatpush.bf16.msra.mxu0 %v3290
      %4094 = vmatpush.bf16.msra.mxu0 %v3273
      %4095 = vmatpush.bf16.msra.mxu0 %v3256
      %4096 = vmatpush.bf16.msra.mxu0 %v3239
      %4097 = vmatpush.bf16.msra.mxu0 %v3222
      %4098 = vmatpush.bf16.msra.mxu0 %v3205
      %4099 = vmatpush.bf16.msra.mxu0 %v3188
      %4100 = vmatmul.bf16.gmra.mxu0 %v2102
      %v4101 = vpop.f32.mrf.mxu0
      %v4102 = vadd.f32 %v4088, %v4101
      %v4103 = vpop.f32.mrf.mxu0
      %v4104 = vadd.f32 %v4090, %v4103
      %4105 = vdwg.mxu0
      %4106 = vmatpush.bf16.msra.mxu0 0
      %4107 = vmatpush.bf16.msra.mxu0 0
      %4108 = vmatpush.bf16.msra.mxu0 0
      %4109 = vmatpush.bf16.msra.mxu0 0
      %4110 = vmatpush.bf16.msra.mxu0 0
      %4111 = vmatpush.bf16.msra.mxu0 0
      %4112 = vmatpush.bf16.msra.mxu0 %v3341
      %4113 = vmatpush.bf16.msra.mxu0 %v3324
      %4114 = vmatmul.bf16.gmra.mxu0 %v3656
      %v4115 = vpop.f32.mrf.mxu0
      %v4116 = vadd.f32 %v4102, %v4115
      %v4117 = vpop.f32.mrf.mxu0
      %v4118 = vadd.f32 %v4104, %v4117
      %4119 = vdwg.mxu0
      %4120 = vmatpush.bf16.msra.mxu0 %v3172
      %4121 = vmatpush.bf16.msra.mxu0 %v3155
      %4122 = vmatpush.bf16.msra.mxu0 %v3138
      %4123 = vmatpush.bf16.msra.mxu0 %v3121
      %4124 = vmatpush.bf16.msra.mxu0 %v3104
      %4125 = vmatpush.bf16.msra.mxu0 %v3087
      %4126 = vmatpush.bf16.msra.mxu0 %v3070
      %4127 = vmatpush.bf16.msra.mxu0 %v3053
      %4128 = vmatmul.bf16.gmra.mxu0 %v2101
      %v4129 = vpop.f32.mrf.mxu0
      %v4130 = vadd.f32 %v2084, %v4129
      %v4131 = vpop.f32.mrf.mxu0
      %v4132 = vadd.f32 %v2089, %v4131
      %4133 = vdwg.mxu0
      %4134 = vmatpush.bf16.msra.mxu0 %v3308
      %4135 = vmatpush.bf16.msra.mxu0 %v3291
      %4136 = vmatpush.bf16.msra.mxu0 %v3274
      %4137 = vmatpush.bf16.msra.mxu0 %v3257
      %4138 = vmatpush.bf16.msra.mxu0 %v3240
      %4139 = vmatpush.bf16.msra.mxu0 %v3223
      %4140 = vmatpush.bf16.msra.mxu0 %v3206
      %4141 = vmatpush.bf16.msra.mxu0 %v3189
      %4142 = vmatmul.bf16.gmra.mxu0 %v2102
      %v4143 = vpop.f32.mrf.mxu0
      %v4144 = vadd.f32 %v4130, %v4143
      %v4145 = vpop.f32.mrf.mxu0
      %v4146 = vadd.f32 %v4132, %v4145
      %4147 = vdwg.mxu0
      %4148 = vmatpush.bf16.msra.mxu0 0
      %4149 = vmatpush.bf16.msra.mxu0 0
      %4150 = vmatpush.bf16.msra.mxu0 0
      %4151 = vmatpush.bf16.msra.mxu0 0
      %4152 = vmatpush.bf16.msra.mxu0 0
      %4153 = vmatpush.bf16.msra.mxu0 0
      %4154 = vmatpush.bf16.msra.mxu0 %v3342
      %4155 = vmatpush.bf16.msra.mxu0 %v3325
      %4156 = vmatmul.bf16.gmra.mxu0 %v3656
      %v4157 = vpop.f32.mrf.mxu0
      %v4158 = vadd.f32 %v4144, %v4157
      %v4159 = vpop.f32.mrf.mxu0
      %v4160 = vadd.f32 %v4146, %v4159
      %4161 = vdwg.mxu0
      %4162 = vmatpush.bf16.msra.mxu0 %v3173
      %4163 = vmatpush.bf16.msra.mxu0 %v3156
      %4164 = vmatpush.bf16.msra.mxu0 %v3139
      %4165 = vmatpush.bf16.msra.mxu0 %v3122
      %4166 = vmatpush.bf16.msra.mxu0 %v3105
      %4167 = vmatpush.bf16.msra.mxu0 %v3088
      %4168 = vmatpush.bf16.msra.mxu0 %v3071
      %4169 = vmatpush.bf16.msra.mxu0 %v3054
      %4170 = vmatmul.bf16.gmra.mxu0 %v2101
      %v4171 = vpop.f32.mrf.mxu0
      %v4172 = vadd.f32 %v2084, %v4171
      %v4173 = vpop.f32.mrf.mxu0
      %v4174 = vadd.f32 %v2089, %v4173
      %4175 = vdwg.mxu0
      %4176 = vmatpush.bf16.msra.mxu0 %v3309
      %4177 = vmatpush.bf16.msra.mxu0 %v3292
      %4178 = vmatpush.bf16.msra.mxu0 %v3275
      %4179 = vmatpush.bf16.msra.mxu0 %v3258
      %4180 = vmatpush.bf16.msra.mxu0 %v3241
      %4181 = vmatpush.bf16.msra.mxu0 %v3224
      %4182 = vmatpush.bf16.msra.mxu0 %v3207
      %4183 = vmatpush.bf16.msra.mxu0 %v3190
      %4184 = vmatmul.bf16.gmra.mxu0 %v2102
      %v4185 = vpop.f32.mrf.mxu0
      %v4186 = vadd.f32 %v4172, %v4185
      %v4187 = vpop.f32.mrf.mxu0
      %v4188 = vadd.f32 %v4174, %v4187
      %4189 = vdwg.mxu0
      %4190 = vmatpush.bf16.msra.mxu0 0
      %4191 = vmatpush.bf16.msra.mxu0 0
      %4192 = vmatpush.bf16.msra.mxu0 0
      %4193 = vmatpush.bf16.msra.mxu0 0
      %4194 = vmatpush.bf16.msra.mxu0 0
      %4195 = vmatpush.bf16.msra.mxu0 0
      %4196 = vmatpush.bf16.msra.mxu0 %v3343
      %4197 = vmatpush.bf16.msra.mxu0 %v3326
      %4198 = vmatmul.bf16.gmra.mxu0 %v3656
      %v4199 = vpop.f32.mrf.mxu0
      %v4200 = vadd.f32 %v4186, %v4199
      %v4201 = vpop.f32.mrf.mxu0
      %v4202 = vadd.f32 %v4188, %v4201
      %4203 = vdwg.mxu0
      %4204 = vmatpush.bf16.msra.mxu0 %v3174
      %4205 = vmatpush.bf16.msra.mxu0 %v3157
      %4206 = vmatpush.bf16.msra.mxu0 %v3140
      %4207 = vmatpush.bf16.msra.mxu0 %v3123
      %4208 = vmatpush.bf16.msra.mxu0 %v3106
      %4209 = vmatpush.bf16.msra.mxu0 %v3089
      %4210 = vmatpush.bf16.msra.mxu0 %v3072
      %4211 = vmatpush.bf16.msra.mxu0 %v3055
      %4212 = vmatmul.bf16.gmra.mxu0 %v2101
      %v4213 = vpop.f32.mrf.mxu0
      %v4214 = vadd.f32 %v2084, %v4213
      %v4215 = vpop.f32.mrf.mxu0
      %v4216 = vadd.f32 %v2089, %v4215
      %4217 = vdwg.mxu0
      %4218 = vmatpush.bf16.msra.mxu0 %v3310
      %4219 = vmatpush.bf16.msra.mxu0 %v3293
      %4220 = vmatpush.bf16.msra.mxu0 %v3276
      %4221 = vmatpush.bf16.msra.mxu0 %v3259
      %4222 = vmatpush.bf16.msra.mxu0 %v3242
      %4223 = vmatpush.bf16.msra.mxu0 %v3225
      %4224 = vmatpush.bf16.msra.mxu0 %v3208
      %4225 = vmatpush.bf16.msra.mxu0 %v3191
      %4226 = vmatmul.bf16.gmra.mxu0 %v2102
      %v4227 = vpop.f32.mrf.mxu0
      %v4228 = vadd.f32 %v4214, %v4227
      %v4229 = vpop.f32.mrf.mxu0
      %v4230 = vadd.f32 %v4216, %v4229
      %4231 = vdwg.mxu0
      %4232 = vmatpush.bf16.msra.mxu0 0
      %4233 = vmatpush.bf16.msra.mxu0 0
      %4234 = vmatpush.bf16.msra.mxu0 0
      %4235 = vmatpush.bf16.msra.mxu0 0
      %4236 = vmatpush.bf16.msra.mxu0 0
      %4237 = vmatpush.bf16.msra.mxu0 0
      %4238 = vmatpush.bf16.msra.mxu0 %v3344
      %4239 = vmatpush.bf16.msra.mxu0 %v3327
      %4240 = vmatmul.bf16.gmra.mxu0 %v3656
      %v4241 = vpop.f32.mrf.mxu0
      %v4242 = vadd.f32 %v4228, %v4241
      %v4243 = vpop.f32.mrf.mxu0
      %v4244 = vadd.f32 %v4230, %v4243
      %4245 = vdwg.mxu0
      %4246 = vmatpush.bf16.msra.mxu0 %v3175
      %4247 = vmatpush.bf16.msra.mxu0 %v3158
      %4248 = vmatpush.bf16.msra.mxu0 %v3141
      %4249 = vmatpush.bf16.msra.mxu0 %v3124
      %4250 = vmatpush.bf16.msra.mxu0 %v3107
      %4251 = vmatpush.bf16.msra.mxu0 %v3090
      %4252 = vmatpush.bf16.msra.mxu0 %v3073
      %4253 = vmatpush.bf16.msra.mxu0 %v3056
      %4254 = vmatmul.bf16.gmra.mxu0 %v2101
      %v4255 = vpop.f32.mrf.mxu0
      %v4256 = vadd.f32 %v2084, %v4255
      %v4257 = vpop.f32.mrf.mxu0
      %v4258 = vadd.f32 %v2089, %v4257
      %4259 = vdwg.mxu0
      %4260 = vmatpush.bf16.msra.mxu0 %v3311
      %4261 = vmatpush.bf16.msra.mxu0 %v3294
      %4262 = vmatpush.bf16.msra.mxu0 %v3277
      %4263 = vmatpush.bf16.msra.mxu0 %v3260
      %4264 = vmatpush.bf16.msra.mxu0 %v3243
      %4265 = vmatpush.bf16.msra.mxu0 %v3226
      %4266 = vmatpush.bf16.msra.mxu0 %v3209
      %4267 = vmatpush.bf16.msra.mxu0 %v3192
      %4268 = vmatmul.bf16.gmra.mxu0 %v2102
      %v4269 = vpop.f32.mrf.mxu0
      %v4270 = vadd.f32 %v4256, %v4269
      %v4271 = vpop.f32.mrf.mxu0
      %v4272 = vadd.f32 %v4258, %v4271
      %4273 = vdwg.mxu0
      %4274 = vmatpush.bf16.msra.mxu0 0
      %4275 = vmatpush.bf16.msra.mxu0 0
      %4276 = vmatpush.bf16.msra.mxu0 0
      %4277 = vmatpush.bf16.msra.mxu0 0
      %4278 = vmatpush.bf16.msra.mxu0 0
      %4279 = vmatpush.bf16.msra.mxu0 0
      %4280 = vmatpush.bf16.msra.mxu0 %v3345
      %4281 = vmatpush.bf16.msra.mxu0 %v3328
      %4282 = vmatmul.bf16.gmra.mxu0 %v3656
      %v4283 = vpop.f32.mrf.mxu0
      %v4284 = vadd.f32 %v4270, %v4283
      %v4285 = vpop.f32.mrf.mxu0
      %v4286 = vadd.f32 %v4272, %v4285
      %4287 = vdwg.mxu0
      %4288 = vmatpush.bf16.msra.mxu0 %v3176
      %4289 = vmatpush.bf16.msra.mxu0 %v3159
      %4290 = vmatpush.bf16.msra.mxu0 %v3142
      %4291 = vmatpush.bf16.msra.mxu0 %v3125
      %4292 = vmatpush.bf16.msra.mxu0 %v3108
      %4293 = vmatpush.bf16.msra.mxu0 %v3091
      %4294 = vmatpush.bf16.msra.mxu0 %v3074
      %4295 = vmatpush.bf16.msra.mxu0 %v3057
      %4296 = vmatmul.bf16.gmra.mxu0 %v2101
      %v4297 = vpop.f32.mrf.mxu0
      %v4298 = vadd.f32 %v2084, %v4297
      %v4299 = vpop.f32.mrf.mxu0
      %v4300 = vadd.f32 %v2089, %v4299
      %4301 = vdwg.mxu0
      %4302 = vmatpush.bf16.msra.mxu0 %v3312
      %4303 = vmatpush.bf16.msra.mxu0 %v3295
      %4304 = vmatpush.bf16.msra.mxu0 %v3278
      %4305 = vmatpush.bf16.msra.mxu0 %v3261
      %4306 = vmatpush.bf16.msra.mxu0 %v3244
      %4307 = vmatpush.bf16.msra.mxu0 %v3227
      %4308 = vmatpush.bf16.msra.mxu0 %v3210
      %4309 = vmatpush.bf16.msra.mxu0 %v3193
      %4310 = vmatmul.bf16.gmra.mxu0 %v2102
      %v4311 = vpop.f32.mrf.mxu0
      %v4312 = vadd.f32 %v4298, %v4311
      %v4313 = vpop.f32.mrf.mxu0
      %v4314 = vadd.f32 %v4300, %v4313
      %4315 = vdwg.mxu0
      %4316 = vmatpush.bf16.msra.mxu0 0
      %4317 = vmatpush.bf16.msra.mxu0 0
      %4318 = vmatpush.bf16.msra.mxu0 0
      %4319 = vmatpush.bf16.msra.mxu0 0
      %4320 = vmatpush.bf16.msra.mxu0 0
      %4321 = vmatpush.bf16.msra.mxu0 0
      %4322 = vmatpush.bf16.msra.mxu0 %v3346
      %4323 = vmatpush.bf16.msra.mxu0 %v3329
      %4324 = vmatmul.bf16.gmra.mxu0 %v3656
      %v4325 = vpop.f32.mrf.mxu0
      %v4326 = vadd.f32 %v4312, %v4325
      %v4327 = vpop.f32.mrf.mxu0
      %v4328 = vadd.f32 %v4314, %v4327
      %4329 = vdwg.mxu0
      %4330 = vmatpush.bf16.msra.mxu0 %v3177
      %4331 = vmatpush.bf16.msra.mxu0 %v3160
      %4332 = vmatpush.bf16.msra.mxu0 %v3143
      %4333 = vmatpush.bf16.msra.mxu0 %v3126
      %4334 = vmatpush.bf16.msra.mxu0 %v3109
      %4335 = vmatpush.bf16.msra.mxu0 %v3092
      %4336 = vmatpush.bf16.msra.mxu0 %v3075
      %4337 = vmatpush.bf16.msra.mxu0 %v3058
      %4338 = vmatmul.bf16.gmra.mxu0 %v2101
      %v4339 = vpop.f32.mrf.mxu0
      %v4340 = vadd.f32 %v2084, %v4339
      %v4341 = vpop.f32.mrf.mxu0
      %v4342 = vadd.f32 %v2089, %v4341
      %4343 = vdwg.mxu0
      %4344 = vmatpush.bf16.msra.mxu0 %v3313
      %4345 = vmatpush.bf16.msra.mxu0 %v3296
      %4346 = vmatpush.bf16.msra.mxu0 %v3279
      %4347 = vmatpush.bf16.msra.mxu0 %v3262
      %4348 = vmatpush.bf16.msra.mxu0 %v3245
      %4349 = vmatpush.bf16.msra.mxu0 %v3228
      %4350 = vmatpush.bf16.msra.mxu0 %v3211
      %4351 = vmatpush.bf16.msra.mxu0 %v3194
      %4352 = vmatmul.bf16.gmra.mxu0 %v2102
      %v4353 = vpop.f32.mrf.mxu0
      %v4354 = vadd.f32 %v4340, %v4353
      %v4355 = vpop.f32.mrf.mxu0
      %v4356 = vadd.f32 %v4342, %v4355
      %4357 = vdwg.mxu0
      %4358 = vmatpush.bf16.msra.mxu0 0
      %4359 = vmatpush.bf16.msra.mxu0 0
      %4360 = vmatpush.bf16.msra.mxu0 0
      %4361 = vmatpush.bf16.msra.mxu0 0
      %4362 = vmatpush.bf16.msra.mxu0 0
      %4363 = vmatpush.bf16.msra.mxu0 0
      %4364 = vmatpush.bf16.msra.mxu0 %v3347
      %4365 = vmatpush.bf16.msra.mxu0 %v3330
      %4366 = vmatmul.bf16.gmra.mxu0 %v3656
      %v4367 = vpop.f32.mrf.mxu0
      %v4368 = vadd.f32 %v4354, %v4367
      %v4369 = vpop.f32.mrf.mxu0
      %v4370 = vadd.f32 %v4356, %v4369
      %4371 = vdwg.mxu0
      %v4372 = vmax.f32 %v3696, -0.27272728
      %v4373 = vmax.f32 %v3738, -0.27272728
      %v4374 = vmax.f32 %v3780, -0.27272728
      %v4375 = vmax.f32 %v3822, -0.27272728
      %v4376 = vmax.f32 %v3864, -0.27272728
      %v4377 = vmax.f32 %v3906, -0.27272728
      %v4378 = vmax.f32 %v3948, -0.27272728
      %v4379 = vmax.f32 %v3990, -0.27272728
      %v4380 = vmax.f32 %v4032, -0.27272728
      %v4381 = vmax.f32 %v4074, -0.27272728
      %v4382 = vmax.f32 %v4116, -0.27272728
      %v4383 = vmax.f32 %v4158, -0.27272728
      %v4384 = vmax.f32 %v4200, -0.27272728
      %v4385 = vmax.f32 %v4242, -0.27272728
      %v4386 = vmax.f32 %v4284, -0.27272728
      %v4387 = vmax.f32 %v4326, -0.27272728
      %v4388 = vmax.f32 %v4368, -0.27272728
      %v4389 = vmax.f32 %v3698, -0.27272728
      %v4390 = vmax.f32 %v3740, -0.27272728
      %v4391 = vmax.f32 %v3782, -0.27272728
      %v4392 = vmax.f32 %v3824, -0.27272728
      %v4393 = vmax.f32 %v3866, -0.27272728
      %v4394 = vmax.f32 %v3908, -0.27272728
      %v4395 = vmax.f32 %v3950, -0.27272728
      %v4396 = vmax.f32 %v3992, -0.27272728
      %v4397 = vmax.f32 %v4034, -0.27272728
      %v4398 = vmax.f32 %v4076, -0.27272728
      %v4399 = vmax.f32 %v4118, -0.27272728
      %v4400 = vmax.f32 %v4160, -0.27272728
      %v4401 = vmax.f32 %v4202, -0.27272728
      %v4402 = vmax.f32 %v4244, -0.27272728
      %v4403 = vmax.f32 %v4286, -0.27272728
      %v4404 = vmax.f32 %v4328, -0.27272728
      %v4405 = vmax.f32 %v4370, -0.27272728
      %v4406 = vmin.f32 %v4372, 0.18181819
      %v4407 = vmin.f32 %v4373, 0.18181819
      %v4408 = vmin.f32 %v4374, 0.18181819
      %v4409 = vmin.f32 %v4375, 0.18181819
      %v4410 = vmin.f32 %v4376, 0.18181819
      %v4411 = vmin.f32 %v4377, 0.18181819
      %v4412 = vmin.f32 %v4378, 0.18181819
      %v4413 = vmin.f32 %v4379, 0.18181819
      %v4414 = vmin.f32 %v4380, 0.18181819
      %v4415 = vmin.f32 %v4381, 0.18181819
      %v4416 = vmin.f32 %v4382, 0.18181819
      %v4417 = vmin.f32 %v4383, 0.18181819
      %v4418 = vmin.f32 %v4384, 0.18181819
      %v4419 = vmin.f32 %v4385, 0.18181819
      %v4420 = vmin.f32 %v4386, 0.18181819
      %v4421 = vmin.f32 %v4387, 0.18181819
      %v4422 = vmin.f32 %v4388, 0.18181819
      %v4423 = vmin.f32 %v4389, 0.18181819
      %v4424 = vmin.f32 %v4390, 0.18181819
      %v4425 = vmin.f32 %v4391, 0.18181819
      %v4426 = vmin.f32 %v4392, 0.18181819
      %v4427 = vmin.f32 %v4393, 0.18181819
      %v4428 = vmin.f32 %v4394, 0.18181819
      %v4429 = vmin.f32 %v4395, 0.18181819
      %v4430 = vmin.f32 %v4396, 0.18181819
      %v4431 = vmin.f32 %v4397, 0.18181819
      %v4432 = vmin.f32 %v4398, 0.18181819
      %v4433 = vmin.f32 %v4399, 0.18181819
      %v4434 = vmin.f32 %v4400, 0.18181819
      %v4435 = vmin.f32 %v4401, 0.18181819
      %v4436 = vmin.f32 %v4402, 0.18181819
      %v4437 = vmin.f32 %v4403, 0.18181819
      %v4438 = vmin.f32 %v4404, 0.18181819
      %v4439 = vmin.f32 %v4405, 0.18181819
      %v4440 = vxor.u32 %v4406, 2147483648
      %v4441 = vxor.u32 %v4407, 2147483648
      %v4442 = vxor.u32 %v4408, 2147483648
      %v4443 = vxor.u32 %v4409, 2147483648
      %v4444 = vxor.u32 %v4410, 2147483648
      %v4445 = vxor.u32 %v4411, 2147483648
      %v4446 = vxor.u32 %v4412, 2147483648
      %v4447 = vxor.u32 %v4413, 2147483648
      %v4448 = vxor.u32 %v4414, 2147483648
      %v4449 = vxor.u32 %v4415, 2147483648
      %v4450 = vxor.u32 %v4416, 2147483648
      %v4451 = vxor.u32 %v4417, 2147483648
      %v4452 = vxor.u32 %v4418, 2147483648
      %v4453 = vxor.u32 %v4419, 2147483648
      %v4454 = vxor.u32 %v4420, 2147483648
      %v4455 = vxor.u32 %v4421, 2147483648
      %v4456 = vxor.u32 %v4422, 2147483648
      %v4457 = vxor.u32 %v4423, 2147483648
      %v4458 = vxor.u32 %v4424, 2147483648
      %v4459 = vxor.u32 %v4425, 2147483648
      %v4460 = vxor.u32 %v4426, 2147483648
      %v4461 = vxor.u32 %v4427, 2147483648
      %v4462 = vxor.u32 %v4428, 2147483648
      %v4463 = vxor.u32 %v4429, 2147483648
      %v4464 = vxor.u32 %v4430, 2147483648
      %v4465 = vxor.u32 %v4431, 2147483648
      %v4466 = vxor.u32 %v4432, 2147483648
      %v4467 = vxor.u32 %v4433, 2147483648
      %v4468 = vxor.u32 %v4434, 2147483648
      %v4469 = vxor.u32 %v4435, 2147483648
      %v4470 = vxor.u32 %v4436, 2147483648
      %v4471 = vxor.u32 %v4437, 2147483648
      %v4472 = vxor.u32 %v4438, 2147483648
      %v4473 = vxor.u32 %v4439, 2147483648
      %v4474 = vmul.f32 %v4440, 1.442695
      %v4475 = vpow.pop %v4474
      %v4476 = vmul.f32 %v4441, 1.442695
      %v4477 = vpow.pop %v4476
      %v4478 = vmul.f32 %v4442, 1.442695
      %v4479 = vpow.pop %v4478
      %v4480 = vmul.f32 %v4443, 1.442695
      %v4481 = vpow.pop %v4480
      %v4482 = vmul.f32 %v4444, 1.442695
      %v4483 = vpow.pop %v4482
      %v4484 = vmul.f32 %v4445, 1.442695
      %v4485 = vpow.pop %v4484
      %v4486 = vmul.f32 %v4446, 1.442695
      %v4487 = vpow.pop %v4486
      %v4488 = vmul.f32 %v4447, 1.442695
      %v4489 = vpow.pop %v4488
      %v4490 = vmul.f32 %v4448, 1.442695
      %v4491 = vpow.pop %v4490
      %v4492 = vmul.f32 %v4449, 1.442695
      %v4493 = vpow.pop %v4492
      %v4494 = vmul.f32 %v4450, 1.442695
      %v4495 = vpow.pop %v4494
      %v4496 = vmul.f32 %v4451, 1.442695
      %v4497 = vpow.pop %v4496
      %v4498 = vmul.f32 %v4452, 1.442695
      %v4499 = vpow.pop %v4498
      %v4500 = vmul.f32 %v4453, 1.442695
      %v4501 = vpow.pop %v4500
      %v4502 = vmul.f32 %v4454, 1.442695
      %v4503 = vpow.pop %v4502
      %v4504 = vmul.f32 %v4455, 1.442695
      %v4505 = vpow.pop %v4504
      %v4506 = vmul.f32 %v4456, 1.442695
      %v4507 = vpow.pop %v4506
      %v4508 = vmul.f32 %v4457, 1.442695
      %v4509 = vpow.pop %v4508
      %v4510 = vmul.f32 %v4458, 1.442695
      %v4511 = vpow.pop %v4510
      %v4512 = vmul.f32 %v4459, 1.442695
      %v4513 = vpow.pop %v4512
      %v4514 = vmul.f32 %v4460, 1.442695
      %v4515 = vpow.pop %v4514
      %v4516 = vmul.f32 %v4461, 1.442695
      %v4517 = vpow.pop %v4516
      %v4518 = vmul.f32 %v4462, 1.442695
      %v4519 = vpow.pop %v4518
      %v4520 = vmul.f32 %v4463, 1.442695
      %v4521 = vpow.pop %v4520
      %v4522 = vmul.f32 %v4464, 1.442695
      %v4523 = vpow.pop %v4522
      %v4524 = vmul.f32 %v4465, 1.442695
      %v4525 = vpow.pop %v4524
      %v4526 = vmul.f32 %v4466, 1.442695
      %v4527 = vpow.pop %v4526
      %v4528 = vmul.f32 %v4467, 1.442695
      %v4529 = vpow.pop %v4528
      %v4530 = vmul.f32 %v4468, 1.442695
      %v4531 = vpow.pop %v4530
      %v4532 = vmul.f32 %v4469, 1.442695
      %v4533 = vpow.pop %v4532
      %v4534 = vmul.f32 %v4470, 1.442695
      %v4535 = vpow.pop %v4534
      %v4536 = vmul.f32 %v4471, 1.442695
      %v4537 = vpow.pop %v4536
      %v4538 = vmul.f32 %v4472, 1.442695
      %v4539 = vpow.pop %v4538
      %v4540 = vmul.f32 %v4473, 1.442695
      %v4541 = vpow.pop %v4540
      %v4542 = vadd.f32 %v4475, 1.0
      %v4543 = vadd.f32 %v4477, 1.0
      %v4544 = vadd.f32 %v4479, 1.0
      %v4545 = vadd.f32 %v4481, 1.0
      %v4546 = vadd.f32 %v4483, 1.0
      %v4547 = vadd.f32 %v4485, 1.0
      %v4548 = vadd.f32 %v4487, 1.0
      %v4549 = vadd.f32 %v4489, 1.0
      %v4550 = vadd.f32 %v4491, 1.0
      %v4551 = vadd.f32 %v4493, 1.0
      %v4552 = vadd.f32 %v4495, 1.0
      %v4553 = vadd.f32 %v4497, 1.0
      %v4554 = vadd.f32 %v4499, 1.0
      %v4555 = vadd.f32 %v4501, 1.0
      %v4556 = vadd.f32 %v4503, 1.0
      %v4557 = vadd.f32 %v4505, 1.0
      %v4558 = vadd.f32 %v4507, 1.0
      %v4559 = vadd.f32 %v4509, 1.0
      %v4560 = vadd.f32 %v4511, 1.0
      %v4561 = vadd.f32 %v4513, 1.0
      %v4562 = vadd.f32 %v4515, 1.0
      %v4563 = vadd.f32 %v4517, 1.0
      %v4564 = vadd.f32 %v4519, 1.0
      %v4565 = vadd.f32 %v4521, 1.0
      %v4566 = vadd.f32 %v4523, 1.0
      %v4567 = vadd.f32 %v4525, 1.0
      %v4568 = vadd.f32 %v4527, 1.0
      %v4569 = vadd.f32 %v4529, 1.0
      %v4570 = vadd.f32 %v4531, 1.0
      %v4571 = vadd.f32 %v4533, 1.0
      %v4572 = vadd.f32 %v4535, 1.0
      %v4573 = vadd.f32 %v4537, 1.0
      %v4574 = vadd.f32 %v4539, 1.0
      %v4575 = vadd.f32 %v4541, 1.0
      %v4576 = vrcp.pop %v4542
      %v4577 = vmul.f32 %v4542, %v4576
      %v4578 = vsub.f32 1.0, %v4577
      %v4579 = vmul.f32 %v4576, %v4578
      %v4580 = vadd.f32 %v4576, %v4579
      %vm4581 = vweird.f32 %v4542
      %vm4582 = vweird.f32 %v4576
      %vm4583 = vmor %vm4581, %vm4582
      %v4584 = vsel %vm4583, %v4576, %v4580
      %v4585 = vand.u32 2147483647, %v4542
      %vm4586 = vcmp.eq.f32.partialorder %v4585, 8.507059e+37
      %v4587 = vand.u32 %v4542, 2147483648
      %v4588 = vor.u32 1.1754944e-38, %v4587
      %v4589 = vsel %vm4586, %v4588, %v4584
      %v4590 = vmul.f32 1.0, %v4589
      %v4591 = vrcp.pop %v4543
      %v4592 = vmul.f32 %v4543, %v4591
      %v4593 = vsub.f32 1.0, %v4592
      %v4594 = vmul.f32 %v4591, %v4593
      %v4595 = vadd.f32 %v4591, %v4594
      %vm4596 = vweird.f32 %v4543
      %vm4597 = vweird.f32 %v4591
      %vm4598 = vmor %vm4596, %vm4597
      %v4599 = vsel %vm4598, %v4591, %v4595
      %v4600 = vand.u32 2147483647, %v4543
      %vm4601 = vcmp.eq.f32.partialorder %v4600, 8.507059e+37
      %v4602 = vand.u32 %v4543, 2147483648
      %v4603 = vor.u32 1.1754944e-38, %v4602
      %v4604 = vsel %vm4601, %v4603, %v4599
      %v4605 = vmul.f32 1.0, %v4604
      %v4606 = vrcp.pop %v4544
      %v4607 = vmul.f32 %v4544, %v4606
      %v4608 = vsub.f32 1.0, %v4607
      %v4609 = vmul.f32 %v4606, %v4608
      %v4610 = vadd.f32 %v4606, %v4609
      %vm4611 = vweird.f32 %v4544
      %vm4612 = vweird.f32 %v4606
      %vm4613 = vmor %vm4611, %vm4612
      %v4614 = vsel %vm4613, %v4606, %v4610
      %v4615 = vand.u32 2147483647, %v4544
      %vm4616 = vcmp.eq.f32.partialorder %v4615, 8.507059e+37
      %v4617 = vand.u32 %v4544, 2147483648
      %v4618 = vor.u32 1.1754944e-38, %v4617
      %v4619 = vsel %vm4616, %v4618, %v4614
      %v4620 = vmul.f32 1.0, %v4619
      %v4621 = vrcp.pop %v4545
      %v4622 = vmul.f32 %v4545, %v4621
      %v4623 = vsub.f32 1.0, %v4622
      %v4624 = vmul.f32 %v4621, %v4623
      %v4625 = vadd.f32 %v4621, %v4624
      %vm4626 = vweird.f32 %v4545
      %vm4627 = vweird.f32 %v4621
      %vm4628 = vmor %vm4626, %vm4627
      %v4629 = vsel %vm4628, %v4621, %v4625
      %v4630 = vand.u32 2147483647, %v4545
      %vm4631 = vcmp.eq.f32.partialorder %v4630, 8.507059e+37
      %v4632 = vand.u32 %v4545, 2147483648
      %v4633 = vor.u32 1.1754944e-38, %v4632
      %v4634 = vsel %vm4631, %v4633, %v4629
      %v4635 = vmul.f32 1.0, %v4634
      %v4636 = vrcp.pop %v4546
      %v4637 = vmul.f32 %v4546, %v4636
      %v4638 = vsub.f32 1.0, %v4637
      %v4639 = vmul.f32 %v4636, %v4638
      %v4640 = vadd.f32 %v4636, %v4639
      %vm4641 = vweird.f32 %v4546
      %vm4642 = vweird.f32 %v4636
      %vm4643 = vmor %vm4641, %vm4642
      %v4644 = vsel %vm4643, %v4636, %v4640
      %v4645 = vand.u32 2147483647, %v4546
      %vm4646 = vcmp.eq.f32.partialorder %v4645, 8.507059e+37
      %v4647 = vand.u32 %v4546, 2147483648
      %v4648 = vor.u32 1.1754944e-38, %v4647
      %v4649 = vsel %vm4646, %v4648, %v4644
      %v4650 = vmul.f32 1.0, %v4649
      %v4651 = vrcp.pop %v4547
      %v4652 = vmul.f32 %v4547, %v4651
      %v4653 = vsub.f32 1.0, %v4652
      %v4654 = vmul.f32 %v4651, %v4653
      %v4655 = vadd.f32 %v4651, %v4654
      %vm4656 = vweird.f32 %v4547
      %vm4657 = vweird.f32 %v4651
      %vm4658 = vmor %vm4656, %vm4657
      %v4659 = vsel %vm4658, %v4651, %v4655
      %v4660 = vand.u32 2147483647, %v4547
      %vm4661 = vcmp.eq.f32.partialorder %v4660, 8.507059e+37
      %v4662 = vand.u32 %v4547, 2147483648
      %v4663 = vor.u32 1.1754944e-38, %v4662
      %v4664 = vsel %vm4661, %v4663, %v4659
      %v4665 = vmul.f32 1.0, %v4664
      %v4666 = vrcp.pop %v4548
      %v4667 = vmul.f32 %v4548, %v4666
      %v4668 = vsub.f32 1.0, %v4667
      %v4669 = vmul.f32 %v4666, %v4668
      %v4670 = vadd.f32 %v4666, %v4669
      %vm4671 = vweird.f32 %v4548
      %vm4672 = vweird.f32 %v4666
      %vm4673 = vmor %vm4671, %vm4672
      %v4674 = vsel %vm4673, %v4666, %v4670
      %v4675 = vand.u32 2147483647, %v4548
      %vm4676 = vcmp.eq.f32.partialorder %v4675, 8.507059e+37
      %v4677 = vand.u32 %v4548, 2147483648
      %v4678 = vor.u32 1.1754944e-38, %v4677
      %v4679 = vsel %vm4676, %v4678, %v4674
      %v4680 = vmul.f32 1.0, %v4679
      %v4681 = vrcp.pop %v4549
      %v4682 = vmul.f32 %v4549, %v4681
      %v4683 = vsub.f32 1.0, %v4682
      %v4684 = vmul.f32 %v4681, %v4683
      %v4685 = vadd.f32 %v4681, %v4684
      %vm4686 = vweird.f32 %v4549
      %vm4687 = vweird.f32 %v4681
      %vm4688 = vmor %vm4686, %vm4687
      %v4689 = vsel %vm4688, %v4681, %v4685
      %v4690 = vand.u32 2147483647, %v4549
      %vm4691 = vcmp.eq.f32.partialorder %v4690, 8.507059e+37
      %v4692 = vand.u32 %v4549, 2147483648
      %v4693 = vor.u32 1.1754944e-38, %v4692
      %v4694 = vsel %vm4691, %v4693, %v4689
      %v4695 = vmul.f32 1.0, %v4694
      %v4696 = vrcp.pop %v4550
      %v4697 = vmul.f32 %v4550, %v4696
      %v4698 = vsub.f32 1.0, %v4697
      %v4699 = vmul.f32 %v4696, %v4698
      %v4700 = vadd.f32 %v4696, %v4699
      %vm4701 = vweird.f32 %v4550
      %vm4702 = vweird.f32 %v4696
      %vm4703 = vmor %vm4701, %vm4702
      %v4704 = vsel %vm4703, %v4696, %v4700
      %v4705 = vand.u32 2147483647, %v4550
      %vm4706 = vcmp.eq.f32.partialorder %v4705, 8.507059e+37
      %v4707 = vand.u32 %v4550, 2147483648
      %v4708 = vor.u32 1.1754944e-38, %v4707
      %v4709 = vsel %vm4706, %v4708, %v4704
      %v4710 = vmul.f32 1.0, %v4709
      %v4711 = vrcp.pop %v4551
      %v4712 = vmul.f32 %v4551, %v4711
      %v4713 = vsub.f32 1.0, %v4712
      %v4714 = vmul.f32 %v4711, %v4713
      %v4715 = vadd.f32 %v4711, %v4714
      %vm4716 = vweird.f32 %v4551
      %vm4717 = vweird.f32 %v4711
      %vm4718 = vmor %vm4716, %vm4717
      %v4719 = vsel %vm4718, %v4711, %v4715
      %v4720 = vand.u32 2147483647, %v4551
      %vm4721 = vcmp.eq.f32.partialorder %v4720, 8.507059e+37
      %v4722 = vand.u32 %v4551, 2147483648
      %v4723 = vor.u32 1.1754944e-38, %v4722
      %v4724 = vsel %vm4721, %v4723, %v4719
      %v4725 = vmul.f32 1.0, %v4724
      %v4726 = vrcp.pop %v4552
      %v4727 = vmul.f32 %v4552, %v4726
      %v4728 = vsub.f32 1.0, %v4727
      %v4729 = vmul.f32 %v4726, %v4728
      %v4730 = vadd.f32 %v4726, %v4729
      %vm4731 = vweird.f32 %v4552
      %vm4732 = vweird.f32 %v4726
      %vm4733 = vmor %vm4731, %vm4732
      %v4734 = vsel %vm4733, %v4726, %v4730
      %v4735 = vand.u32 2147483647, %v4552
      %vm4736 = vcmp.eq.f32.partialorder %v4735, 8.507059e+37
      %v4737 = vand.u32 %v4552, 2147483648
      %v4738 = vor.u32 1.1754944e-38, %v4737
      %v4739 = vsel %vm4736, %v4738, %v4734
      %v4740 = vmul.f32 1.0, %v4739
      %v4741 = vrcp.pop %v4553
      %v4742 = vmul.f32 %v4553, %v4741
      %v4743 = vsub.f32 1.0, %v4742
      %v4744 = vmul.f32 %v4741, %v4743
      %v4745 = vadd.f32 %v4741, %v4744
      %vm4746 = vweird.f32 %v4553
      %vm4747 = vweird.f32 %v4741
      %vm4748 = vmor %vm4746, %vm4747
      %v4749 = vsel %vm4748, %v4741, %v4745
      %v4750 = vand.u32 2147483647, %v4553
      %vm4751 = vcmp.eq.f32.partialorder %v4750, 8.507059e+37
      %v4752 = vand.u32 %v4553, 2147483648
      %v4753 = vor.u32 1.1754944e-38, %v4752
      %v4754 = vsel %vm4751, %v4753, %v4749
      %v4755 = vmul.f32 1.0, %v4754
      %v4756 = vrcp.pop %v4554
      %v4757 = vmul.f32 %v4554, %v4756
      %v4758 = vsub.f32 1.0, %v4757
      %v4759 = vmul.f32 %v4756, %v4758
      %v4760 = vadd.f32 %v4756, %v4759
      %vm4761 = vweird.f32 %v4554
      %vm4762 = vweird.f32 %v4756
      %vm4763 = vmor %vm4761, %vm4762
      %v4764 = vsel %vm4763, %v4756, %v4760
      %v4765 = vand.u32 2147483647, %v4554
      %vm4766 = vcmp.eq.f32.partialorder %v4765, 8.507059e+37
      %v4767 = vand.u32 %v4554, 2147483648
      %v4768 = vor.u32 1.1754944e-38, %v4767
      %v4769 = vsel %vm4766, %v4768, %v4764
      %v4770 = vmul.f32 1.0, %v4769
      %v4771 = vrcp.pop %v4555
      %v4772 = vmul.f32 %v4555, %v4771
      %v4773 = vsub.f32 1.0, %v4772
      %v4774 = vmul.f32 %v4771, %v4773
      %v4775 = vadd.f32 %v4771, %v4774
      %vm4776 = vweird.f32 %v4555
      %vm4777 = vweird.f32 %v4771
      %vm4778 = vmor %vm4776, %vm4777
      %v4779 = vsel %vm4778, %v4771, %v4775
      %v4780 = vand.u32 2147483647, %v4555
      %vm4781 = vcmp.eq.f32.partialorder %v4780, 8.507059e+37
      %v4782 = vand.u32 %v4555, 2147483648
      %v4783 = vor.u32 1.1754944e-38, %v4782
      %v4784 = vsel %vm4781, %v4783, %v4779
      %v4785 = vmul.f32 1.0, %v4784
      %v4786 = vrcp.pop %v4556
      %v4787 = vmul.f32 %v4556, %v4786
      %v4788 = vsub.f32 1.0, %v4787
      %v4789 = vmul.f32 %v4786, %v4788
      %v4790 = vadd.f32 %v4786, %v4789
      %vm4791 = vweird.f32 %v4556
      %vm4792 = vweird.f32 %v4786
      %vm4793 = vmor %vm4791, %vm4792
      %v4794 = vsel %vm4793, %v4786, %v4790
      %v4795 = vand.u32 2147483647, %v4556
      %vm4796 = vcmp.eq.f32.partialorder %v4795, 8.507059e+37
      %v4797 = vand.u32 %v4556, 2147483648
      %v4798 = vor.u32 1.1754944e-38, %v4797
      %v4799 = vsel %vm4796, %v4798, %v4794
      %v4800 = vmul.f32 1.0, %v4799
      %v4801 = vrcp.pop %v4557
      %v4802 = vmul.f32 %v4557, %v4801
      %v4803 = vsub.f32 1.0, %v4802
      %v4804 = vmul.f32 %v4801, %v4803
      %v4805 = vadd.f32 %v4801, %v4804
      %vm4806 = vweird.f32 %v4557
      %vm4807 = vweird.f32 %v4801
      %vm4808 = vmor %vm4806, %vm4807
      %v4809 = vsel %vm4808, %v4801, %v4805
      %v4810 = vand.u32 2147483647, %v4557
      %vm4811 = vcmp.eq.f32.partialorder %v4810, 8.507059e+37
      %v4812 = vand.u32 %v4557, 2147483648
      %v4813 = vor.u32 1.1754944e-38, %v4812
      %v4814 = vsel %vm4811, %v4813, %v4809
      %v4815 = vmul.f32 1.0, %v4814
      %v4816 = vrcp.pop %v4558
      %v4817 = vmul.f32 %v4558, %v4816
      %v4818 = vsub.f32 1.0, %v4817
      %v4819 = vmul.f32 %v4816, %v4818
      %v4820 = vadd.f32 %v4816, %v4819
      %vm4821 = vweird.f32 %v4558
      %vm4822 = vweird.f32 %v4816
      %vm4823 = vmor %vm4821, %vm4822
      %v4824 = vsel %vm4823, %v4816, %v4820
      %v4825 = vand.u32 2147483647, %v4558
      %vm4826 = vcmp.eq.f32.partialorder %v4825, 8.507059e+37
      %v4827 = vand.u32 %v4558, 2147483648
      %v4828 = vor.u32 1.1754944e-38, %v4827
      %v4829 = vsel %vm4826, %v4828, %v4824
      %v4830 = vmul.f32 1.0, %v4829
      %v4831 = vrcp.pop %v4559
      %v4832 = vmul.f32 %v4559, %v4831
      %v4833 = vsub.f32 1.0, %v4832
      %v4834 = vmul.f32 %v4831, %v4833
      %v4835 = vadd.f32 %v4831, %v4834
      %vm4836 = vweird.f32 %v4559
      %vm4837 = vweird.f32 %v4831
      %vm4838 = vmor %vm4836, %vm4837
      %v4839 = vsel %vm4838, %v4831, %v4835
      %v4840 = vand.u32 2147483647, %v4559
      %vm4841 = vcmp.eq.f32.partialorder %v4840, 8.507059e+37
      %v4842 = vand.u32 %v4559, 2147483648
      %v4843 = vor.u32 1.1754944e-38, %v4842
      %v4844 = vsel %vm4841, %v4843, %v4839
      %v4845 = vmul.f32 1.0, %v4844
      %v4846 = vrcp.pop %v4560
      %v4847 = vmul.f32 %v4560, %v4846
      %v4848 = vsub.f32 1.0, %v4847
      %v4849 = vmul.f32 %v4846, %v4848
      %v4850 = vadd.f32 %v4846, %v4849
      %vm4851 = vweird.f32 %v4560
      %vm4852 = vweird.f32 %v4846
      %vm4853 = vmor %vm4851, %vm4852
      %v4854 = vsel %vm4853, %v4846, %v4850
      %v4855 = vand.u32 2147483647, %v4560
      %vm4856 = vcmp.eq.f32.partialorder %v4855, 8.507059e+37
      %v4857 = vand.u32 %v4560, 2147483648
      %v4858 = vor.u32 1.1754944e-38, %v4857
      %v4859 = vsel %vm4856, %v4858, %v4854
      %v4860 = vmul.f32 1.0, %v4859
      %v4861 = vrcp.pop %v4561
      %v4862 = vmul.f32 %v4561, %v4861
      %v4863 = vsub.f32 1.0, %v4862
      %v4864 = vmul.f32 %v4861, %v4863
      %v4865 = vadd.f32 %v4861, %v4864
      %vm4866 = vweird.f32 %v4561
      %vm4867 = vweird.f32 %v4861
      %vm4868 = vmor %vm4866, %vm4867
      %v4869 = vsel %vm4868, %v4861, %v4865
      %v4870 = vand.u32 2147483647, %v4561
      %vm4871 = vcmp.eq.f32.partialorder %v4870, 8.507059e+37
      %v4872 = vand.u32 %v4561, 2147483648
      %v4873 = vor.u32 1.1754944e-38, %v4872
      %v4874 = vsel %vm4871, %v4873, %v4869
      %v4875 = vmul.f32 1.0, %v4874
      %v4876 = vrcp.pop %v4562
      %v4877 = vmul.f32 %v4562, %v4876
      %v4878 = vsub.f32 1.0, %v4877
      %v4879 = vmul.f32 %v4876, %v4878
      %v4880 = vadd.f32 %v4876, %v4879
      %vm4881 = vweird.f32 %v4562
      %vm4882 = vweird.f32 %v4876
      %vm4883 = vmor %vm4881, %vm4882
      %v4884 = vsel %vm4883, %v4876, %v4880
      %v4885 = vand.u32 2147483647, %v4562
      %vm4886 = vcmp.eq.f32.partialorder %v4885, 8.507059e+37
      %v4887 = vand.u32 %v4562, 2147483648
      %v4888 = vor.u32 1.1754944e-38, %v4887
      %v4889 = vsel %vm4886, %v4888, %v4884
      %v4890 = vmul.f32 1.0, %v4889
      %v4891 = vrcp.pop %v4563
      %v4892 = vmul.f32 %v4563, %v4891
      %v4893 = vsub.f32 1.0, %v4892
      %v4894 = vmul.f32 %v4891, %v4893
      %v4895 = vadd.f32 %v4891, %v4894
      %vm4896 = vweird.f32 %v4563
      %vm4897 = vweird.f32 %v4891
      %vm4898 = vmor %vm4896, %vm4897
      %v4899 = vsel %vm4898, %v4891, %v4895
      %v4900 = vand.u32 2147483647, %v4563
      %vm4901 = vcmp.eq.f32.partialorder %v4900, 8.507059e+37
      %v4902 = vand.u32 %v4563, 2147483648
      %v4903 = vor.u32 1.1754944e-38, %v4902
      %v4904 = vsel %vm4901, %v4903, %v4899
      %v4905 = vmul.f32 1.0, %v4904
      %v4906 = vrcp.pop %v4564
      %v4907 = vmul.f32 %v4564, %v4906
      %v4908 = vsub.f32 1.0, %v4907
      %v4909 = vmul.f32 %v4906, %v4908
      %v4910 = vadd.f32 %v4906, %v4909
      %vm4911 = vweird.f32 %v4564
      %vm4912 = vweird.f32 %v4906
      %vm4913 = vmor %vm4911, %vm4912
      %v4914 = vsel %vm4913, %v4906, %v4910
      %v4915 = vand.u32 2147483647, %v4564
      %vm4916 = vcmp.eq.f32.partialorder %v4915, 8.507059e+37
      %v4917 = vand.u32 %v4564, 2147483648
      %v4918 = vor.u32 1.1754944e-38, %v4917
      %v4919 = vsel %vm4916, %v4918, %v4914
      %v4920 = vmul.f32 1.0, %v4919
      %v4921 = vrcp.pop %v4565
      %v4922 = vmul.f32 %v4565, %v4921
      %v4923 = vsub.f32 1.0, %v4922
      %v4924 = vmul.f32 %v4921, %v4923
      %v4925 = vadd.f32 %v4921, %v4924
      %vm4926 = vweird.f32 %v4565
      %vm4927 = vweird.f32 %v4921
      %vm4928 = vmor %vm4926, %vm4927
      %v4929 = vsel %vm4928, %v4921, %v4925
      %v4930 = vand.u32 2147483647, %v4565
      %vm4931 = vcmp.eq.f32.partialorder %v4930, 8.507059e+37
      %v4932 = vand.u32 %v4565, 2147483648
      %v4933 = vor.u32 1.1754944e-38, %v4932
      %v4934 = vsel %vm4931, %v4933, %v4929
      %v4935 = vmul.f32 1.0, %v4934
      %v4936 = vrcp.pop %v4566
      %v4937 = vmul.f32 %v4566, %v4936
      %v4938 = vsub.f32 1.0, %v4937
      %v4939 = vmul.f32 %v4936, %v4938
      %v4940 = vadd.f32 %v4936, %v4939
      %vm4941 = vweird.f32 %v4566
      %vm4942 = vweird.f32 %v4936
      %vm4943 = vmor %vm4941, %vm4942
      %v4944 = vsel %vm4943, %v4936, %v4940
      %v4945 = vand.u32 2147483647, %v4566
      %vm4946 = vcmp.eq.f32.partialorder %v4945, 8.507059e+37
      %v4947 = vand.u32 %v4566, 2147483648
      %v4948 = vor.u32 1.1754944e-38, %v4947
      %v4949 = vsel %vm4946, %v4948, %v4944
      %v4950 = vmul.f32 1.0, %v4949
      %v4951 = vrcp.pop %v4567
      %v4952 = vmul.f32 %v4567, %v4951
      %v4953 = vsub.f32 1.0, %v4952
      %v4954 = vmul.f32 %v4951, %v4953
      %v4955 = vadd.f32 %v4951, %v4954
      %vm4956 = vweird.f32 %v4567
      %vm4957 = vweird.f32 %v4951
      %vm4958 = vmor %vm4956, %vm4957
      %v4959 = vsel %vm4958, %v4951, %v4955
      %v4960 = vand.u32 2147483647, %v4567
      %vm4961 = vcmp.eq.f32.partialorder %v4960, 8.507059e+37
      %v4962 = vand.u32 %v4567, 2147483648
      %v4963 = vor.u32 1.1754944e-38, %v4962
      %v4964 = vsel %vm4961, %v4963, %v4959
      %v4965 = vmul.f32 1.0, %v4964
      %v4966 = vrcp.pop %v4568
      %v4967 = vmul.f32 %v4568, %v4966
      %v4968 = vsub.f32 1.0, %v4967
      %v4969 = vmul.f32 %v4966, %v4968
      %v4970 = vadd.f32 %v4966, %v4969
      %vm4971 = vweird.f32 %v4568
      %vm4972 = vweird.f32 %v4966
      %vm4973 = vmor %vm4971, %vm4972
      %v4974 = vsel %vm4973, %v4966, %v4970
      %v4975 = vand.u32 2147483647, %v4568
      %vm4976 = vcmp.eq.f32.partialorder %v4975, 8.507059e+37
      %v4977 = vand.u32 %v4568, 2147483648
      %v4978 = vor.u32 1.1754944e-38, %v4977
      %v4979 = vsel %vm4976, %v4978, %v4974
      %v4980 = vmul.f32 1.0, %v4979
      %v4981 = vrcp.pop %v4569
      %v4982 = vmul.f32 %v4569, %v4981
      %v4983 = vsub.f32 1.0, %v4982
      %v4984 = vmul.f32 %v4981, %v4983
      %v4985 = vadd.f32 %v4981, %v4984
      %vm4986 = vweird.f32 %v4569
      %vm4987 = vweird.f32 %v4981
      %vm4988 = vmor %vm4986, %vm4987
      %v4989 = vsel %vm4988, %v4981, %v4985
      %v4990 = vand.u32 2147483647, %v4569
      %vm4991 = vcmp.eq.f32.partialorder %v4990, 8.507059e+37
      %v4992 = vand.u32 %v4569, 2147483648
      %v4993 = vor.u32 1.1754944e-38, %v4992
      %v4994 = vsel %vm4991, %v4993, %v4989
      %v4995 = vmul.f32 1.0, %v4994
      %v4996 = vrcp.pop %v4570
      %v4997 = vmul.f32 %v4570, %v4996
      %v4998 = vsub.f32 1.0, %v4997
      %v4999 = vmul.f32 %v4996, %v4998
      %v5000 = vadd.f32 %v4996, %v4999
      %vm5001 = vweird.f32 %v4570
      %vm5002 = vweird.f32 %v4996
      %vm5003 = vmor %vm5001, %vm5002
      %v5004 = vsel %vm5003, %v4996, %v5000
      %v5005 = vand.u32 2147483647, %v4570
      %vm5006 = vcmp.eq.f32.partialorder %v5005, 8.507059e+37
      %v5007 = vand.u32 %v4570, 2147483648
      %v5008 = vor.u32 1.1754944e-38, %v5007
      %v5009 = vsel %vm5006, %v5008, %v5004
      %v5010 = vmul.f32 1.0, %v5009
      %v5011 = vrcp.pop %v4571
      %v5012 = vmul.f32 %v4571, %v5011
      %v5013 = vsub.f32 1.0, %v5012
      %v5014 = vmul.f32 %v5011, %v5013
      %v5015 = vadd.f32 %v5011, %v5014
      %vm5016 = vweird.f32 %v4571
      %vm5017 = vweird.f32 %v5011
      %vm5018 = vmor %vm5016, %vm5017
      %v5019 = vsel %vm5018, %v5011, %v5015
      %v5020 = vand.u32 2147483647, %v4571
      %vm5021 = vcmp.eq.f32.partialorder %v5020, 8.507059e+37
      %v5022 = vand.u32 %v4571, 2147483648
      %v5023 = vor.u32 1.1754944e-38, %v5022
      %v5024 = vsel %vm5021, %v5023, %v5019
      %v5025 = vmul.f32 1.0, %v5024
      %v5026 = vrcp.pop %v4572
      %v5027 = vmul.f32 %v4572, %v5026
      %v5028 = vsub.f32 1.0, %v5027
      %v5029 = vmul.f32 %v5026, %v5028
      %v5030 = vadd.f32 %v5026, %v5029
      %vm5031 = vweird.f32 %v4572
      %vm5032 = vweird.f32 %v5026
      %vm5033 = vmor %vm5031, %vm5032
      %v5034 = vsel %vm5033, %v5026, %v5030
      %v5035 = vand.u32 2147483647, %v4572
      %vm5036 = vcmp.eq.f32.partialorder %v5035, 8.507059e+37
      %v5037 = vand.u32 %v4572, 2147483648
      %v5038 = vor.u32 1.1754944e-38, %v5037
      %v5039 = vsel %vm5036, %v5038, %v5034
      %v5040 = vmul.f32 1.0, %v5039
      %v5041 = vrcp.pop %v4573
      %v5042 = vmul.f32 %v4573, %v5041
      %v5043 = vsub.f32 1.0, %v5042
      %v5044 = vmul.f32 %v5041, %v5043
      %v5045 = vadd.f32 %v5041, %v5044
      %vm5046 = vweird.f32 %v4573
      %vm5047 = vweird.f32 %v5041
      %vm5048 = vmor %vm5046, %vm5047
      %v5049 = vsel %vm5048, %v5041, %v5045
      %v5050 = vand.u32 2147483647, %v4573
      %vm5051 = vcmp.eq.f32.partialorder %v5050, 8.507059e+37
      %v5052 = vand.u32 %v4573, 2147483648
      %v5053 = vor.u32 1.1754944e-38, %v5052
      %v5054 = vsel %vm5051, %v5053, %v5049
      %v5055 = vmul.f32 1.0, %v5054
      %v5056 = vrcp.pop %v4574
      %v5057 = vmul.f32 %v4574, %v5056
      %v5058 = vsub.f32 1.0, %v5057
      %v5059 = vmul.f32 %v5056, %v5058
      %v5060 = vadd.f32 %v5056, %v5059
      %vm5061 = vweird.f32 %v4574
      %vm5062 = vweird.f32 %v5056
      %vm5063 = vmor %vm5061, %vm5062
      %v5064 = vsel %vm5063, %v5056, %v5060
      %v5065 = vand.u32 2147483647, %v4574
      %vm5066 = vcmp.eq.f32.partialorder %v5065, 8.507059e+37
      %v5067 = vand.u32 %v4574, 2147483648
      %v5068 = vor.u32 1.1754944e-38, %v5067
      %v5069 = vsel %vm5066, %v5068, %v5064
      %v5070 = vmul.f32 1.0, %v5069
      %v5071 = vrcp.pop %v4575
      %v5072 = vmul.f32 %v4575, %v5071
      %v5073 = vsub.f32 1.0, %v5072
      %v5074 = vmul.f32 %v5071, %v5073
      %v5075 = vadd.f32 %v5071, %v5074
      %vm5076 = vweird.f32 %v4575
      %vm5077 = vweird.f32 %v5071
      %vm5078 = vmor %vm5076, %vm5077
      %v5079 = vsel %vm5078, %v5071, %v5075
      %v5080 = vand.u32 2147483647, %v4575
      %vm5081 = vcmp.eq.f32.partialorder %v5080, 8.507059e+37
      %v5082 = vand.u32 %v4575, 2147483648
      %v5083 = vor.u32 1.1754944e-38, %v5082
      %v5084 = vsel %vm5081, %v5083, %v5079
      %v5085 = vmul.f32 1.0, %v5084
      %5086 = vst [vmem:[%s170] sm:$0xff] %v4590
      %5087 = vst [vmem:[%s170 + $0x8] sm:$0xff] %v4605
      %5088 = vst [vmem:[%s170 + $0x10] sm:$0xff] %v4620
      %5089 = vst [vmem:[%s170 + $0x18] sm:$0xff] %v4635
      %5090 = vst [vmem:[%s170 + $0x20] sm:$0xff] %v4650
      %5091 = vst [vmem:[%s170 + $0x28] sm:$0xff] %v4665
      %5092 = vst [vmem:[%s170 + $0x30] sm:$0xff] %v4680
      %5093 = vst [vmem:[%s170 + $0x38] sm:$0xff] %v4695
      %5094 = vst [vmem:[%s170 + $0x40] sm:$0xff] %v4710
      %5095 = vst [vmem:[%s170 + $0x48] sm:$0xff] %v4725
      %5096 = vst [vmem:[%s170 + $0x50] sm:$0xff] %v4740
      %5097 = vst [vmem:[%s170 + $0x58] sm:$0xff] %v4755
      %5098 = vst [vmem:[%s170 + $0x60] sm:$0xff] %v4770
      %5099 = vst [vmem:[%s170 + $0x68] sm:$0xff] %v4785
      %5100 = vst [vmem:[%s170 + $0x70] sm:$0xff] %v4800
      %5101 = vst [vmem:[%s170 + $0x78] sm:$0xff] %v4815
      %5102 = vst [vmem:[%s170 + $0x80] sm:$0xff] %v4830
      %5103 = vst [vmem:[%s170 + $0x88] sm:$0xff] %v4845
      %5104 = vst [vmem:[%s170 + $0x90] sm:$0xff] %v4860
      %5105 = vst [vmem:[%s170 + $0x98] sm:$0xff] %v4875
      %5106 = vst [vmem:[%s170 + $0xa0] sm:$0xff] %v4890
      %5107 = vst [vmem:[%s170 + $0xa8] sm:$0xff] %v4905
      %5108 = vst [vmem:[%s170 + $0xb0] sm:$0xff] %v4920
      %5109 = vst [vmem:[%s170 + $0xb8] sm:$0xff] %v4935
      %5110 = vst [vmem:[%s170 + $0xc0] sm:$0xff] %v4950
      %5111 = vst [vmem:[%s170 + $0xc8] sm:$0xff] %v4965
      %5112 = vst [vmem:[%s170 + $0xd0] sm:$0xff] %v4980
      %5113 = vst [vmem:[%s170 + $0xd8] sm:$0xff] %v4995
      %5114 = vst [vmem:[%s170 + $0xe0] sm:$0xff] %v5010
      %5115 = vst [vmem:[%s170 + $0xe8] sm:$0xff] %v5025
      %5116 = vst [vmem:[%s170 + $0xf0] sm:$0xff] %v5040
      %5117 = vst [vmem:[%s170 + $0xf8] sm:$0xff] %v5055
      %5118 = vst [vmem:[%s170 + $0x100] sm:$0xff] %v5070
      %5119 = vst [vmem:[%s170 + $0x108] sm:$0xff] %v5085
      %p5120 = scmp.lt.s32.totalorder %s14, 1
      %s5121 = scalar_select %p5120, %s14, 1
      %s5122 = smul.addr %s5121, 34
      %s5123 = smul.addr %s5122, 8
      %s5124 = scalar_lea.vmem %s3, %s5123
      // Predicated region
      $region33: #{model_forward.1} parent=31 // pred_check
        %p5125 = pneg %p100
      $region34: #{model_forward.1} parent=31 // pred_check_branch
        %5127 = sbr.rel (%p5125) target = $region36
      $region35: #{model_forward.1} parent=31 // pred_region
        _
      $region36: #{model_forward.1} parent=31 // pred_fallthru
        _
    $region32: #{model_forward.1} parent=5 // pred_fallthru
      _
    %p5128 = scmp.le.s32.totalorder 2, %s9
    // Predicated region
    $region37: #{model_forward.1} parent=5 // pred_check
      %p5129 = pneg %p5128
    $region38: #{model_forward.1} parent=5 // pred_check_branch
      %5131 = sbr.rel (%p5129) target = $region40
    $region39: #{model_forward.1} parent=5 // pred_region
      %s5132 = ssub.s32 %s9, 2
      // Predicated region
      $region41: #{model_forward.1} parent=39 // pred_check
        %p5133 = pneg %p106
      $region42: #{model_forward.1} parent=39 // pred_check_branch
        %5135 = sbr.rel (%p5133) target = $region44
      $region43: #{model_forward.1} parent=39 // pred_region
        %p5136 = scmp.lt.s32.totalorder %s15, 1
        %s5137 = scalar_select %p5136, %s15, 1
        %s5138 = smul.addr %s5137, 34
        %s5139 = smul.addr %s5138, 8
        %s5140 = scalar_lea.vmem %s3, %s5139
      $region44: #{model_forward.1} parent=39 // pred_fallthru
        _
    $region40: #{model_forward.1} parent=5 // pred_fallthru
      _
  $region6: #{model_forward.1} parent=0 // loop_footer
    %s13 = sadd.s32 1, %s9
  $region7: #{model_forward.1} parent=0 // loop_footer_branch
    %8 = sbr.rel target = $region3
  $region8: #{model_forward.1} parent=0 // loop_exit
    _

</llo_original>
